<compile_context>
chip_gen: v7x
topology: tpu7x:2x2x1
jax: 0.10.0
libtpu: 0.0.40
codegen_flags: <defaults>
</compile_context>

<pallas_src>
import functools
import math

import jax
import jax.numpy as jnp
import numpy as np
from jax.experimental import pallas as pl
from jax.experimental.pallas import tpu as pltpu


def _erf(x):
    # Abramowitz & Stegun 7.1.26 polynomial erf (max abs err ~1.5e-7, fine for f32).
    a1, a2, a3, a4, a5 = 0.254829592, -0.284496736, 1.421413741, -1.453152027, 1.061405429
    p = 0.3275911
    ax = jnp.abs(x)
    t = 1.0 / (1.0 + p * ax)
    poly = ((((a5 * t + a4) * t + a3) * t + a2) * t + a1) * t
    y = 1.0 - poly * jnp.exp(-ax * ax)
    return jnp.where(x < 0.0, -y, y)


def _gelu_exact(x):
    # Matches torch.nn.GELU() default (erf-based, not tanh approximation).
    return 0.5 * x * (1.0 + _erf(x * (1.0 / math.sqrt(2.0))))


def transformer_block_kernel(
    x_ref,                       # (S, bb, input_dim)   batch block (in-place layout)
    g1_ref, b1_ref,              # (1, input_dim)       LayerNorm1
    wq_ref, pe_ref,              # (input_dim, D), (S, D) residual-q projection + PE
    wqkv_ref, peqkv_ref,         # (input_dim, 3D), (S, 3D)  fused in-proj (q-scale folded)
    wo_ref, bo_ref,              # (D, D), (1, D)       MHA out-proj
    g2_ref, b2_ref,              # (1, D)               LayerNorm2
    w1_ref, fb1_ref,             # (D, D//2), (1, D//2) FFN layer 1
    w2_ref, fb2_ref,             # (D//2, D), (1, D)    FFN layer 2
    o_ref,                       # (S, bb, D)
    *, n_heads, head_dim, batch_block,
):
    f32 = jnp.float32
    eps = 1e-5
    H, hd = n_heads, head_dim
    D = H * hd

    # Hoist all constant loads out of the batch loop.
    g1, b1 = g1_ref[...], b1_ref[...]
    wq, pe = wq_ref[...], pe_ref[...]
    wqkv, peqkv = wqkv_ref[...], peqkv_ref[...]
    wo, bo = wo_ref[...], bo_ref[...]
    g2, b2 = g2_ref[...], b2_ref[...]
    w1, fb1 = w1_ref[...], fb1_ref[...]
    w2, fb2 = w2_ref[...], fb2_ref[...]

    # Static unroll over the per-program batch block: the per-b chains are independent,
    # so the LLO scheduler interleaves them to hide MXU/XLU/EUP FIFO latency.
    for b in range(batch_block):
        xb = x_ref[:, b, :]                                          # (S, input_dim)

        # --- LayerNorm 1 ---
        mu = jnp.mean(xb, axis=-1, keepdims=True)
        var = jnp.mean(jnp.square(xb - mu), axis=-1, keepdims=True)
        xn = (xb - mu) * jax.lax.rsqrt(var + eps) * g1 + b1

        # --- q with positional encoding (reference residual is `q + attn`) ---
        q = jnp.dot(xn, wq, preferred_element_type=f32) + pe         # (S, D)

        # --- fused in-projection: q/k/v for all heads in ONE wide matmul ---
        qkv = jnp.dot(xn, wqkv, preferred_element_type=f32) + peqkv  # (S, 3D)

        # --- per-head attention from static lane slices of qkv ---
        ctx_heads = []
        for h in range(H):
            qh = qkv[:, h * hd:(h + 1) * hd]           # (S, hd), scale folded host-side
            kh = qkv[:, D + h * hd:D + (h + 1) * hd]
            vh = qkv[:, 2 * D + h * hd:2 * D + (h + 1) * hd]
            sc = jax.lax.dot_general(qh, kh, (((1,), (1,)), ((), ())),
                                     preferred_element_type=f32)     # (S, S) = q @ k^T
            m = jnp.max(sc, axis=-1, keepdims=True)
            p = jnp.exp(sc - m)
            l = jnp.sum(p, axis=-1, keepdims=True)
            ctx = jnp.dot(p, vh, preferred_element_type=f32)         # (S, hd)
            # Normalize the (narrower) context instead of p; EUP approx reciprocal
            # + one Newton step gives exact-divide accuracy off the VALU hot path.
            r = pl.reciprocal(l, approx=True)
            r = r * (2.0 - l * r)
            ctx_heads.append(ctx * r)

        # --- fused out-projection: lane-concat heads, one (S,D)@(D,D) matmul ---
        ctx_cat = jnp.concatenate(ctx_heads, axis=-1)                # (S, D)
        attn = jnp.dot(ctx_cat, wo, preferred_element_type=f32) + bo

        # --- residual 1 (dropout = identity at inference) ---
        y = q + attn

        # --- LayerNorm 2 ---
        mu2 = jnp.mean(y, axis=-1, keepdims=True)
        var2 = jnp.mean(jnp.square(y - mu2), axis=-1, keepdims=True)
        yn = (y - mu2) * jax.lax.rsqrt(var2 + eps) * g2 + b2

        # --- feedforward: Linear -> GELU -> Linear ---
        h1 = _gelu_exact(jnp.dot(yn, w1, preferred_element_type=f32) + fb1)
        h2 = jnp.dot(h1, w2, preferred_element_type=f32) + fb2

        # --- residual 2 (from post-norm2 tensor, per reference forward) ---
        o_ref[:, b, :] = yn + h2


def sinusoidal_pe(seq_len, d_model):
    pos = np.arange(seq_len, dtype=np.float32)[:, None]
    div = np.exp(np.arange(0, d_model, 2, dtype=np.float32) *
                 (-math.log(10000.0) / d_model))
    pe = np.zeros((seq_len, d_model), np.float32)
    pe[:, 0::2] = np.sin(pos * div)
    pe[:, 1::2] = np.cos(pos * div)
    return jnp.asarray(pe)


def init_params(key, input_dim, d_model, n_heads):
    ks = jax.random.split(key, 10)

    def linear_w(k, out_f, in_f):
        bound = 1.0 / math.sqrt(in_f)
        return jax.random.uniform(k, (out_f, in_f), jnp.float32, -bound, bound)

    def linear_b(k, out_f, in_f):
        bound = 1.0 / math.sqrt(in_f)
        return jax.random.uniform(k, (out_f,), jnp.float32, -bound, bound)

    xav = math.sqrt(6.0 / (d_model + d_model))
    return {
        "ln1_g": jnp.ones((input_dim,), jnp.float32),
        "ln1_b": jnp.zeros((input_dim,), jnp.float32),
        "wq": linear_w(ks[0], d_model, input_dim),
        "wk": linear_w(ks[1], d_model, input_dim),
        "wv": linear_w(ks[2], d_model, input_dim),
        "in_proj_w": jax.random.uniform(ks[3], (3 * d_model, d_model),
                                        jnp.float32, -xav, xav),
        "in_proj_b": jnp.zeros((3 * d_model,), jnp.float32),
        "out_w": linear_w(ks[4], d_model, d_model),
        "out_b": jnp.zeros((d_model,), jnp.float32),   # MHA zero-inits out_proj bias
        "ln2_g": jnp.ones((d_model,), jnp.float32),
        "ln2_b": jnp.zeros((d_model,), jnp.float32),
        "ff1_w": linear_w(ks[5], d_model // 2, d_model),
        "ff1_b": linear_b(ks[6], d_model // 2, d_model),
        "ff2_w": linear_w(ks[7], d_model, d_model // 2),
        "ff2_b": linear_b(ks[8], d_model, d_model // 2),
    }


def transformer_block(x, params, n_heads, batch_block=None):
    """x: (seq, batch, input_dim) -> (seq, batch, d_model)."""
    S, B, input_dim = x.shape
    D = params["wq"].shape[0]
    H = n_heads
    hd = D // H
    scale = 1.0 / math.sqrt(hd)

    if batch_block is None:
        # Fold the whole batch into one program: best for single-TC v5e/v6e (no per-step
        # grid overhead, per-batch chains interleave inside one program).
        # TODO(synk): on 2-TensorCore chips (v7x / megacore) pass batch_block=B//2 (it must
        # tile cleanly: a multiple of 8 or equal to B) so the "parallel" grid axis
        # occupies both cores instead of collapsing to a single program.
        batch_block = B
    assert B % batch_block == 0, "batch_block must divide the batch size"
    num_blocks = B // batch_block

    pe = sinusoidal_pe(S, D)                                   # (S, D)

    wq_t = params["wq"].T                                      # (in, D)
    wk_t = params["wk"].T
    wv_t = params["wv"].T

    inpw, inpb = params["in_proj_w"], params["in_proj_b"]
    wqi_t, wki_t, wvi_t = inpw[:D].T, inpw[D:2 * D].T, inpw[2 * D:].T
    bqi, bki, bvi = inpb[:D], inpb[D:2 * D], inpb[2 * D:]

    # Algebraic fusion of the two projection stages (q-scale folded into the q part),
    # packed into a single (in, 3D) weight / (S, 3D) additive term.
    a_q = (wq_t @ wqi_t) * scale                               # (in, D)
    c_q = (pe @ wqi_t + bqi) * scale                           # (S, D)
    a_k = wk_t @ wki_t
    c_k = pe @ wki_t + bki
    a_v = wv_t @ wvi_t
    c_v = pe @ wvi_t + bvi

    w_qkv = jnp.concatenate([a_q, a_k, a_v], axis=1)           # (in, 3D)
    pe_qkv = jnp.concatenate([c_q, c_k, c_v], axis=1)          # (S, 3D)

    wo = params["out_w"].T                                     # (D, D)
    bo = params["out_b"].reshape(1, D)

    args = (
        x,                                                     # (S, B, in), no transpose
        params["ln1_g"].reshape(1, -1), params["ln1_b"].reshape(1, -1),
        wq_t, pe,
        w_qkv, pe_qkv,
        wo, bo,
        params["ln2_g"].reshape(1, -1), params["ln2_b"].reshape(1, -1),
        params["ff1_w"].T, params["ff1_b"].reshape(1, -1),
        params["ff2_w"].T, params["ff2_b"].reshape(1, -1),
    )

    def const_spec(a):
        nd = a.ndim
        return pl.BlockSpec(tuple(a.shape), lambda i, _nd=nd: (0,) * _nd)

    # Block the batch axis of x / out in place (no wrapper transposes).
    in_specs = [pl.BlockSpec((S, batch_block, input_dim), lambda i: (0, i, 0))]
    in_specs += [const_spec(a) for a in args[1:]]
    out_specs = pl.BlockSpec((S, batch_block, D), lambda i: (0, i, 0))

    kernel = functools.partial(transformer_block_kernel,
                               n_heads=H, head_dim=hd, batch_block=batch_block)
    out = pl.pallas_call(
        kernel,
        out_shape=jax.ShapeDtypeStruct((S, B, D), jnp.float32),
        grid=(num_blocks,),
        in_specs=in_specs,
        out_specs=out_specs,
        compiler_params=pltpu.CompilerParams(
            dimension_semantics=("parallel",)),   # shards across TCs when num_blocks > 1
    )(*args)

    return out                                                 # already (S, B, D)


if __name__ == "__main__":
    S, B, input_dim, d_model, n_heads = 8, 2, 16, 32, 4

    key = jax.random.PRNGKey(0)
    kx, kp = jax.random.split(key)
    x = jax.random.normal(kx, (S, B, input_dim), jnp.float32)
    params = init_params(kp, input_dim, d_model, n_heads)

    out = transformer_block(x, params, n_heads)
    jax.block_until_ready(out)

    assert out.shape == (S, B, d_model), out.shape
    assert bool(jnp.all(jnp.isfinite(out)))
    print("KERNEL_OK")
</pallas_src>

<mosaic_0001>
module attributes {stable_mosaic.version = 11 : i64} {
  func.func @transformer_block_kernel(%arg0: i32, %arg1: memref<8x2x16xf32, #tpu.memory_space<vmem>>, %arg2: memref<1x16xf32, #tpu.memory_space<vmem>>, %arg3: memref<1x16xf32, #tpu.memory_space<vmem>>, %arg4: memref<16x32xf32, #tpu.memory_space<vmem>>, %arg5: memref<8x32xf32, #tpu.memory_space<vmem>>, %arg6: memref<16x96xf32, #tpu.memory_space<vmem>>, %arg7: memref<8x96xf32, #tpu.memory_space<vmem>>, %arg8: memref<32x32xf32, #tpu.memory_space<vmem>>, %arg9: memref<1x32xf32, #tpu.memory_space<vmem>>, %arg10: memref<1x32xf32, #tpu.memory_space<vmem>>, %arg11: memref<1x32xf32, #tpu.memory_space<vmem>>, %arg12: memref<32x16xf32, #tpu.memory_space<vmem>>, %arg13: memref<1x16xf32, #tpu.memory_space<vmem>>, %arg14: memref<16x32xf32, #tpu.memory_space<vmem>>, %arg15: memref<1x32xf32, #tpu.memory_space<vmem>>, %arg16: memref<8x2x32xf32, #tpu.memory_space<vmem>>) attributes {dimension_semantics = [#tpu.dimension_semantics<parallel>], iteration_bounds = array<i64: 1>, scalar_prefetch = 0 : i64, scratch_operands = 0 : i64, tpu.core_type = #tpu.core_type<tc>, window_params = [{transform_indices = @transform_0, window_bounds = array<i64: 8, 2, 16>}, {pipeline_mode = #tpu.pipeline_mode<synchronous>, transform_indices = @transform_1, window_bounds = array<i64: 1, 16>}, {pipeline_mode = #tpu.pipeline_mode<synchronous>, transform_indices = @transform_2, window_bounds = array<i64: 1, 16>}, {pipeline_mode = #tpu.pipeline_mode<synchronous>, transform_indices = @transform_3, window_bounds = array<i64: 16, 32>}, {pipeline_mode = #tpu.pipeline_mode<synchronous>, transform_indices = @transform_4, window_bounds = array<i64: 8, 32>}, {pipeline_mode = #tpu.pipeline_mode<synchronous>, transform_indices = @transform_5, window_bounds = array<i64: 16, 96>}, {pipeline_mode = #tpu.pipeline_mode<synchronous>, transform_indices = @transform_6, window_bounds = array<i64: 8, 96>}, {pipeline_mode = #tpu.pipeline_mode<synchronous>, transform_indices = @transform_7, window_bounds = array<i64: 32, 32>}, {pipeline_mode = #tpu.pipeline_mode<synchronous>, transform_indices = @transform_8, window_bounds = array<i64: 1, 32>}, {pipeline_mode = #tpu.pipeline_mode<synchronous>, transform_indices = @transform_9, window_bounds = array<i64: 1, 32>}, {pipeline_mode = #tpu.pipeline_mode<synchronous>, transform_indices = @transform_10, window_bounds = array<i64: 1, 32>}, {pipeline_mode = #tpu.pipeline_mode<synchronous>, transform_indices = @transform_11, window_bounds = array<i64: 32, 16>}, {pipeline_mode = #tpu.pipeline_mode<synchronous>, transform_indices = @transform_12, window_bounds = array<i64: 1, 16>}, {pipeline_mode = #tpu.pipeline_mode<synchronous>, transform_indices = @transform_13, window_bounds = array<i64: 16, 32>}, {pipeline_mode = #tpu.pipeline_mode<synchronous>, transform_indices = @transform_14, window_bounds = array<i64: 1, 32>}, {transform_indices = @transform_15, window_bounds = array<i64: 8, 2, 32>}]} {
    %c0 = arith.constant 0 : index
    %c0_0 = arith.constant 0 : index
    %0 = vector.load %arg2[%c0, %c0_0] : memref<1x16xf32, #tpu.memory_space<vmem>>, vector<1x16xf32>
    %c0_1 = arith.constant 0 : index
    %c0_2 = arith.constant 0 : index
    %1 = vector.load %arg3[%c0_1, %c0_2] : memref<1x16xf32, #tpu.memory_space<vmem>>, vector<1x16xf32>
    %c0_3 = arith.constant 0 : index
    %c0_4 = arith.constant 0 : index
    %2 = vector.load %arg4[%c0_3, %c0_4] : memref<16x32xf32, #tpu.memory_space<vmem>>, vector<16x32xf32>
    %c0_5 = arith.constant 0 : index
    %c0_6 = arith.constant 0 : index
    %3 = vector.load %arg5[%c0_5, %c0_6] : memref<8x32xf32, #tpu.memory_space<vmem>>, vector<8x32xf32>
    %c0_7 = arith.constant 0 : index
    %c0_8 = arith.constant 0 : index
    %4 = vector.load %arg6[%c0_7, %c0_8] : memref<16x96xf32, #tpu.memory_space<vmem>>, vector<16x96xf32>
    %c0_9 = arith.constant 0 : index
    %c0_10 = arith.constant 0 : index
    %5 = vector.load %arg7[%c0_9, %c0_10] : memref<8x96xf32, #tpu.memory_space<vmem>>, vector<8x96xf32>
    %c0_11 = arith.constant 0 : index
    %c0_12 = arith.constant 0 : index
    %6 = vector.load %arg8[%c0_11, %c0_12] : memref<32x32xf32, #tpu.memory_space<vmem>>, vector<32x32xf32>
    %c0_13 = arith.constant 0 : index
    %c0_14 = arith.constant 0 : index
    %7 = vector.load %arg9[%c0_13, %c0_14] : memref<1x32xf32, #tpu.memory_space<vmem>>, vector<1x32xf32>
    %c0_15 = arith.constant 0 : index
    %c0_16 = arith.constant 0 : index
    %8 = vector.load %arg10[%c0_15, %c0_16] : memref<1x32xf32, #tpu.memory_space<vmem>>, vector<1x32xf32>
    %c0_17 = arith.constant 0 : index
    %c0_18 = arith.constant 0 : index
    %9 = vector.load %arg11[%c0_17, %c0_18] : memref<1x32xf32, #tpu.memory_space<vmem>>, vector<1x32xf32>
    %c0_19 = arith.constant 0 : index
    %c0_20 = arith.constant 0 : index
    %10 = vector.load %arg12[%c0_19, %c0_20] : memref<32x16xf32, #tpu.memory_space<vmem>>, vector<32x16xf32>
    %c0_21 = arith.constant 0 : index
    %c0_22 = arith.constant 0 : index
    %11 = vector.load %arg13[%c0_21, %c0_22] : memref<1x16xf32, #tpu.memory_space<vmem>>, vector<1x16xf32>
    %c0_23 = arith.constant 0 : index
    %c0_24 = arith.constant 0 : index
    %12 = vector.load %arg14[%c0_23, %c0_24] : memref<16x32xf32, #tpu.memory_space<vmem>>, vector<16x32xf32>
    %c0_25 = arith.constant 0 : index
    %c0_26 = arith.constant 0 : index
    %13 = vector.load %arg15[%c0_25, %c0_26] : memref<1x32xf32, #tpu.memory_space<vmem>>, vector<1x32xf32>
    %c0_27 = arith.constant 0 : index
    %c0_28 = arith.constant 0 : index
    %c0_29 = arith.constant 0 : index
    %14 = vector.load %arg1[%c0_27, %c0_28, %c0_29] : memref<8x2x16xf32, #tpu.memory_space<vmem>>, vector<8x1x16xf32>
    %15 = vector.shape_cast %14 : vector<8x1x16xf32> to vector<8x16xf32>
    %cst = arith.constant dense<0.000000e+00> : vector<8xf32>
    %16 = vector.multi_reduction <add>, %15, %cst [1] : vector<8x16xf32> to vector<8xf32>
    %17 = vector.shape_cast %16 : vector<8xf32> to vector<8x1xf32>
    %cst_30 = arith.constant 1.600000e+01 : f32
    %18 = vector.broadcast %cst_30 : f32 to vector<8x1xf32>
    %19 = arith.divf %17, %18 : vector<8x1xf32>
    %20 = vector.broadcast %19 : vector<8x1xf32> to vector<8x16xf32>
    %21 = arith.subf %15, %20 : vector<8x16xf32>
    %22 = arith.mulf %21, %21 : vector<8x16xf32>
    %cst_31 = arith.constant dense<0.000000e+00> : vector<8xf32>
    %23 = vector.multi_reduction <add>, %22, %cst_31 [1] : vector<8x16xf32> to vector<8xf32>
    %24 = vector.shape_cast %23 : vector<8xf32> to vector<8x1xf32>
    %cst_32 = arith.constant 1.600000e+01 : f32
    %25 = vector.broadcast %cst_32 : f32 to vector<8x1xf32>
    %26 = arith.divf %24, %25 : vector<8x1xf32>
    %27 = vector.broadcast %19 : vector<8x1xf32> to vector<8x16xf32>
    %28 = arith.subf %15, %27 : vector<8x16xf32>
    %cst_33 = arith.constant 9.99999974E-6 : f32
    %29 = vector.broadcast %cst_33 : f32 to vector<8x1xf32>
    %30 = arith.addf %26, %29 : vector<8x1xf32>
    %31 = math.rsqrt %30 : vector<8x1xf32>
    %32 = vector.broadcast %31 : vector<8x1xf32> to vector<8x16xf32>
    %33 = arith.mulf %28, %32 : vector<8x16xf32>
    %34 = vector.broadcast %0 : vector<1x16xf32> to vector<8x16xf32>
    %35 = arith.mulf %33, %34 : vector<8x16xf32>
    %36 = vector.broadcast %1 : vector<1x16xf32> to vector<8x16xf32>
    %37 = arith.addf %35, %36 : vector<8x16xf32>
    %cst_34 = arith.constant dense<0.000000e+00> : vector<8x32xf32>
    %38 = tpu.matmul %37, %2, %cst_34 {dimension_numbers = #tpu.dot_dimension_numbers<[1], [0], [0], [1], [0, 0, 1, 1], [], []>} : vector<8x16xf32>, vector<16x32xf32>, vector<8x32xf32> -> vector<8x32xf32>
    %39 = arith.addf %38, %3 : vector<8x32xf32>
    %cst_35 = arith.constant dense<0.000000e+00> : vector<8x96xf32>
    %40 = tpu.matmul %37, %4, %cst_35 {dimension_numbers = #tpu.dot_dimension_numbers<[1], [0], [0], [1], [0, 0, 1, 1], [], []>} : vector<8x16xf32>, vector<16x96xf32>, vector<8x96xf32> -> vector<8x96xf32>
    %41 = arith.addf %40, %5 : vector<8x96xf32>
    %42 = vector.extract_strided_slice %41 {offsets = [0, 0], sizes = [8, 8], strides = [1, 1]} : vector<8x96xf32> to vector<8x8xf32>
    %43 = vector.extract_strided_slice %41 {offsets = [0, 32], sizes = [8, 8], strides = [1, 1]} : vector<8x96xf32> to vector<8x8xf32>
    %44 = vector.extract_strided_slice %41 {offsets = [0, 64], sizes = [8, 8], strides = [1, 1]} : vector<8x96xf32> to vector<8x8xf32>
    %cst_36 = arith.constant dense<0.000000e+00> : vector<8x8xf32>
    %45 = tpu.matmul %42, %43, %cst_36 {dimension_numbers = #tpu.dot_dimension_numbers<[1], [1], [0], [0], [0, 0, 1, 0], [], []>} : vector<8x8xf32>, vector<8x8xf32>, vector<8x8xf32> -> vector<8x8xf32>
    %cst_37 = arith.constant dense<0xFF800000> : vector<8xf32>
    %46 = vector.multi_reduction <maximumf>, %45, %cst_37 [1] : vector<8x8xf32> to vector<8xf32>
    %47 = vector.shape_cast %46 : vector<8xf32> to vector<8x1xf32>
    %48 = vector.broadcast %47 : vector<8x1xf32> to vector<8x8xf32>
    %49 = arith.subf %45, %48 : vector<8x8xf32>
    %50 = math.exp %49 : vector<8x8xf32>
    %cst_38 = arith.constant dense<0.000000e+00> : vector<8xf32>
    %51 = vector.multi_reduction <add>, %50, %cst_38 [1] : vector<8x8xf32> to vector<8xf32>
    %52 = vector.shape_cast %51 : vector<8xf32> to vector<8x1xf32>
    %cst_39 = arith.constant dense<0.000000e+00> : vector<8x8xf32>
    %53 = tpu.matmul %50, %44, %cst_39 {dimension_numbers = #tpu.dot_dimension_numbers<[1], [0], [0], [1], [0, 0, 1, 1], [], []>} : vector<8x8xf32>, vector<8x8xf32>, vector<8x8xf32> -> vector<8x8xf32>
    %54 = tpu.reciprocal %52 {approx = true} : vector<8x1xf32> -> vector<8x1xf32>
    %55 = arith.mulf %52, %54 : vector<8x1xf32>
    %cst_40 = arith.constant 2.000000e+00 : f32
    %56 = vector.broadcast %cst_40 : f32 to vector<8x1xf32>
    %57 = arith.subf %56, %55 : vector<8x1xf32>
    %58 = arith.mulf %54, %57 : vector<8x1xf32>
    %59 = vector.broadcast %58 : vector<8x1xf32> to vector<8x8xf32>
    %60 = arith.mulf %53, %59 : vector<8x8xf32>
    %61 = vector.extract_strided_slice %41 {offsets = [0, 8], sizes = [8, 8], strides = [1, 1]} : vector<8x96xf32> to vector<8x8xf32>
    %62 = vector.extract_strided_slice %41 {offsets = [0, 40], sizes = [8, 8], strides = [1, 1]} : vector<8x96xf32> to vector<8x8xf32>
    %63 = vector.extract_strided_slice %41 {offsets = [0, 72], sizes = [8, 8], strides = [1, 1]} : vector<8x96xf32> to vector<8x8xf32>
    %cst_41 = arith.constant dense<0.000000e+00> : vector<8x8xf32>
    %64 = tpu.matmul %61, %62, %cst_41 {dimension_numbers = #tpu.dot_dimension_numbers<[1], [1], [0], [0], [0, 0, 1, 0], [], []>} : vector<8x8xf32>, vector<8x8xf32>, vector<8x8xf32> -> vector<8x8xf32>
    %cst_42 = arith.constant dense<0xFF800000> : vector<8xf32>
    %65 = vector.multi_reduction <maximumf>, %64, %cst_42 [1] : vector<8x8xf32> to vector<8xf32>
    %66 = vector.shape_cast %65 : vector<8xf32> to vector<8x1xf32>
    %67 = vector.broadcast %66 : vector<8x1xf32> to vector<8x8xf32>
    %68 = arith.subf %64, %67 : vector<8x8xf32>
    %69 = math.exp %68 : vector<8x8xf32>
    %cst_43 = arith.constant dense<0.000000e+00> : vector<8xf32>
    %70 = vector.multi_reduction <add>, %69, %cst_43 [1] : vector<8x8xf32> to vector<8xf32>
    %71 = vector.shape_cast %70 : vector<8xf32> to vector<8x1xf32>
    %cst_44 = arith.constant dense<0.000000e+00> : vector<8x8xf32>
    %72 = tpu.matmul %69, %63, %cst_44 {dimension_numbers = #tpu.dot_dimension_numbers<[1], [0], [0], [1], [0, 0, 1, 1], [], []>} : vector<8x8xf32>, vector<8x8xf32>, vector<8x8xf32> -> vector<8x8xf32>
    %73 = tpu.reciprocal %71 {approx = true} : vector<8x1xf32> -> vector<8x1xf32>
    %74 = arith.mulf %71, %73 : vector<8x1xf32>
    %cst_45 = arith.constant 2.000000e+00 : f32
    %75 = vector.broadcast %cst_45 : f32 to vector<8x1xf32>
    %76 = arith.subf %75, %74 : vector<8x1xf32>
    %77 = arith.mulf %73, %76 : vector<8x1xf32>
    %78 = vector.broadcast %77 : vector<8x1xf32> to vector<8x8xf32>
    %79 = arith.mulf %72, %78 : vector<8x8xf32>
    %80 = vector.extract_strided_slice %41 {offsets = [0, 16], sizes = [8, 8], strides = [1, 1]} : vector<8x96xf32> to vector<8x8xf32>
    %81 = vector.extract_strided_slice %41 {offsets = [0, 48], sizes = [8, 8], strides = [1, 1]} : vector<8x96xf32> to vector<8x8xf32>
    %82 = vector.extract_strided_slice %41 {offsets = [0, 80], sizes = [8, 8], strides = [1, 1]} : vector<8x96xf32> to vector<8x8xf32>
    %cst_46 = arith.constant dense<0.000000e+00> : vector<8x8xf32>
    %83 = tpu.matmul %80, %81, %cst_46 {dimension_numbers = #tpu.dot_dimension_numbers<[1], [1], [0], [0], [0, 0, 1, 0], [], []>} : vector<8x8xf32>, vector<8x8xf32>, vector<8x8xf32> -> vector<8x8xf32>
    %cst_47 = arith.constant dense<0xFF800000> : vector<8xf32>
    %84 = vector.multi_reduction <maximumf>, %83, %cst_47 [1] : vector<8x8xf32> to vector<8xf32>
    %85 = vector.shape_cast %84 : vector<8xf32> to vector<8x1xf32>
    %86 = vector.broadcast %85 : vector<8x1xf32> to vector<8x8xf32>
    %87 = arith.subf %83, %86 : vector<8x8xf32>
    %88 = math.exp %87 : vector<8x8xf32>
    %cst_48 = arith.constant dense<0.000000e+00> : vector<8xf32>
    %89 = vector.multi_reduction <add>, %88, %cst_48 [1] : vector<8x8xf32> to vector<8xf32>
    %90 = vector.shape_cast %89 : vector<8xf32> to vector<8x1xf32>
    %cst_49 = arith.constant dense<0.000000e+00> : vector<8x8xf32>
    %91 = tpu.matmul %88, %82, %cst_49 {dimension_numbers = #tpu.dot_dimension_numbers<[1], [0], [0], [1], [0, 0, 1, 1], [], []>} : vector<8x8xf32>, vector<8x8xf32>, vector<8x8xf32> -> vector<8x8xf32>
    %92 = tpu.reciprocal %90 {approx = true} : vector<8x1xf32> -> vector<8x1xf32>
    %93 = arith.mulf %90, %92 : vector<8x1xf32>
    %cst_50 = arith.constant 2.000000e+00 : f32
    %94 = vector.broadcast %cst_50 : f32 to vector<8x1xf32>
    %95 = arith.subf %94, %93 : vector<8x1xf32>
    %96 = arith.mulf %92, %95 : vector<8x1xf32>
    %97 = vector.broadcast %96 : vector<8x1xf32> to vector<8x8xf32>
    %98 = arith.mulf %91, %97 : vector<8x8xf32>
    %99 = vector.extract_strided_slice %41 {offsets = [0, 24], sizes = [8, 8], strides = [1, 1]} : vector<8x96xf32> to vector<8x8xf32>
    %100 = vector.extract_strided_slice %41 {offsets = [0, 56], sizes = [8, 8], strides = [1, 1]} : vector<8x96xf32> to vector<8x8xf32>
    %101 = vector.extract_strided_slice %41 {offsets = [0, 88], sizes = [8, 8], strides = [1, 1]} : vector<8x96xf32> to vector<8x8xf32>
    %cst_51 = arith.constant dense<0.000000e+00> : vector<8x8xf32>
    %102 = tpu.matmul %99, %100, %cst_51 {dimension_numbers = #tpu.dot_dimension_numbers<[1], [1], [0], [0], [0, 0, 1, 0], [], []>} : vector<8x8xf32>, vector<8x8xf32>, vector<8x8xf32> -> vector<8x8xf32>
    %cst_52 = arith.constant dense<0xFF800000> : vector<8xf32>
    %103 = vector.multi_reduction <maximumf>, %102, %cst_52 [1] : vector<8x8xf32> to vector<8xf32>
    %104 = vector.shape_cast %103 : vector<8xf32> to vector<8x1xf32>
    %105 = vector.broadcast %104 : vector<8x1xf32> to vector<8x8xf32>
    %106 = arith.subf %102, %105 : vector<8x8xf32>
    %107 = math.exp %106 : vector<8x8xf32>
    %cst_53 = arith.constant dense<0.000000e+00> : vector<8xf32>
    %108 = vector.multi_reduction <add>, %107, %cst_53 [1] : vector<8x8xf32> to vector<8xf32>
    %109 = vector.shape_cast %108 : vector<8xf32> to vector<8x1xf32>
    %cst_54 = arith.constant dense<0.000000e+00> : vector<8x8xf32>
    %110 = tpu.matmul %107, %101, %cst_54 {dimension_numbers = #tpu.dot_dimension_numbers<[1], [0], [0], [1], [0, 0, 1, 1], [], []>} : vector<8x8xf32>, vector<8x8xf32>, vector<8x8xf32> -> vector<8x8xf32>
    %111 = tpu.reciprocal %109 {approx = true} : vector<8x1xf32> -> vector<8x1xf32>
    %112 = arith.mulf %109, %111 : vector<8x1xf32>
    %cst_55 = arith.constant 2.000000e+00 : f32
    %113 = vector.broadcast %cst_55 : f32 to vector<8x1xf32>
    %114 = arith.subf %113, %112 : vector<8x1xf32>
    %115 = arith.mulf %111, %114 : vector<8x1xf32>
    %116 = vector.broadcast %115 : vector<8x1xf32> to vector<8x8xf32>
    %117 = arith.mulf %110, %116 : vector<8x8xf32>
    %118 = tpu.concatenate %60, %79, %98, %117 in 1 : vector<8x8xf32>, vector<8x8xf32>, vector<8x8xf32>, vector<8x8xf32> -> vector<8x32xf32>
    %cst_56 = arith.constant dense<0.000000e+00> : vector<8x32xf32>
    %119 = tpu.matmul %118, %6, %cst_56 {dimension_numbers = #tpu.dot_dimension_numbers<[1], [0], [0], [1], [0, 0, 1, 1], [], []>} : vector<8x32xf32>, vector<32x32xf32>, vector<8x32xf32> -> vector<8x32xf32>
    %120 = vector.broadcast %7 : vector<1x32xf32> to vector<8x32xf32>
    %121 = arith.addf %119, %120 : vector<8x32xf32>
    %122 = arith.addf %39, %121 : vector<8x32xf32>
    %cst_57 = arith.constant dense<0.000000e+00> : vector<8xf32>
    %123 = vector.multi_reduction <add>, %122, %cst_57 [1] : vector<8x32xf32> to vector<8xf32>
    %124 = vector.shape_cast %123 : vector<8xf32> to vector<8x1xf32>
    %cst_58 = arith.constant 3.200000e+01 : f32
    %125 = vector.broadcast %cst_58 : f32 to vector<8x1xf32>
    %126 = arith.divf %124, %125 : vector<8x1xf32>
    %127 = vector.broadcast %126 : vector<8x1xf32> to vector<8x32xf32>
    %128 = arith.subf %122, %127 : vector<8x32xf32>
    %129 = arith.mulf %128, %128 : vector<8x32xf32>
    %cst_59 = arith.constant dense<0.000000e+00> : vector<8xf32>
    %130 = vector.multi_reduction <add>, %129, %cst_59 [1] : vector<8x32xf32> to vector<8xf32>
    %131 = vector.shape_cast %130 : vector<8xf32> to vector<8x1xf32>
    %cst_60 = arith.constant 3.200000e+01 : f32
    %132 = vector.broadcast %cst_60 : f32 to vector<8x1xf32>
    %133 = arith.divf %131, %132 : vector<8x1xf32>
    %134 = vector.broadcast %126 : vector<8x1xf32> to vector<8x32xf32>
    %135 = arith.subf %122, %134 : vector<8x32xf32>
    %cst_61 = arith.constant 9.99999974E-6 : f32
    %136 = vector.broadcast %cst_61 : f32 to vector<8x1xf32>
    %137 = arith.addf %133, %136 : vector<8x1xf32>
    %138 = math.rsqrt %137 : vector<8x1xf32>
    %139 = vector.broadcast %138 : vector<8x1xf32> to vector<8x32xf32>
    %140 = arith.mulf %135, %139 : vector<8x32xf32>
    %141 = vector.broadcast %8 : vector<1x32xf32> to vector<8x32xf32>
    %142 = arith.mulf %140, %141 : vector<8x32xf32>
    %143 = vector.broadcast %9 : vector<1x32xf32> to vector<8x32xf32>
    %144 = arith.addf %142, %143 : vector<8x32xf32>
    %cst_62 = arith.constant dense<0.000000e+00> : vector<8x16xf32>
    %145 = tpu.matmul %144, %10, %cst_62 {dimension_numbers = #tpu.dot_dimension_numbers<[1], [0], [0], [1], [0, 0, 1, 1], [], []>} : vector<8x32xf32>, vector<32x16xf32>, vector<8x16xf32> -> vector<8x16xf32>
    %146 = vector.broadcast %11 : vector<1x16xf32> to vector<8x16xf32>
    %147 = arith.addf %145, %146 : vector<8x16xf32>
    %cst_63 = arith.constant 5.000000e-01 : f32
    %148 = vector.broadcast %cst_63 : f32 to vector<8x16xf32>
    %149 = arith.mulf %148, %147 : vector<8x16xf32>
    %cst_64 = arith.constant 0.707106769 : f32
    %150 = vector.broadcast %cst_64 : f32 to vector<8x16xf32>
    %151 = arith.mulf %147, %150 : vector<8x16xf32>
    %152 = math.absf %151 : vector<8x16xf32>
    %cst_65 = arith.constant 0.327591091 : f32
    %153 = vector.broadcast %cst_65 : f32 to vector<8x16xf32>
    %154 = arith.mulf %153, %152 : vector<8x16xf32>
    %cst_66 = arith.constant 1.000000e+00 : f32
    %155 = vector.broadcast %cst_66 : f32 to vector<8x16xf32>
    %156 = arith.addf %155, %154 : vector<8x16xf32>
    %cst_67 = arith.constant 1.000000e+00 : f32
    %157 = vector.broadcast %cst_67 : f32 to vector<8x16xf32>
    %158 = arith.divf %157, %156 : vector<8x16xf32>
    %cst_68 = arith.constant 1.06140542 : f32
    %159 = vector.broadcast %cst_68 : f32 to vector<8x16xf32>
    %160 = arith.mulf %159, %158 : vector<8x16xf32>
    %cst_69 = arith.constant -1.45315206 : f32
    %161 = vector.broadcast %cst_69 : f32 to vector<8x16xf32>
    %162 = arith.addf %160, %161 : vector<8x16xf32>
    %163 = arith.mulf %162, %158 : vector<8x16xf32>
    %cst_70 = arith.constant 1.42141378 : f32
    %164 = vector.broadcast %cst_70 : f32 to vector<8x16xf32>
    %165 = arith.addf %163, %164 : vector<8x16xf32>
    %166 = arith.mulf %165, %158 : vector<8x16xf32>
    %cst_71 = arith.constant -0.284496725 : f32
    %167 = vector.broadcast %cst_71 : f32 to vector<8x16xf32>
    %168 = arith.addf %166, %167 : vector<8x16xf32>
    %169 = arith.mulf %168, %158 : vector<8x16xf32>
    %cst_72 = arith.constant 0.254829586 : f32
    %170 = vector.broadcast %cst_72 : f32 to vector<8x16xf32>
    %171 = arith.addf %169, %170 : vector<8x16xf32>
    %172 = arith.mulf %171, %158 : vector<8x16xf32>
    %cst_73 = arith.constant 0.000000e+00 : f32
    %173 = vector.broadcast %cst_73 : f32 to vector<8x16xf32>
    %174 = arith.subf %173, %152 : vector<8x16xf32>
    %175 = arith.mulf %174, %152 : vector<8x16xf32>
    %176 = math.exp %175 : vector<8x16xf32>
    %177 = arith.mulf %172, %176 : vector<8x16xf32>
    %cst_74 = arith.constant 1.000000e+00 : f32
    %178 = vector.broadcast %cst_74 : f32 to vector<8x16xf32>
    %179 = arith.subf %178, %177 : vector<8x16xf32>
    %cst_75 = arith.constant 0.000000e+00 : f32
    %180 = vector.broadcast %cst_75 : f32 to vector<8x16xf32>
    %181 = arith.cmpf olt, %151, %180 : vector<8x16xf32>
    %cst_76 = arith.constant 0.000000e+00 : f32
    %182 = vector.broadcast %cst_76 : f32 to vector<8x16xf32>
    %183 = arith.subf %182, %179 : vector<8x16xf32>
    %184 = arith.select %181, %183, %179 : vector<8x16xi1>, vector<8x16xf32>
    %cst_77 = arith.constant 1.000000e+00 : f32
    %185 = vector.broadcast %cst_77 : f32 to vector<8x16xf32>
    %186 = arith.addf %185, %184 : vector<8x16xf32>
    %187 = arith.mulf %149, %186 : vector<8x16xf32>
    %cst_78 = arith.constant dense<0.000000e+00> : vector<8x32xf32>
    %188 = tpu.matmul %187, %12, %cst_78 {dimension_numbers = #tpu.dot_dimension_numbers<[1], [0], [0], [1], [0, 0, 1, 1], [], []>} : vector<8x16xf32>, vector<16x32xf32>, vector<8x32xf32> -> vector<8x32xf32>
    %189 = vector.broadcast %13 : vector<1x32xf32> to vector<8x32xf32>
    %190 = arith.addf %188, %189 : vector<8x32xf32>
    %191 = arith.addf %144, %190 : vector<8x32xf32>
    %c0_79 = arith.constant 0 : index
    %c0_80 = arith.constant 0 : index
    %c0_81 = arith.constant 0 : index
    %192 = vector.load %arg16[%c0_79, %c0_80, %c0_81] : memref<8x2x32xf32, #tpu.memory_space<vmem>>, vector<8x1x32xf32>
    %193 = vector.shape_cast %192 : vector<8x1x32xf32> to vector<8x32xf32>
    %194 = vector.shape_cast %191 : vector<8x32xf32> to vector<8x1x32xf32>
    tpu.vector_store %arg16[%c0_79, %c0_80, %c0_81], %194 {strides = array<i32>} : memref<8x2x32xf32, #tpu.memory_space<vmem>>, vector<8x1x32xf32>,
    %c0_82 = arith.constant 0 : index
    %c1 = arith.constant 1 : index
    %c0_83 = arith.constant 0 : index
    %195 = vector.load %arg1[%c0_82, %c1, %c0_83] : memref<8x2x16xf32, #tpu.memory_space<vmem>>, vector<8x1x16xf32>
    %196 = vector.shape_cast %195 : vector<8x1x16xf32> to vector<8x16xf32>
    %cst_84 = arith.constant dense<0.000000e+00> : vector<8xf32>
    %197 = vector.multi_reduction <add>, %196, %cst_84 [1] : vector<8x16xf32> to vector<8xf32>
    %198 = vector.shape_cast %197 : vector<8xf32> to vector<8x1xf32>
    %cst_85 = arith.constant 1.600000e+01 : f32
    %199 = vector.broadcast %cst_85 : f32 to vector<8x1xf32>
    %200 = arith.divf %198, %199 : vector<8x1xf32>
    %201 = vector.broadcast %200 : vector<8x1xf32> to vector<8x16xf32>
    %202 = arith.subf %196, %201 : vector<8x16xf32>
    %203 = arith.mulf %202, %202 : vector<8x16xf32>
    %cst_86 = arith.constant dense<0.000000e+00> : vector<8xf32>
    %204 = vector.multi_reduction <add>, %203, %cst_86 [1] : vector<8x16xf32> to vector<8xf32>
    %205 = vector.shape_cast %204 : vector<8xf32> to vector<8x1xf32>
    %cst_87 = arith.constant 1.600000e+01 : f32
    %206 = vector.broadcast %cst_87 : f32 to vector<8x1xf32>
    %207 = arith.divf %205, %206 : vector<8x1xf32>
    %208 = vector.broadcast %200 : vector<8x1xf32> to vector<8x16xf32>
    %209 = arith.subf %196, %208 : vector<8x16xf32>
    %cst_88 = arith.constant 9.99999974E-6 : f32
    %210 = vector.broadcast %cst_88 : f32 to vector<8x1xf32>
    %211 = arith.addf %207, %210 : vector<8x1xf32>
    %212 = math.rsqrt %211 : vector<8x1xf32>
    %213 = vector.broadcast %212 : vector<8x1xf32> to vector<8x16xf32>
    %214 = arith.mulf %209, %213 : vector<8x16xf32>
    %215 = vector.broadcast %0 : vector<1x16xf32> to vector<8x16xf32>
    %216 = arith.mulf %214, %215 : vector<8x16xf32>
    %217 = vector.broadcast %1 : vector<1x16xf32> to vector<8x16xf32>
    %218 = arith.addf %216, %217 : vector<8x16xf32>
    %cst_89 = arith.constant dense<0.000000e+00> : vector<8x32xf32>
    %219 = tpu.matmul %218, %2, %cst_89 {dimension_numbers = #tpu.dot_dimension_numbers<[1], [0], [0], [1], [0, 0, 1, 1], [], []>} : vector<8x16xf32>, vector<16x32xf32>, vector<8x32xf32> -> vector<8x32xf32>
    %220 = arith.addf %219, %3 : vector<8x32xf32>
    %cst_90 = arith.constant dense<0.000000e+00> : vector<8x96xf32>
    %221 = tpu.matmul %218, %4, %cst_90 {dimension_numbers = #tpu.dot_dimension_numbers<[1], [0], [0], [1], [0, 0, 1, 1], [], []>} : vector<8x16xf32>, vector<16x96xf32>, vector<8x96xf32> -> vector<8x96xf32>
    %222 = arith.addf %221, %5 : vector<8x96xf32>
    %223 = vector.extract_strided_slice %222 {offsets = [0, 0], sizes = [8, 8], strides = [1, 1]} : vector<8x96xf32> to vector<8x8xf32>
    %224 = vector.extract_strided_slice %222 {offsets = [0, 32], sizes = [8, 8], strides = [1, 1]} : vector<8x96xf32> to vector<8x8xf32>
    %225 = vector.extract_strided_slice %222 {offsets = [0, 64], sizes = [8, 8], strides = [1, 1]} : vector<8x96xf32> to vector<8x8xf32>
    %cst_91 = arith.constant dense<0.000000e+00> : vector<8x8xf32>
    %226 = tpu.matmul %223, %224, %cst_91 {dimension_numbers = #tpu.dot_dimension_numbers<[1], [1], [0], [0], [0, 0, 1, 0], [], []>} : vector<8x8xf32>, vector<8x8xf32>, vector<8x8xf32> -> vector<8x8xf32>
    %cst_92 = arith.constant dense<0xFF800000> : vector<8xf32>
    %227 = vector.multi_reduction <maximumf>, %226, %cst_92 [1] : vector<8x8xf32> to vector<8xf32>
    %228 = vector.shape_cast %227 : vector<8xf32> to vector<8x1xf32>
    %229 = vector.broadcast %228 : vector<8x1xf32> to vector<8x8xf32>
    %230 = arith.subf %226, %229 : vector<8x8xf32>
    %231 = math.exp %230 : vector<8x8xf32>
    %cst_93 = arith.constant dense<0.000000e+00> : vector<8xf32>
    %232 = vector.multi_reduction <add>, %231, %cst_93 [1] : vector<8x8xf32> to vector<8xf32>
    %233 = vector.shape_cast %232 : vector<8xf32> to vector<8x1xf32>
    %cst_94 = arith.constant dense<0.000000e+00> : vector<8x8xf32>
    %234 = tpu.matmul %231, %225, %cst_94 {dimension_numbers = #tpu.dot_dimension_numbers<[1], [0], [0], [1], [0, 0, 1, 1], [], []>} : vector<8x8xf32>, vector<8x8xf32>, vector<8x8xf32> -> vector<8x8xf32>
    %235 = tpu.reciprocal %233 {approx = true} : vector<8x1xf32> -> vector<8x1xf32>
    %236 = arith.mulf %233, %235 : vector<8x1xf32>
    %cst_95 = arith.constant 2.000000e+00 : f32
    %237 = vector.broadcast %cst_95 : f32 to vector<8x1xf32>
    %238 = arith.subf %237, %236 : vector<8x1xf32>
    %239 = arith.mulf %235, %238 : vector<8x1xf32>
    %240 = vector.broadcast %239 : vector<8x1xf32> to vector<8x8xf32>
    %241 = arith.mulf %234, %240 : vector<8x8xf32>
    %242 = vector.extract_strided_slice %222 {offsets = [0, 8], sizes = [8, 8], strides = [1, 1]} : vector<8x96xf32> to vector<8x8xf32>
    %243 = vector.extract_strided_slice %222 {offsets = [0, 40], sizes = [8, 8], strides = [1, 1]} : vector<8x96xf32> to vector<8x8xf32>
    %244 = vector.extract_strided_slice %222 {offsets = [0, 72], sizes = [8, 8], strides = [1, 1]} : vector<8x96xf32> to vector<8x8xf32>
    %cst_96 = arith.constant dense<0.000000e+00> : vector<8x8xf32>
    %245 = tpu.matmul %242, %243, %cst_96 {dimension_numbers = #tpu.dot_dimension_numbers<[1], [1], [0], [0], [0, 0, 1, 0], [], []>} : vector<8x8xf32>, vector<8x8xf32>, vector<8x8xf32> -> vector<8x8xf32>
    %cst_97 = arith.constant dense<0xFF800000> : vector<8xf32>
    %246 = vector.multi_reduction <maximumf>, %245, %cst_97 [1] : vector<8x8xf32> to vector<8xf32>
    %247 = vector.shape_cast %246 : vector<8xf32> to vector<8x1xf32>
    %248 = vector.broadcast %247 : vector<8x1xf32> to vector<8x8xf32>
    %249 = arith.subf %245, %248 : vector<8x8xf32>
    %250 = math.exp %249 : vector<8x8xf32>
    %cst_98 = arith.constant dense<0.000000e+00> : vector<8xf32>
    %251 = vector.multi_reduction <add>, %250, %cst_98 [1] : vector<8x8xf32> to vector<8xf32>
    %252 = vector.shape_cast %251 : vector<8xf32> to vector<8x1xf32>
    %cst_99 = arith.constant dense<0.000000e+00> : vector<8x8xf32>
    %253 = tpu.matmul %250, %244, %cst_99 {dimension_numbers = #tpu.dot_dimension_numbers<[1], [0], [0], [1], [0, 0, 1, 1], [], []>} : vector<8x8xf32>, vector<8x8xf32>, vector<8x8xf32> -> vector<8x8xf32>
    %254 = tpu.reciprocal %252 {approx = true} : vector<8x1xf32> -> vector<8x1xf32>
    %255 = arith.mulf %252, %254 : vector<8x1xf32>
    %cst_100 = arith.constant 2.000000e+00 : f32
    %256 = vector.broadcast %cst_100 : f32 to vector<8x1xf32>
    %257 = arith.subf %256, %255 : vector<8x1xf32>
    %258 = arith.mulf %254, %257 : vector<8x1xf32>
    %259 = vector.broadcast %258 : vector<8x1xf32> to vector<8x8xf32>
    %260 = arith.mulf %253, %259 : vector<8x8xf32>
    %261 = vector.extract_strided_slice %222 {offsets = [0, 16], sizes = [8, 8], strides = [1, 1]} : vector<8x96xf32> to vector<8x8xf32>
    %262 = vector.extract_strided_slice %222 {offsets = [0, 48], sizes = [8, 8], strides = [1, 1]} : vector<8x96xf32> to vector<8x8xf32>
    %263 = vector.extract_strided_slice %222 {offsets = [0, 80], sizes = [8, 8], strides = [1, 1]} : vector<8x96xf32> to vector<8x8xf32>
    %cst_101 = arith.constant dense<0.000000e+00> : vector<8x8xf32>
    %264 = tpu.matmul %261, %262, %cst_101 {dimension_numbers = #tpu.dot_dimension_numbers<[1], [1], [0], [0], [0, 0, 1, 0], [], []>} : vector<8x8xf32>, vector<8x8xf32>, vector<8x8xf32> -> vector<8x8xf32>
    %cst_102 = arith.constant dense<0xFF800000> : vector<8xf32>
    %265 = vector.multi_reduction <maximumf>, %264, %cst_102 [1] : vector<8x8xf32> to vector<8xf32>
    %266 = vector.shape_cast %265 : vector<8xf32> to vector<8x1xf32>
    %267 = vector.broadcast %266 : vector<8x1xf32> to vector<8x8xf32>
    %268 = arith.subf %264, %267 : vector<8x8xf32>
    %269 = math.exp %268 : vector<8x8xf32>
    %cst_103 = arith.constant dense<0.000000e+00> : vector<8xf32>
    %270 = vector.multi_reduction <add>, %269, %cst_103 [1] : vector<8x8xf32> to vector<8xf32>
    %271 = vector.shape_cast %270 : vector<8xf32> to vector<8x1xf32>
    %cst_104 = arith.constant dense<0.000000e+00> : vector<8x8xf32>
    %272 = tpu.matmul %269, %263, %cst_104 {dimension_numbers = #tpu.dot_dimension_numbers<[1], [0], [0], [1], [0, 0, 1, 1], [], []>} : vector<8x8xf32>, vector<8x8xf32>, vector<8x8xf32> -> vector<8x8xf32>
    %273 = tpu.reciprocal %271 {approx = true} : vector<8x1xf32> -> vector<8x1xf32>
    %274 = arith.mulf %271, %273 : vector<8x1xf32>
    %cst_105 = arith.constant 2.000000e+00 : f32
    %275 = vector.broadcast %cst_105 : f32 to vector<8x1xf32>
    %276 = arith.subf %275, %274 : vector<8x1xf32>
    %277 = arith.mulf %273, %276 : vector<8x1xf32>
    %278 = vector.broadcast %277 : vector<8x1xf32> to vector<8x8xf32>
    %279 = arith.mulf %272, %278 : vector<8x8xf32>
    %280 = vector.extract_strided_slice %222 {offsets = [0, 24], sizes = [8, 8], strides = [1, 1]} : vector<8x96xf32> to vector<8x8xf32>
    %281 = vector.extract_strided_slice %222 {offsets = [0, 56], sizes = [8, 8], strides = [1, 1]} : vector<8x96xf32> to vector<8x8xf32>
    %282 = vector.extract_strided_slice %222 {offsets = [0, 88], sizes = [8, 8], strides = [1, 1]} : vector<8x96xf32> to vector<8x8xf32>
    %cst_106 = arith.constant dense<0.000000e+00> : vector<8x8xf32>
    %283 = tpu.matmul %280, %281, %cst_106 {dimension_numbers = #tpu.dot_dimension_numbers<[1], [1], [0], [0], [0, 0, 1, 0], [], []>} : vector<8x8xf32>, vector<8x8xf32>, vector<8x8xf32> -> vector<8x8xf32>
    %cst_107 = arith.constant dense<0xFF800000> : vector<8xf32>
    %284 = vector.multi_reduction <maximumf>, %283, %cst_107 [1] : vector<8x8xf32> to vector<8xf32>
    %285 = vector.shape_cast %284 : vector<8xf32> to vector<8x1xf32>
    %286 = vector.broadcast %285 : vector<8x1xf32> to vector<8x8xf32>
    %287 = arith.subf %283, %286 : vector<8x8xf32>
    %288 = math.exp %287 : vector<8x8xf32>
    %cst_108 = arith.constant dense<0.000000e+00> : vector<8xf32>
    %289 = vector.multi_reduction <add>, %288, %cst_108 [1] : vector<8x8xf32> to vector<8xf32>
    %290 = vector.shape_cast %289 : vector<8xf32> to vector<8x1xf32>
    %cst_109 = arith.constant dense<0.000000e+00> : vector<8x8xf32>
    %291 = tpu.matmul %288, %282, %cst_109 {dimension_numbers = #tpu.dot_dimension_numbers<[1], [0], [0], [1], [0, 0, 1, 1], [], []>} : vector<8x8xf32>, vector<8x8xf32>, vector<8x8xf32> -> vector<8x8xf32>
    %292 = tpu.reciprocal %290 {approx = true} : vector<8x1xf32> -> vector<8x1xf32>
    %293 = arith.mulf %290, %292 : vector<8x1xf32>
    %cst_110 = arith.constant 2.000000e+00 : f32
    %294 = vector.broadcast %cst_110 : f32 to vector<8x1xf32>
    %295 = arith.subf %294, %293 : vector<8x1xf32>
    %296 = arith.mulf %292, %295 : vector<8x1xf32>
    %297 = vector.broadcast %296 : vector<8x1xf32> to vector<8x8xf32>
    %298 = arith.mulf %291, %297 : vector<8x8xf32>
    %299 = tpu.concatenate %241, %260, %279, %298 in 1 : vector<8x8xf32>, vector<8x8xf32>, vector<8x8xf32>, vector<8x8xf32> -> vector<8x32xf32>
    %cst_111 = arith.constant dense<0.000000e+00> : vector<8x32xf32>
    %300 = tpu.matmul %299, %6, %cst_111 {dimension_numbers = #tpu.dot_dimension_numbers<[1], [0], [0], [1], [0, 0, 1, 1], [], []>} : vector<8x32xf32>, vector<32x32xf32>, vector<8x32xf32> -> vector<8x32xf32>
    %301 = vector.broadcast %7 : vector<1x32xf32> to vector<8x32xf32>
    %302 = arith.addf %300, %301 : vector<8x32xf32>
    %303 = arith.addf %220, %302 : vector<8x32xf32>
    %cst_112 = arith.constant dense<0.000000e+00> : vector<8xf32>
    %304 = vector.multi_reduction <add>, %303, %cst_112 [1] : vector<8x32xf32> to vector<8xf32>
    %305 = vector.shape_cast %304 : vector<8xf32> to vector<8x1xf32>
    %cst_113 = arith.constant 3.200000e+01 : f32
    %306 = vector.broadcast %cst_113 : f32 to vector<8x1xf32>
    %307 = arith.divf %305, %306 : vector<8x1xf32>
    %308 = vector.broadcast %307 : vector<8x1xf32> to vector<8x32xf32>
    %309 = arith.subf %303, %308 : vector<8x32xf32>
    %310 = arith.mulf %309, %309 : vector<8x32xf32>
    %cst_114 = arith.constant dense<0.000000e+00> : vector<8xf32>
    %311 = vector.multi_reduction <add>, %310, %cst_114 [1] : vector<8x32xf32> to vector<8xf32>
    %312 = vector.shape_cast %311 : vector<8xf32> to vector<8x1xf32>
    %cst_115 = arith.constant 3.200000e+01 : f32
    %313 = vector.broadcast %cst_115 : f32 to vector<8x1xf32>
    %314 = arith.divf %312, %313 : vector<8x1xf32>
    %315 = vector.broadcast %307 : vector<8x1xf32> to vector<8x32xf32>
    %316 = arith.subf %303, %315 : vector<8x32xf32>
    %cst_116 = arith.constant 9.99999974E-6 : f32
    %317 = vector.broadcast %cst_116 : f32 to vector<8x1xf32>
    %318 = arith.addf %314, %317 : vector<8x1xf32>
    %319 = math.rsqrt %318 : vector<8x1xf32>
    %320 = vector.broadcast %319 : vector<8x1xf32> to vector<8x32xf32>
    %321 = arith.mulf %316, %320 : vector<8x32xf32>
    %322 = vector.broadcast %8 : vector<1x32xf32> to vector<8x32xf32>
    %323 = arith.mulf %321, %322 : vector<8x32xf32>
    %324 = vector.broadcast %9 : vector<1x32xf32> to vector<8x32xf32>
    %325 = arith.addf %323, %324 : vector<8x32xf32>
    %cst_117 = arith.constant dense<0.000000e+00> : vector<8x16xf32>
    %326 = tpu.matmul %325, %10, %cst_117 {dimension_numbers = #tpu.dot_dimension_numbers<[1], [0], [0], [1], [0, 0, 1, 1], [], []>} : vector<8x32xf32>, vector<32x16xf32>, vector<8x16xf32> -> vector<8x16xf32>
    %327 = vector.broadcast %11 : vector<1x16xf32> to vector<8x16xf32>
    %328 = arith.addf %326, %327 : vector<8x16xf32>
    %cst_118 = arith.constant 5.000000e-01 : f32
    %329 = vector.broadcast %cst_118 : f32 to vector<8x16xf32>
    %330 = arith.mulf %329, %328 : vector<8x16xf32>
    %cst_119 = arith.constant 0.707106769 : f32
    %331 = vector.broadcast %cst_119 : f32 to vector<8x16xf32>
    %332 = arith.mulf %328, %331 : vector<8x16xf32>
    %333 = math.absf %332 : vector<8x16xf32>
    %cst_120 = arith.constant 0.327591091 : f32
    %334 = vector.broadcast %cst_120 : f32 to vector<8x16xf32>
    %335 = arith.mulf %334, %333 : vector<8x16xf32>
    %cst_121 = arith.constant 1.000000e+00 : f32
    %336 = vector.broadcast %cst_121 : f32 to vector<8x16xf32>
    %337 = arith.addf %336, %335 : vector<8x16xf32>
    %cst_122 = arith.constant 1.000000e+00 : f32
    %338 = vector.broadcast %cst_122 : f32 to vector<8x16xf32>
    %339 = arith.divf %338, %337 : vector<8x16xf32>
    %cst_123 = arith.constant 1.06140542 : f32
    %340 = vector.broadcast %cst_123 : f32 to vector<8x16xf32>
    %341 = arith.mulf %340, %339 : vector<8x16xf32>
    %cst_124 = arith.constant -1.45315206 : f32
    %342 = vector.broadcast %cst_124 : f32 to vector<8x16xf32>
    %343 = arith.addf %341, %342 : vector<8x16xf32>
    %344 = arith.mulf %343, %339 : vector<8x16xf32>
    %cst_125 = arith.constant 1.42141378 : f32
    %345 = vector.broadcast %cst_125 : f32 to vector<8x16xf32>
    %346 = arith.addf %344, %345 : vector<8x16xf32>
    %347 = arith.mulf %346, %339 : vector<8x16xf32>
    %cst_126 = arith.constant -0.284496725 : f32
    %348 = vector.broadcast %cst_126 : f32 to vector<8x16xf32>
    %349 = arith.addf %347, %348 : vector<8x16xf32>
    %350 = arith.mulf %349, %339 : vector<8x16xf32>
    %cst_127 = arith.constant 0.254829586 : f32
    %351 = vector.broadcast %cst_127 : f32 to vector<8x16xf32>
    %352 = arith.addf %350, %351 : vector<8x16xf32>
    %353 = arith.mulf %352, %339 : vector<8x16xf32>
    %cst_128 = arith.constant 0.000000e+00 : f32
    %354 = vector.broadcast %cst_128 : f32 to vector<8x16xf32>
    %355 = arith.subf %354, %333 : vector<8x16xf32>
    %356 = arith.mulf %355, %333 : vector<8x16xf32>
    %357 = math.exp %356 : vector<8x16xf32>
    %358 = arith.mulf %353, %357 : vector<8x16xf32>
    %cst_129 = arith.constant 1.000000e+00 : f32
    %359 = vector.broadcast %cst_129 : f32 to vector<8x16xf32>
    %360 = arith.subf %359, %358 : vector<8x16xf32>
    %cst_130 = arith.constant 0.000000e+00 : f32
    %361 = vector.broadcast %cst_130 : f32 to vector<8x16xf32>
    %362 = arith.cmpf olt, %332, %361 : vector<8x16xf32>
    %cst_131 = arith.constant 0.000000e+00 : f32
    %363 = vector.broadcast %cst_131 : f32 to vector<8x16xf32>
    %364 = arith.subf %363, %360 : vector<8x16xf32>
    %365 = arith.select %362, %364, %360 : vector<8x16xi1>, vector<8x16xf32>
    %cst_132 = arith.constant 1.000000e+00 : f32
    %366 = vector.broadcast %cst_132 : f32 to vector<8x16xf32>
    %367 = arith.addf %366, %365 : vector<8x16xf32>
    %368 = arith.mulf %330, %367 : vector<8x16xf32>
    %cst_133 = arith.constant dense<0.000000e+00> : vector<8x32xf32>
    %369 = tpu.matmul %368, %12, %cst_133 {dimension_numbers = #tpu.dot_dimension_numbers<[1], [0], [0], [1], [0, 0, 1, 1], [], []>} : vector<8x16xf32>, vector<16x32xf32>, vector<8x32xf32> -> vector<8x32xf32>
    %370 = vector.broadcast %13 : vector<1x32xf32> to vector<8x32xf32>
    %371 = arith.addf %369, %370 : vector<8x32xf32>
    %372 = arith.addf %325, %371 : vector<8x32xf32>
    %c0_134 = arith.constant 0 : index
    %c1_135 = arith.constant 1 : index
    %c0_136 = arith.constant 0 : index
    %373 = vector.load %arg16[%c0_134, %c1_135, %c0_136] : memref<8x2x32xf32, #tpu.memory_space<vmem>>, vector<8x1x32xf32>
    %374 = vector.shape_cast %373 : vector<8x1x32xf32> to vector<8x32xf32>
    %375 = vector.shape_cast %372 : vector<8x32xf32> to vector<8x1x32xf32>
    tpu.vector_store %arg16[%c0_134, %c1_135, %c0_136], %375 {strides = array<i32>} : memref<8x2x32xf32, #tpu.memory_space<vmem>>, vector<8x1x32xf32>,
    return
  }
  func.func @transform_0(%arg0: i32) -> (i32, i32, i32) {
    %c0_i32 = arith.constant 0 : i32
    %c0_i32_0 = arith.constant 0 : i32
    %c0_i32_1 = arith.constant 0 : i32
    return %c0_i32, %arg0, %c0_i32_0 : i32, i32, i32
  }
  func.func @transform_1(%arg0: i32) -> (i32, i32) {
    %c0_i32 = arith.constant 0 : i32
    %c0_i32_0 = arith.constant 0 : i32
    %c0_i32_1 = arith.constant 0 : i32
    return %c0_i32, %c0_i32_0 : i32, i32
  }
  func.func @transform_2(%arg0: i32) -> (i32, i32) {
    %c0_i32 = arith.constant 0 : i32
    %c0_i32_0 = arith.constant 0 : i32
    %c0_i32_1 = arith.constant 0 : i32
    return %c0_i32, %c0_i32_0 : i32, i32
  }
  func.func @transform_3(%arg0: i32) -> (i32, i32) {
    %c0_i32 = arith.constant 0 : i32
    %c0_i32_0 = arith.constant 0 : i32
    %c0_i32_1 = arith.constant 0 : i32
    return %c0_i32, %c0_i32_0 : i32, i32
  }
  func.func @transform_4(%arg0: i32) -> (i32, i32) {
    %c0_i32 = arith.constant 0 : i32
    %c0_i32_0 = arith.constant 0 : i32
    %c0_i32_1 = arith.constant 0 : i32
    return %c0_i32, %c0_i32_0 : i32, i32
  }
  func.func @transform_5(%arg0: i32) -> (i32, i32) {
    %c0_i32 = arith.constant 0 : i32
    %c0_i32_0 = arith.constant 0 : i32
    %c0_i32_1 = arith.constant 0 : i32
    return %c0_i32, %c0_i32_0 : i32, i32
  }
  func.func @transform_6(%arg0: i32) -> (i32, i32) {
    %c0_i32 = arith.constant 0 : i32
    %c0_i32_0 = arith.constant 0 : i32
    %c0_i32_1 = arith.constant 0 : i32
    return %c0_i32, %c0_i32_0 : i32, i32
  }
  func.func @transform_7(%arg0: i32) -> (i32, i32) {
    %c0_i32 = arith.constant 0 : i32
    %c0_i32_0 = arith.constant 0 : i32
    %c0_i32_1 = arith.constant 0 : i32
    return %c0_i32, %c0_i32_0 : i32, i32
  }
  func.func @transform_8(%arg0: i32) -> (i32, i32) {
    %c0_i32 = arith.constant 0 : i32
    %c0_i32_0 = arith.constant 0 : i32
    %c0_i32_1 = arith.constant 0 : i32
    return %c0_i32, %c0_i32_0 : i32, i32
  }
  func.func @transform_9(%arg0: i32) -> (i32, i32) {
    %c0_i32 = arith.constant 0 : i32
    %c0_i32_0 = arith.constant 0 : i32
    %c0_i32_1 = arith.constant 0 : i32
    return %c0_i32, %c0_i32_0 : i32, i32
  }
  func.func @transform_10(%arg0: i32) -> (i32, i32) {
    %c0_i32 = arith.constant 0 : i32
    %c0_i32_0 = arith.constant 0 : i32
    %c0_i32_1 = arith.constant 0 : i32
    return %c0_i32, %c0_i32_0 : i32, i32
  }
  func.func @transform_11(%arg0: i32) -> (i32, i32) {
    %c0_i32 = arith.constant 0 : i32
    %c0_i32_0 = arith.constant 0 : i32
    %c0_i32_1 = arith.constant 0 : i32
    return %c0_i32, %c0_i32_0 : i32, i32
  }
  func.func @transform_12(%arg0: i32) -> (i32, i32) {
    %c0_i32 = arith.constant 0 : i32
    %c0_i32_0 = arith.constant 0 : i32
    %c0_i32_1 = arith.constant 0 : i32
    return %c0_i32, %c0_i32_0 : i32, i32
  }
  func.func @transform_13(%arg0: i32) -> (i32, i32) {
    %c0_i32 = arith.constant 0 : i32
    %c0_i32_0 = arith.constant 0 : i32
    %c0_i32_1 = arith.constant 0 : i32
    return %c0_i32, %c0_i32_0 : i32, i32
  }
  func.func @transform_14(%arg0: i32) -> (i32, i32) {
    %c0_i32 = arith.constant 0 : i32
    %c0_i32_0 = arith.constant 0 : i32
    %c0_i32_1 = arith.constant 0 : i32
    return %c0_i32, %c0_i32_0 : i32, i32
  }
  func.func @transform_15(%arg0: i32) -> (i32, i32, i32) {
    %c0_i32 = arith.constant 0 : i32
    %c0_i32_0 = arith.constant 0 : i32
    %c0_i32_1 = arith.constant 0 : i32
    return %c0_i32, %arg0, %c0_i32_0 : i32, i32, i32
  }
}

</mosaic_0001>

<llo_original>
// kernel: tpu_custom_call.1
$region0: #{tpu_custom_call.1}
  #allocation0 [shape = 'u32[]', space=smem, size = 0x4, offset = 0x4, fixed_abs, tag = 'smem constant byte address 0x4 - core index']
  #allocation1 [shape = 'u32[144,128]{1,0:T(1,128)}', space=vmem, size = 0x12000, scoped, tag = 'internal scratch']
  %s0 = inlined_call_operand.vmem [shape: f32[8,2,16], index: 0, kind: input, shape index: {}]
  %s1 = inlined_call_operand.vmem [shape: f32[1,16], index: 1, kind: input, shape index: {}]
  %s2 = inlined_call_operand.vmem [shape: f32[1,16], index: 2, kind: input, shape index: {}]
  %s3 = inlined_call_operand.hbm [shape: f32[16,32], index: 3, kind: input, shape index: {}]
  %s4 = inlined_call_operand.hbm [shape: f32[8,32], index: 4, kind: input, shape index: {}]
  %s5 = inlined_call_operand.hbm [shape: f32[16,96], index: 5, kind: input, shape index: {}]
  %s6 = inlined_call_operand.hbm [shape: f32[8,96], index: 6, kind: input, shape index: {}]
  %s7 = inlined_call_operand.vmem [shape: f32[32,32], index: 7, kind: input, shape index: {}]
  %s8 = inlined_call_operand.hbm [shape: f32[1,32], index: 8, kind: input, shape index: {}]
  %s9 = inlined_call_operand.hbm [shape: f32[1,32], index: 9, kind: input, shape index: {}]
  %s10 = inlined_call_operand.vmem [shape: f32[1,32], index: 10, kind: input, shape index: {}]
  %s11 = inlined_call_operand.vmem [shape: f32[32,16], index: 11, kind: input, shape index: {}]
  %s12 = inlined_call_operand.vmem [shape: f32[1,16], index: 12, kind: input, shape index: {}]
  %s13 = inlined_call_operand.vmem [shape: f32[16,32], index: 13, kind: input, shape index: {}]
  %s14 = inlined_call_operand.vmem [shape: f32[1,32], index: 14, kind: input, shape index: {}]
  %s15 = inlined_call_operand.hbm [shape: f32[8,2,32], index: 15, kind: output, shape index: {}]
  %s16 = sld [smem:[#allocation0]]
  $region94: #{tpu_custom_call.1} parent=0
    _
  %s18 = ssub.s32 1, %s16
  %s19 = scalar_select 0, %s18, %s16
  $region1: #{tpu_custom_call.1} parent=0
    #allocation2 [shape = 'u8[8192]{0}', space=vmem, size = 0x2000, scoped, tag = 'input window, operand 3, single buffered']
    #allocation3 [shape = 's32[1]{0}', space=sflag, size = 0x4, scoped, tag = 'scoped memory for tpu_custom_call.1']
    #allocation4 [shape = 's32[1]{0}', space=sflag, size = 0x4, scoped, tag = 'scoped memory for tpu_custom_call.1']
    #allocation5 [shape = 'u8[4096]{0}', space=vmem, size = 0x1000, scoped, tag = 'input window, operand 4, single buffered']
    #allocation6 [shape = 's32[1]{0}', space=sflag, size = 0x4, scoped, tag = 'scoped memory for tpu_custom_call.1']
    #allocation7 [shape = 'u8[8192]{0}', space=vmem, size = 0x2000, scoped, tag = 'input window, operand 5, single buffered']
    #allocation8 [shape = 'u8[4096]{0}', space=vmem, size = 0x1000, scoped, tag = 'input window, operand 6, single buffered']
    #allocation9 [shape = 's32[1]{0}', space=sflag, size = 0x4, scoped, tag = 'scoped memory for tpu_custom_call.1']
    #allocation10 [shape = 'u8[512]{0}', space=vmem, size = 0x400, scoped, tag = 'input window, operand 8, single buffered']
    #allocation11 [shape = 'u8[512]{0}', space=vmem, size = 0x400, scoped, tag = 'input window, operand 9, single buffered']
    #allocation12 [shape = 's32[1]{0}', space=sflag, size = 0x4, scoped, tag = 'scoped memory for tpu_custom_call.1']
    #allocation13 [shape = 'u8[8192]{0}', space=vmem, size = 0x2000, scoped, tag = 'output window, operand 0, single buffered']
    %20 = vsyncpa [#allocation3], 0
    %21 = vsyncpa [#allocation6], 0
    %22 = vsyncpa [#allocation9], 0
    %23 = vsyncpa [#allocation12], 0
    %24 = vsyncpa [#allocation4], 0
    // Predicated region
    $region2: #{tpu_custom_call.1} parent=1 // pred_check
      _
    $region3: #{tpu_custom_call.1} parent=1 // pred_check_branch
      %26 = sbr.rel (0) target = $region5
    $region4: #{tpu_custom_call.1} parent=1 // pred_region
      _
    $region5: #{tpu_custom_call.1} parent=1 // pred_fallthru
      _
    // Predicated region
    $region6: #{tpu_custom_call.1} parent=1 // pred_check
      _
    $region7: #{tpu_custom_call.1} parent=1 // pred_check_branch
      %28 = sbr.rel (0) target = $region9
    $region8: #{tpu_custom_call.1} parent=1 // pred_region
      _
    $region9: #{tpu_custom_call.1} parent=1 // pred_fallthru
      _
    // Predicated region
    $region10: #{tpu_custom_call.1} parent=1 // pred_check
      _
    $region11: #{tpu_custom_call.1} parent=1 // pred_check_branch
      %30 = sbr.rel (0) target = $region13
    $region12: #{tpu_custom_call.1} parent=1 // pred_region
      _
    $region13: #{tpu_custom_call.1} parent=1 // pred_fallthru
      _
    // Predicated region
    $region14: #{tpu_custom_call.1} parent=1 // pred_check
      _
    $region15: #{tpu_custom_call.1} parent=1 // pred_check_branch
      %32 = sbr.rel (0) target = $region17
    $region16: #{tpu_custom_call.1} parent=1 // pred_region
      %s34 = ssub.s32 256, 256
      %35 = vsyncadd [#allocation3], %s34
      %s36 = sshll.u32 [#allocation2], 4
      %s37 = int_to_ptr.vmem [resolvable:$true] %s36
      %42 = dma.hbm_to_vmem [thread:$0]  %s3, 256, %s37, [#allocation3], 128, 128, 8
    $region17: #{tpu_custom_call.1} parent=1 // pred_fallthru
      _
    // Predicated region
    $region18: #{tpu_custom_call.1} parent=1 // pred_check
      _
    $region19: #{tpu_custom_call.1} parent=1 // pred_check_branch
      %44 = sbr.rel (0) target = $region21
    $region20: #{tpu_custom_call.1} parent=1 // pred_region
      %s46 = ssub.s32 128, 128
      %47 = vsyncadd [#allocation6], %s46
      %s49 = sshll.u32 [#allocation5], 4
      %s50 = int_to_ptr.vmem [resolvable:$true] %s49
      %52 = dma.hbm_to_vmem [thread:$0]  %s4, 128, %s50, [#allocation6]
    $region21: #{tpu_custom_call.1} parent=1 // pred_fallthru
      _
    // Predicated region
    $region22: #{tpu_custom_call.1} parent=1 // pred_check
      _
    $region23: #{tpu_custom_call.1} parent=1 // pred_check_branch
      %54 = sbr.rel (0) target = $region25
    $region24: #{tpu_custom_call.1} parent=1 // pred_region
      %s56 = ssub.s32 256, 256
      %57 = vsyncadd [#allocation6], %s56
      %s58 = sshll.u32 [#allocation7], 4
      %s59 = int_to_ptr.vmem [resolvable:$true] %s58
      %64 = dma.hbm_to_vmem [thread:$0]  %s5, 256, %s59, [#allocation6], 128, 128, 8
    $region25: #{tpu_custom_call.1} parent=1 // pred_fallthru
      _
    // Predicated region
    $region26: #{tpu_custom_call.1} parent=1 // pred_check
      _
    $region27: #{tpu_custom_call.1} parent=1 // pred_check_branch
      %66 = sbr.rel (0) target = $region29
    $region28: #{tpu_custom_call.1} parent=1 // pred_region
      %s68 = ssub.s32 128, 128
      %69 = vsyncadd [#allocation9], %s68
      %s71 = sshll.u32 [#allocation8], 4
      %s72 = int_to_ptr.vmem [resolvable:$true] %s71
      %74 = dma.hbm_to_vmem [thread:$0]  %s6, 128, %s72, [#allocation9]
    $region29: #{tpu_custom_call.1} parent=1 // pred_fallthru
      _
    // Predicated region
    $region30: #{tpu_custom_call.1} parent=1 // pred_check
      _
    $region31: #{tpu_custom_call.1} parent=1 // pred_check_branch
      %76 = sbr.rel (0) target = $region33
    $region32: #{tpu_custom_call.1} parent=1 // pred_region
      _
    $region33: #{tpu_custom_call.1} parent=1 // pred_fallthru
      _
    // Predicated region
    $region34: #{tpu_custom_call.1} parent=1 // pred_check
      _
    $region35: #{tpu_custom_call.1} parent=1 // pred_check_branch
      %78 = sbr.rel (0) target = $region37
    $region36: #{tpu_custom_call.1} parent=1 // pred_region
      %s80 = ssub.s32 16, 16
      %81 = vsyncadd [#allocation9], %s80
      %s83 = sshll.u32 [#allocation10], 4
      %s84 = int_to_ptr.vmem [resolvable:$true] %s83
      %86 = dma.hbm_to_vmem [thread:$0]  %s8, 16, %s84, [#allocation9]
    $region37: #{tpu_custom_call.1} parent=1 // pred_fallthru
      _
    // Predicated region
    $region38: #{tpu_custom_call.1} parent=1 // pred_check
      _
    $region39: #{tpu_custom_call.1} parent=1 // pred_check_branch
      %88 = sbr.rel (0) target = $region41
    $region40: #{tpu_custom_call.1} parent=1 // pred_region
      %s90 = ssub.s32 16, 16
      %91 = vsyncadd [#allocation12], %s90
      %s93 = sshll.u32 [#allocation11], 4
      %s94 = int_to_ptr.vmem [resolvable:$true] %s93
      %96 = dma.hbm_to_vmem [thread:$0]  %s9, 16, %s94, [#allocation12]
    $region41: #{tpu_custom_call.1} parent=1 // pred_fallthru
      _
    // Predicated region
    $region42: #{tpu_custom_call.1} parent=1 // pred_check
      _
    $region43: #{tpu_custom_call.1} parent=1 // pred_check_branch
      %98 = sbr.rel (0) target = $region45
    $region44: #{tpu_custom_call.1} parent=1 // pred_region
      _
    $region45: #{tpu_custom_call.1} parent=1 // pred_fallthru
      _
    // Predicated region
    $region46: #{tpu_custom_call.1} parent=1 // pred_check
      _
    $region47: #{tpu_custom_call.1} parent=1 // pred_check_branch
      %100 = sbr.rel (0) target = $region49
    $region48: #{tpu_custom_call.1} parent=1 // pred_region
      _
    $region49: #{tpu_custom_call.1} parent=1 // pred_fallthru
      _
    // Predicated region
    $region50: #{tpu_custom_call.1} parent=1 // pred_check
      _
    $region51: #{tpu_custom_call.1} parent=1 // pred_check_branch
      %102 = sbr.rel (0) target = $region53
    $region52: #{tpu_custom_call.1} parent=1 // pred_region
      _
    $region53: #{tpu_custom_call.1} parent=1 // pred_fallthru
      _
    // Predicated region
    $region54: #{tpu_custom_call.1} parent=1 // pred_check
      _
    $region55: #{tpu_custom_call.1} parent=1 // pred_check_branch
      %104 = sbr.rel (0) target = $region57
    $region56: #{tpu_custom_call.1} parent=1 // pred_region
      _
    $region57: #{tpu_custom_call.1} parent=1 // pred_fallthru
      _
    // Predicated region
    $region58: #{tpu_custom_call.1} parent=1 // pred_check
      _
    $region59: #{tpu_custom_call.1} parent=1 // pred_check_branch
      %106 = sbr.rel (0) target = $region61
    $region60: #{tpu_custom_call.1} parent=1 // pred_region
      _
    $region61: #{tpu_custom_call.1} parent=1 // pred_fallthru
      _
    // Predicated region
    $region62: #{tpu_custom_call.1} parent=1 // pred_check
      _
    $region63: #{tpu_custom_call.1} parent=1 // pred_check_branch
      %108 = sbr.rel (0) target = $region65
    $region64: #{tpu_custom_call.1} parent=1 // pred_region
      %109 = dma.done [#allocation3], 256
    $region65: #{tpu_custom_call.1} parent=1 // pred_fallthru
      _
    // Predicated region
    $region66: #{tpu_custom_call.1} parent=1 // pred_check
      _
    $region67: #{tpu_custom_call.1} parent=1 // pred_check_branch
      %111 = sbr.rel (0) target = $region69
    $region68: #{tpu_custom_call.1} parent=1 // pred_region
      %112 = dma.done [#allocation6], 128
    $region69: #{tpu_custom_call.1} parent=1 // pred_fallthru
      _
    // Predicated region
    $region70: #{tpu_custom_call.1} parent=1 // pred_check
      _
    $region71: #{tpu_custom_call.1} parent=1 // pred_check_branch
      %114 = sbr.rel (0) target = $region73
    $region72: #{tpu_custom_call.1} parent=1 // pred_region
      %115 = dma.done [#allocation6], 256
    $region73: #{tpu_custom_call.1} parent=1 // pred_fallthru
      _
    // Predicated region
    $region74: #{tpu_custom_call.1} parent=1 // pred_check
      _
    $region75: #{tpu_custom_call.1} parent=1 // pred_check_branch
      %117 = sbr.rel (0) target = $region77
    $region76: #{tpu_custom_call.1} parent=1 // pred_region
      %118 = dma.done [#allocation9], 128
    $region77: #{tpu_custom_call.1} parent=1 // pred_fallthru
      _
    // Predicated region
    $region78: #{tpu_custom_call.1} parent=1 // pred_check
      _
    $region79: #{tpu_custom_call.1} parent=1 // pred_check_branch
      %120 = sbr.rel (0) target = $region81
    $region80: #{tpu_custom_call.1} parent=1 // pred_region
      %121 = dma.done [#allocation9], 16
    $region81: #{tpu_custom_call.1} parent=1 // pred_fallthru
      _
    // Predicated region
    $region82: #{tpu_custom_call.1} parent=1 // pred_check
      _
    $region83: #{tpu_custom_call.1} parent=1 // pred_check_branch
      %123 = sbr.rel (0) target = $region85
    $region84: #{tpu_custom_call.1} parent=1 // pred_region
      %124 = dma.done [#allocation12], 16
    $region85: #{tpu_custom_call.1} parent=1 // pred_fallthru
      _
    %v125 = vld [vmem:[%s1] sm:$0x1]
    %v126 = vld [vmem:[%s2] sm:$0x1]
    %v127 = vld [vmem:[#allocation2] sm:$0xff]
    %v128 = vld [vmem:[#allocation2 + $0x8] sm:$0xff]
    %v129 = vld [vmem:[#allocation5] sm:$0xff]
    %v130 = vld [vmem:[#allocation7] sm:$0xff]
    %v131 = vld [vmem:[#allocation7 + $0x8] sm:$0xff]
    %v132 = vld [vmem:[#allocation8] sm:$0xff]
    %v133 = vld [vmem:[%s7] sm:$0xff]
    %v134 = vld [vmem:[%s7 + $0x8] sm:$0xff]
    %v135 = vld [vmem:[%s7 + $0x10] sm:$0xff]
    %v136 = vld [vmem:[%s7 + $0x18] sm:$0xff]
    %v137 = vld [vmem:[#allocation10] sm:$0x1]
    %v138 = vld [vmem:[#allocation11] sm:$0x1]
    %v139 = vld [vmem:[%s10] sm:$0x1]
    %v140 = vld [vmem:[%s11] sm:$0xff]
    %v141 = vld [vmem:[%s11 + $0x8] sm:$0xff]
    %v142 = vld [vmem:[%s11 + $0x10] sm:$0xff]
    %v143 = vld [vmem:[%s11 + $0x18] sm:$0xff]
    %v144 = vld [vmem:[%s12] sm:$0x1]
    %v145 = vld [vmem:[%s13] sm:$0xff]
    %v146 = vld [vmem:[%s13 + $0x8] sm:$0xff]
    %v147 = vld [vmem:[%s14] sm:$0x1]
    %v148 = vld [vmem:[%s0] sm:$0x1]
    %v149 = vld [vmem:[%s0 + $0x2] sm:$0x1]
    %v150 = vld [vmem:[%s0 + $0x4] sm:$0x1]
    %v151 = vld [vmem:[%s0 + $0x6] sm:$0x1]
    %v152 = vld [vmem:[%s0 + $0x8] sm:$0x1]
    %v153 = vld [vmem:[%s0 + $0xa] sm:$0x1]
    %v154 = vld [vmem:[%s0 + $0xc] sm:$0x1]
    %v155 = vld [vmem:[%s0 + $0xe] sm:$0x1]
    %v164 = vrot.slane %v149, 7
    %vm165 = vcmask 1041409
    %v166 = vsel %vm165, %v164, %v148
    %v167 = vrot.slane %v150, 6
    %vm168 = vcmask 1042434
    %v169 = vsel %vm168, %v167, %v166
    %v170 = vrot.slane %v151, 5
    %vm171 = vcmask 1043459
    %v172 = vsel %vm171, %v170, %v169
    %v173 = vrot.slane %v152, 4
    %vm174 = vcmask 1044484
    %v175 = vsel %vm174, %v173, %v172
    %v176 = vrot.slane %v153, 3
    %vm177 = vcmask 1045509
    %v178 = vsel %vm177, %v176, %v175
    %v179 = vrot.slane %v154, 2
    %vm180 = vcmask 1046534
    %v181 = vsel %vm180, %v179, %v178
    %v182 = vrot.slane %v155, 1
    %vm183 = vcmask 1047559
    %v184 = vsel %vm183, %v182, %v181
    %vm186 = vcmask 130048
    %v187 = vsel %vm186, %v184, 0.0
    %188 = vadd.xlane.f32.xlu0 %v187
    %v189 = vpop.xlane.xlu0 %188
    %v190 = vrcp.pop 16.0
    %v191 = vmul.f32 %v189, %v190
    %v193 = vrot.slane %v191, 1
    %v194 = vrot.slane %v191, 2
    %v195 = vrot.slane %v191, 3
    %v196 = vrot.slane %v191, 4
    %v197 = vrot.slane %v191, 5
    %v198 = vrot.slane %v191, 6
    %v199 = vrot.slane %v191, 7
    %v208 = vsub.f32 %v148, %v191
    %v209 = vsub.f32 %v149, %v193
    %v210 = vsub.f32 %v150, %v194
    %v211 = vsub.f32 %v151, %v195
    %v212 = vsub.f32 %v152, %v196
    %v213 = vsub.f32 %v153, %v197
    %v214 = vsub.f32 %v154, %v198
    %v215 = vsub.f32 %v155, %v199
    %v216 = vmul.f32 %v208, %v208
    %v217 = vmul.f32 %v209, %v209
    %v218 = vmul.f32 %v210, %v210
    %v219 = vmul.f32 %v211, %v211
    %v220 = vmul.f32 %v212, %v212
    %v221 = vmul.f32 %v213, %v213
    %v222 = vmul.f32 %v214, %v214
    %v223 = vmul.f32 %v215, %v215
    %v232 = vrot.slane %v217, 7
    %v233 = vsel %vm165, %v232, %v216
    %v234 = vrot.slane %v218, 6
    %v235 = vsel %vm168, %v234, %v233
    %v236 = vrot.slane %v219, 5
    %v237 = vsel %vm171, %v236, %v235
    %v238 = vrot.slane %v220, 4
    %v239 = vsel %vm174, %v238, %v237
    %v240 = vrot.slane %v221, 3
    %v241 = vsel %vm177, %v240, %v239
    %v242 = vrot.slane %v222, 2
    %v243 = vsel %vm180, %v242, %v241
    %v244 = vrot.slane %v223, 1
    %v245 = vsel %vm183, %v244, %v243
    %v247 = vsel %vm186, %v245, 0.0
    %248 = vadd.xlane.f32.xlu0 %v247
    %v249 = vpop.xlane.xlu0 %248
    %v250 = vmul.f32 %v249, %v190
    %v251 = vadd.f32 %v250, 1e-05
    %v252 = vrsqrt.pop %v251
    %v254 = vrot.slane %v252, 1
    %v255 = vrot.slane %v252, 2
    %v256 = vrot.slane %v252, 3
    %v257 = vrot.slane %v252, 4
    %v258 = vrot.slane %v252, 5
    %v259 = vrot.slane %v252, 6
    %v260 = vrot.slane %v252, 7
    %v269 = vmul.f32 %v208, %v252
    %v270 = vmul.f32 %v209, %v254
    %v271 = vmul.f32 %v210, %v255
    %v272 = vmul.f32 %v211, %v256
    %v273 = vmul.f32 %v212, %v257
    %v274 = vmul.f32 %v213, %v258
    %v275 = vmul.f32 %v214, %v259
    %v276 = vmul.f32 %v215, %v260
    %v278 = vlaneseq
    %v279 = vshrl.u32 %v278, 7
    %v280 = vsub.s32 0, %v279
    %v281 = vrot.slane %v125, %v280
    %v283 = vmul.f32 %v269, %v281
    %v284 = vmul.f32 %v270, %v281
    %v285 = vmul.f32 %v271, %v281
    %v286 = vmul.f32 %v272, %v281
    %v287 = vmul.f32 %v273, %v281
    %v288 = vmul.f32 %v274, %v281
    %v289 = vmul.f32 %v275, %v281
    %v290 = vmul.f32 %v276, %v281
    %v292 = vlaneseq
    %v293 = vshrl.u32 %v292, 7
    %v294 = vsub.s32 0, %v293
    %v295 = vrot.slane %v126, %v294
    %v297 = vadd.f32 %v283, %v295
    %v298 = vadd.f32 %v284, %v295
    %v299 = vadd.f32 %v285, %v295
    %v300 = vadd.f32 %v286, %v295
    %v301 = vadd.f32 %v287, %v295
    %v302 = vadd.f32 %v288, %v295
    %v303 = vadd.f32 %v289, %v295
    %v304 = vadd.f32 %v290, %v295
    %v313 = vrot.slane %v298, 7
    %v314 = vsel %vm165, %v313, %v297
    %v315 = vrot.slane %v299, 6
    %v316 = vsel %vm168, %v315, %v314
    %v317 = vrot.slane %v300, 5
    %v318 = vsel %vm171, %v317, %v316
    %v319 = vrot.slane %v301, 4
    %v320 = vsel %vm174, %v319, %v318
    %v321 = vrot.slane %v302, 3
    %v322 = vsel %vm177, %v321, %v320
    %v323 = vrot.slane %v303, 2
    %v324 = vsel %vm180, %v323, %v322
    %v325 = vrot.slane %v304, 1
    %v326 = vsel %vm183, %v325, %v324
    %v327 = vsel %vm186, %v326, 0
    %329 = vmatprep.subr.mxu0 0.0
    %330 = vmatpush1.msra.mxu0 %v127
    %331 = vmatprep.subr.mxu0 0.0
    %332 = vmatpush1.msra.mxu0 %v128
    %333 = vmatprep.subr.mxu0 0.0
    %334 = vmatpush1.msra.mxu0 0.0
    %335 = vmatprep.subr.mxu0 0.0
    %336 = vmatpush1.msra.mxu0 0.0
    %337 = vmatprep.subr.mxu0 0.0
    %338 = vmatpush1.msra.mxu0 0.0
    %339 = vmatprep.subr.mxu0 0.0
    %340 = vmatpush1.msra.mxu0 0.0
    %341 = vmatprep.subr.mxu0 0.0
    %342 = vmatpush1.msra.mxu0 0.0
    %343 = vmatprep.subr.mxu0 0.0
    %344 = vmatpush1.msra.mxu0 0.0
    %345 = vmatprep.subr.mxu0 0.0
    %346 = vmatpush1.msra.mxu0 0.0
    %347 = vmatprep.subr.mxu0 0.0
    %348 = vmatpush1.msra.mxu0 0.0
    %349 = vmatprep.subr.mxu0 0.0
    %350 = vmatpush1.msra.mxu0 0.0
    %351 = vmatprep.subr.mxu0 0.0
    %352 = vmatpush1.msra.mxu0 0.0
    %353 = vmatprep.subr.mxu0 0.0
    %354 = vmatpush1.msra.mxu0 0.0
    %355 = vmatprep.subr.mxu0 0.0
    %356 = vmatpush1.msra.mxu0 0.0
    %357 = vmatprep.subr.mxu0 0.0
    %358 = vmatpush1.msra.mxu0 0.0
    %359 = vmatprep.subr.mxu0 0.0
    %360 = vmatpush1.msra.mxu0 0.0
    %361 = vmatprep.subr.mxu0 0.0
    %362 = vmatpush1.msra.mxu0 0.0
    %363 = vmatprep.subr.mxu0 0.0
    %364 = vmatpush1.msra.mxu0 0.0
    %365 = vmatprep.subr.mxu0 0.0
    %366 = vmatpush1.msra.mxu0 0.0
    %367 = vmatprep.subr.mxu0 0.0
    %368 = vmatpush1.msra.mxu0 0.0
    %369 = vmatprep.subr.mxu0 0.0
    %370 = vmatpush1.msra.mxu0 0.0
    %371 = vmatprep.subr.mxu0 0.0
    %372 = vmatpush1.msra.mxu0 0.0
    %373 = vmatprep.subr.mxu0 0.0
    %374 = vmatpush1.msra.mxu0 0.0
    %375 = vmatprep.subr.mxu0 0.0
    %376 = vmatpush1.msra.mxu0 0.0
    %377 = vmatprep.subr.mxu0 0.0
    %378 = vmatpush1.msra.mxu0 0.0
    %379 = vmatprep.subr.mxu0 0.0
    %380 = vmatpush1.msra.mxu0 0.0
    %381 = vmatprep.subr.mxu0 0.0
    %382 = vmatpush1.msra.mxu0 0.0
    %383 = vmatprep.subr.mxu0 0.0
    %384 = vmatpush1.msra.mxu0 0.0
    %385 = vmatprep.subr.mxu0 0.0
    %386 = vmatpush1.msra.mxu0 0.0
    %387 = vmatprep.subr.mxu0 0.0
    %388 = vmatpush1.msra.mxu0 0.0
    %389 = vmatprep.subr.mxu0 0.0
    %390 = vmatpush1.msra.mxu0 0.0
    %391 = vmatprep.subr.mxu0 0.0
    %392 = vmatpush1.msra.mxu0 0.0
    %393 = vmatprep.mubr.f32.mxu0 0.0
    %394 = vmatmul.mubr.f32.gmra.mrb[0].mxu0 %v327
    %v395 = vpop.f32.mrb[0].mxu0
    %v396 = vadd.f32 %v129, %v395
    %v397 = vpop.f32.mrb[0].mxu0
    %398 = vdwg.mxu0
    %399 = vmatprep.subr.mxu0 0.0
    %400 = vmatpush1.msra.mxu0 %v130
    %401 = vmatprep.subr.mxu0 0.0
    %402 = vmatpush1.msra.mxu0 %v131
    %403 = vmatprep.subr.mxu0 0.0
    %404 = vmatpush1.msra.mxu0 0.0
    %405 = vmatprep.subr.mxu0 0.0
    %406 = vmatpush1.msra.mxu0 0.0
    %407 = vmatprep.subr.mxu0 0.0
    %408 = vmatpush1.msra.mxu0 0.0
    %409 = vmatprep.subr.mxu0 0.0
    %410 = vmatpush1.msra.mxu0 0.0
    %411 = vmatprep.subr.mxu0 0.0
    %412 = vmatpush1.msra.mxu0 0.0
    %413 = vmatprep.subr.mxu0 0.0
    %414 = vmatpush1.msra.mxu0 0.0
    %415 = vmatprep.subr.mxu0 0.0
    %416 = vmatpush1.msra.mxu0 0.0
    %417 = vmatprep.subr.mxu0 0.0
    %418 = vmatpush1.msra.mxu0 0.0
    %419 = vmatprep.subr.mxu0 0.0
    %420 = vmatpush1.msra.mxu0 0.0
    %421 = vmatprep.subr.mxu0 0.0
    %422 = vmatpush1.msra.mxu0 0.0
    %423 = vmatprep.subr.mxu0 0.0
    %424 = vmatpush1.msra.mxu0 0.0
    %425 = vmatprep.subr.mxu0 0.0
    %426 = vmatpush1.msra.mxu0 0.0
    %427 = vmatprep.subr.mxu0 0.0
    %428 = vmatpush1.msra.mxu0 0.0
    %429 = vmatprep.subr.mxu0 0.0
    %430 = vmatpush1.msra.mxu0 0.0
    %431 = vmatprep.subr.mxu0 0.0
    %432 = vmatpush1.msra.mxu0 0.0
    %433 = vmatprep.subr.mxu0 0.0
    %434 = vmatpush1.msra.mxu0 0.0
    %435 = vmatprep.subr.mxu0 0.0
    %436 = vmatpush1.msra.mxu0 0.0
    %437 = vmatprep.subr.mxu0 0.0
    %438 = vmatpush1.msra.mxu0 0.0
    %439 = vmatprep.subr.mxu0 0.0
    %440 = vmatpush1.msra.mxu0 0.0
    %441 = vmatprep.subr.mxu0 0.0
    %442 = vmatpush1.msra.mxu0 0.0
    %443 = vmatprep.subr.mxu0 0.0
    %444 = vmatpush1.msra.mxu0 0.0
    %445 = vmatprep.subr.mxu0 0.0
    %446 = vmatpush1.msra.mxu0 0.0
    %447 = vmatprep.subr.mxu0 0.0
    %448 = vmatpush1.msra.mxu0 0.0
    %449 = vmatprep.subr.mxu0 0.0
    %450 = vmatpush1.msra.mxu0 0.0
    %451 = vmatprep.subr.mxu0 0.0
    %452 = vmatpush1.msra.mxu0 0.0
    %453 = vmatprep.subr.mxu0 0.0
    %454 = vmatpush1.msra.mxu0 0.0
    %455 = vmatprep.subr.mxu0 0.0
    %456 = vmatpush1.msra.mxu0 0.0
    %457 = vmatprep.subr.mxu0 0.0
    %458 = vmatpush1.msra.mxu0 0.0
    %459 = vmatprep.subr.mxu0 0.0
    %460 = vmatpush1.msra.mxu0 0.0
    %461 = vmatprep.subr.mxu0 0.0
    %462 = vmatpush1.msra.mxu0 0.0
    %463 = vmatprep.mubr.f32.mxu0 0.0
    %464 = vmatmul.mubr.f32.gmra.mrb[0].mxu0 %v327
    %v465 = vpop.f32.mrb[0].mxu0
    %v466 = vadd.f32 %v132, %v465
    %v467 = vpop.f32.mrb[0].mxu0
    %468 = vdwg.mxu0
    %470 = vrot.lane.b32.xlu0 %v466, 96
    %v471 = vpop.permute.xlu0 %470
    %vm472 = vcmask 64512
    %v473 = vsel %vm472, %v466, 0
    %v475 = vsel %vm472, %v471, 0
    %477 = vmatprep.subr.mxu0 0.0
    %478 = vmatpush1.xpose.msra.mxu0 %v475
    %479 = vmatprep.subr.mxu0 0.0
    %480 = vmatpush1.xpose.msra.mxu0 0.0
    %481 = vmatprep.subr.mxu0 0.0
    %482 = vmatpush1.xpose.msra.mxu0 0.0
    %483 = vmatprep.subr.mxu0 0.0
    %484 = vmatpush1.xpose.msra.mxu0 0.0
    %485 = vmatprep.subr.mxu0 0.0
    %486 = vmatpush1.xpose.msra.mxu0 0.0
    %487 = vmatprep.subr.mxu0 0.0
    %488 = vmatpush1.xpose.msra.mxu0 0.0
    %489 = vmatprep.subr.mxu0 0.0
    %490 = vmatpush1.xpose.msra.mxu0 0.0
    %491 = vmatprep.subr.mxu0 0.0
    %492 = vmatpush1.xpose.msra.mxu0 0.0
    %493 = vmatprep.subr.mxu0 0.0
    %494 = vmatpush1.xpose.msra.mxu0 0.0
    %495 = vmatprep.subr.mxu0 0.0
    %496 = vmatpush1.xpose.msra.mxu0 0.0
    %497 = vmatprep.subr.mxu0 0.0
    %498 = vmatpush1.xpose.msra.mxu0 0.0
    %499 = vmatprep.subr.mxu0 0.0
    %500 = vmatpush1.xpose.msra.mxu0 0.0
    %501 = vmatprep.subr.mxu0 0.0
    %502 = vmatpush1.xpose.msra.mxu0 0.0
    %503 = vmatprep.subr.mxu0 0.0
    %504 = vmatpush1.xpose.msra.mxu0 0.0
    %505 = vmatprep.subr.mxu0 0.0
    %506 = vmatpush1.xpose.msra.mxu0 0.0
    %507 = vmatprep.subr.mxu0 0.0
    %508 = vmatpush1.xpose.msra.mxu0 0.0
    %509 = vmatprep.subr.mxu0 0.0
    %510 = vmatpush1.xpose.msra.mxu0 0.0
    %511 = vmatprep.subr.mxu0 0.0
    %512 = vmatpush1.xpose.msra.mxu0 0.0
    %513 = vmatprep.subr.mxu0 0.0
    %514 = vmatpush1.xpose.msra.mxu0 0.0
    %515 = vmatprep.subr.mxu0 0.0
    %516 = vmatpush1.xpose.msra.mxu0 0.0
    %517 = vmatprep.subr.mxu0 0.0
    %518 = vmatpush1.xpose.msra.mxu0 0.0
    %519 = vmatprep.subr.mxu0 0.0
    %520 = vmatpush1.xpose.msra.mxu0 0.0
    %521 = vmatprep.subr.mxu0 0.0
    %522 = vmatpush1.xpose.msra.mxu0 0.0
    %523 = vmatprep.subr.mxu0 0.0
    %524 = vmatpush1.xpose.msra.mxu0 0.0
    %525 = vmatprep.subr.mxu0 0.0
    %526 = vmatpush1.xpose.msra.mxu0 0.0
    %527 = vmatprep.subr.mxu0 0.0
    %528 = vmatpush1.xpose.msra.mxu0 0.0
    %529 = vmatprep.subr.mxu0 0.0
    %530 = vmatpush1.xpose.msra.mxu0 0.0
    %531 = vmatprep.subr.mxu0 0.0
    %532 = vmatpush1.xpose.msra.mxu0 0.0
    %533 = vmatprep.subr.mxu0 0.0
    %534 = vmatpush1.xpose.msra.mxu0 0.0
    %535 = vmatprep.subr.mxu0 0.0
    %536 = vmatpush1.xpose.msra.mxu0 0.0
    %537 = vmatprep.subr.mxu0 0.0
    %538 = vmatpush1.xpose.msra.mxu0 0.0
    %539 = vmatprep.subr.mxu0 0.0
    %540 = vmatpush1.xpose.msra.mxu0 0.0
    %541 = vmatprep.mubr.f32.mxu0 0.0
    %542 = vmatmul.mubr.f32.gmra.mrb[0].mxu0 %v473
    %v543 = vpop.f32.mrb[0].mxu0
    %v544 = vadd.f32 0.0, %v543
    %v545 = vpop.f32.mrb[0].mxu0
    %546 = vdwg.mxu0
    %v547 = vsel %vm472, %v544, -inf
    %548 = vmax.xlane.f32.xlu0 %v547
    %v549 = vpop.xlane.xlu0 %548
    %v550 = vsub.f32 %v544, %v549
    %v551 = vmul.f32 %v550, 1.442695
    %v552 = vpow.pop %v551
    %v553 = vsel %vm472, %v552, 0.0
    %554 = vadd.xlane.f32.xlu0 %v553
    %v555 = vpop.xlane.xlu0 %554
    %556 = vrot.lane.b32.xlu0 %v466, 64
    %v557 = vpop.permute.xlu0 %556
    %v560 = vsel %vm472, %v552, 0
    %562 = vmatprep.subr.mxu0 0.0
    %563 = vmatpush1.msra.mxu0 %v557
    %564 = vmatprep.subr.mxu0 0.0
    %565 = vmatpush1.msra.mxu0 0.0
    %566 = vmatprep.subr.mxu0 0.0
    %567 = vmatpush1.msra.mxu0 0.0
    %568 = vmatprep.subr.mxu0 0.0
    %569 = vmatpush1.msra.mxu0 0.0
    %570 = vmatprep.subr.mxu0 0.0
    %571 = vmatpush1.msra.mxu0 0.0
    %572 = vmatprep.subr.mxu0 0.0
    %573 = vmatpush1.msra.mxu0 0.0
    %574 = vmatprep.subr.mxu0 0.0
    %575 = vmatpush1.msra.mxu0 0.0
    %576 = vmatprep.subr.mxu0 0.0
    %577 = vmatpush1.msra.mxu0 0.0
    %578 = vmatprep.subr.mxu0 0.0
    %579 = vmatpush1.msra.mxu0 0.0
    %580 = vmatprep.subr.mxu0 0.0
    %581 = vmatpush1.msra.mxu0 0.0
    %582 = vmatprep.subr.mxu0 0.0
    %583 = vmatpush1.msra.mxu0 0.0
    %584 = vmatprep.subr.mxu0 0.0
    %585 = vmatpush1.msra.mxu0 0.0
    %586 = vmatprep.subr.mxu0 0.0
    %587 = vmatpush1.msra.mxu0 0.0
    %588 = vmatprep.subr.mxu0 0.0
    %589 = vmatpush1.msra.mxu0 0.0
    %590 = vmatprep.subr.mxu0 0.0
    %591 = vmatpush1.msra.mxu0 0.0
    %592 = vmatprep.subr.mxu0 0.0
    %593 = vmatpush1.msra.mxu0 0.0
    %594 = vmatprep.subr.mxu0 0.0
    %595 = vmatpush1.msra.mxu0 0.0
    %596 = vmatprep.subr.mxu0 0.0
    %597 = vmatpush1.msra.mxu0 0.0
    %598 = vmatprep.subr.mxu0 0.0
    %599 = vmatpush1.msra.mxu0 0.0
    %600 = vmatprep.subr.mxu0 0.0
    %601 = vmatpush1.msra.mxu0 0.0
    %602 = vmatprep.subr.mxu0 0.0
    %603 = vmatpush1.msra.mxu0 0.0
    %604 = vmatprep.subr.mxu0 0.0
    %605 = vmatpush1.msra.mxu0 0.0
    %606 = vmatprep.subr.mxu0 0.0
    %607 = vmatpush1.msra.mxu0 0.0
    %608 = vmatprep.subr.mxu0 0.0
    %609 = vmatpush1.msra.mxu0 0.0
    %610 = vmatprep.subr.mxu0 0.0
    %611 = vmatpush1.msra.mxu0 0.0
    %612 = vmatprep.subr.mxu0 0.0
    %613 = vmatpush1.msra.mxu0 0.0
    %614 = vmatprep.subr.mxu0 0.0
    %615 = vmatpush1.msra.mxu0 0.0
    %616 = vmatprep.subr.mxu0 0.0
    %617 = vmatpush1.msra.mxu0 0.0
    %618 = vmatprep.subr.mxu0 0.0
    %619 = vmatpush1.msra.mxu0 0.0
    %620 = vmatprep.subr.mxu0 0.0
    %621 = vmatpush1.msra.mxu0 0.0
    %622 = vmatprep.subr.mxu0 0.0
    %623 = vmatpush1.msra.mxu0 0.0
    %624 = vmatprep.subr.mxu0 0.0
    %625 = vmatpush1.msra.mxu0 0.0
    %626 = vmatprep.mubr.f32.mxu0 0.0
    %627 = vmatmul.mubr.f32.gmra.mrb[0].mxu0 %v560
    %v628 = vpop.f32.mrb[0].mxu0
    %v629 = vadd.f32 0.0, %v628
    %v630 = vpop.f32.mrb[0].mxu0
    %631 = vdwg.mxu0
    %v632 = vrcp.pop %v555
    %v633 = vmul.f32 %v555, %v632
    %v634 = vsub.f32 2.0, %v633
    %v635 = vmul.f32 %v632, %v634
    %v636 = vmul.f32 %v629, %v635
    %637 = vrot.lane.b32.xlu0 %v466, 120
    %v638 = vpop.permute.xlu0 %637
    %639 = vrot.lane.b32.xlu0 %v466, 88
    %v640 = vpop.permute.xlu0 %639
    %v641 = vsel %vm472, %v638, 0
    %v643 = vsel %vm472, %v640, 0
    %645 = vmatprep.subr.mxu0 0.0
    %646 = vmatpush1.xpose.msra.mxu0 %v643
    %647 = vmatprep.subr.mxu0 0.0
    %648 = vmatpush1.xpose.msra.mxu0 0.0
    %649 = vmatprep.subr.mxu0 0.0
    %650 = vmatpush1.xpose.msra.mxu0 0.0
    %651 = vmatprep.subr.mxu0 0.0
    %652 = vmatpush1.xpose.msra.mxu0 0.0
    %653 = vmatprep.subr.mxu0 0.0
    %654 = vmatpush1.xpose.msra.mxu0 0.0
    %655 = vmatprep.subr.mxu0 0.0
    %656 = vmatpush1.xpose.msra.mxu0 0.0
    %657 = vmatprep.subr.mxu0 0.0
    %658 = vmatpush1.xpose.msra.mxu0 0.0
    %659 = vmatprep.subr.mxu0 0.0
    %660 = vmatpush1.xpose.msra.mxu0 0.0
    %661 = vmatprep.subr.mxu0 0.0
    %662 = vmatpush1.xpose.msra.mxu0 0.0
    %663 = vmatprep.subr.mxu0 0.0
    %664 = vmatpush1.xpose.msra.mxu0 0.0
    %665 = vmatprep.subr.mxu0 0.0
    %666 = vmatpush1.xpose.msra.mxu0 0.0
    %667 = vmatprep.subr.mxu0 0.0
    %668 = vmatpush1.xpose.msra.mxu0 0.0
    %669 = vmatprep.subr.mxu0 0.0
    %670 = vmatpush1.xpose.msra.mxu0 0.0
    %671 = vmatprep.subr.mxu0 0.0
    %672 = vmatpush1.xpose.msra.mxu0 0.0
    %673 = vmatprep.subr.mxu0 0.0
    %674 = vmatpush1.xpose.msra.mxu0 0.0
    %675 = vmatprep.subr.mxu0 0.0
    %676 = vmatpush1.xpose.msra.mxu0 0.0
    %677 = vmatprep.subr.mxu0 0.0
    %678 = vmatpush1.xpose.msra.mxu0 0.0
    %679 = vmatprep.subr.mxu0 0.0
    %680 = vmatpush1.xpose.msra.mxu0 0.0
    %681 = vmatprep.subr.mxu0 0.0
    %682 = vmatpush1.xpose.msra.mxu0 0.0
    %683 = vmatprep.subr.mxu0 0.0
    %684 = vmatpush1.xpose.msra.mxu0 0.0
    %685 = vmatprep.subr.mxu0 0.0
    %686 = vmatpush1.xpose.msra.mxu0 0.0
    %687 = vmatprep.subr.mxu0 0.0
    %688 = vmatpush1.xpose.msra.mxu0 0.0
    %689 = vmatprep.subr.mxu0 0.0
    %690 = vmatpush1.xpose.msra.mxu0 0.0
    %691 = vmatprep.subr.mxu0 0.0
    %692 = vmatpush1.xpose.msra.mxu0 0.0
    %693 = vmatprep.subr.mxu0 0.0
    %694 = vmatpush1.xpose.msra.mxu0 0.0
    %695 = vmatprep.subr.mxu0 0.0
    %696 = vmatpush1.xpose.msra.mxu0 0.0
    %697 = vmatprep.subr.mxu0 0.0
    %698 = vmatpush1.xpose.msra.mxu0 0.0
    %699 = vmatprep.subr.mxu0 0.0
    %700 = vmatpush1.xpose.msra.mxu0 0.0
    %701 = vmatprep.subr.mxu0 0.0
    %702 = vmatpush1.xpose.msra.mxu0 0.0
    %703 = vmatprep.subr.mxu0 0.0
    %704 = vmatpush1.xpose.msra.mxu0 0.0
    %705 = vmatprep.subr.mxu0 0.0
    %706 = vmatpush1.xpose.msra.mxu0 0.0
    %707 = vmatprep.subr.mxu0 0.0
    %708 = vmatpush1.xpose.msra.mxu0 0.0
    %709 = vmatprep.mubr.f32.mxu0 0.0
    %710 = vmatmul.mubr.f32.gmra.mrb[0].mxu0 %v641
    %v711 = vpop.f32.mrb[0].mxu0
    %v712 = vadd.f32 0.0, %v711
    %v713 = vpop.f32.mrb[0].mxu0
    %714 = vdwg.mxu0
    %v715 = vsel %vm472, %v712, -inf
    %716 = vmax.xlane.f32.xlu0 %v715
    %v717 = vpop.xlane.xlu0 %716
    %v718 = vsub.f32 %v712, %v717
    %v719 = vmul.f32 %v718, 1.442695
    %v720 = vpow.pop %v719
    %v721 = vsel %vm472, %v720, 0.0
    %722 = vadd.xlane.f32.xlu0 %v721
    %v723 = vpop.xlane.xlu0 %722
    %724 = vrot.lane.b32.xlu0 %v466, 56
    %v725 = vpop.permute.xlu0 %724
    %v728 = vsel %vm472, %v720, 0
    %730 = vmatprep.subr.mxu0 0.0
    %731 = vmatpush1.msra.mxu0 %v725
    %732 = vmatprep.subr.mxu0 0.0
    %733 = vmatpush1.msra.mxu0 0.0
    %734 = vmatprep.subr.mxu0 0.0
    %735 = vmatpush1.msra.mxu0 0.0
    %736 = vmatprep.subr.mxu0 0.0
    %737 = vmatpush1.msra.mxu0 0.0
    %738 = vmatprep.subr.mxu0 0.0
    %739 = vmatpush1.msra.mxu0 0.0
    %740 = vmatprep.subr.mxu0 0.0
    %741 = vmatpush1.msra.mxu0 0.0
    %742 = vmatprep.subr.mxu0 0.0
    %743 = vmatpush1.msra.mxu0 0.0
    %744 = vmatprep.subr.mxu0 0.0
    %745 = vmatpush1.msra.mxu0 0.0
    %746 = vmatprep.subr.mxu0 0.0
    %747 = vmatpush1.msra.mxu0 0.0
    %748 = vmatprep.subr.mxu0 0.0
    %749 = vmatpush1.msra.mxu0 0.0
    %750 = vmatprep.subr.mxu0 0.0
    %751 = vmatpush1.msra.mxu0 0.0
    %752 = vmatprep.subr.mxu0 0.0
    %753 = vmatpush1.msra.mxu0 0.0
    %754 = vmatprep.subr.mxu0 0.0
    %755 = vmatpush1.msra.mxu0 0.0
    %756 = vmatprep.subr.mxu0 0.0
    %757 = vmatpush1.msra.mxu0 0.0
    %758 = vmatprep.subr.mxu0 0.0
    %759 = vmatpush1.msra.mxu0 0.0
    %760 = vmatprep.subr.mxu0 0.0
    %761 = vmatpush1.msra.mxu0 0.0
    %762 = vmatprep.subr.mxu0 0.0
    %763 = vmatpush1.msra.mxu0 0.0
    %764 = vmatprep.subr.mxu0 0.0
    %765 = vmatpush1.msra.mxu0 0.0
    %766 = vmatprep.subr.mxu0 0.0
    %767 = vmatpush1.msra.mxu0 0.0
    %768 = vmatprep.subr.mxu0 0.0
    %769 = vmatpush1.msra.mxu0 0.0
    %770 = vmatprep.subr.mxu0 0.0
    %771 = vmatpush1.msra.mxu0 0.0
    %772 = vmatprep.subr.mxu0 0.0
    %773 = vmatpush1.msra.mxu0 0.0
    %774 = vmatprep.subr.mxu0 0.0
    %775 = vmatpush1.msra.mxu0 0.0
    %776 = vmatprep.subr.mxu0 0.0
    %777 = vmatpush1.msra.mxu0 0.0
    %778 = vmatprep.subr.mxu0 0.0
    %779 = vmatpush1.msra.mxu0 0.0
    %780 = vmatprep.subr.mxu0 0.0
    %781 = vmatpush1.msra.mxu0 0.0
    %782 = vmatprep.subr.mxu0 0.0
    %783 = vmatpush1.msra.mxu0 0.0
    %784 = vmatprep.subr.mxu0 0.0
    %785 = vmatpush1.msra.mxu0 0.0
    %786 = vmatprep.subr.mxu0 0.0
    %787 = vmatpush1.msra.mxu0 0.0
    %788 = vmatprep.subr.mxu0 0.0
    %789 = vmatpush1.msra.mxu0 0.0
    %790 = vmatprep.subr.mxu0 0.0
    %791 = vmatpush1.msra.mxu0 0.0
    %792 = vmatprep.subr.mxu0 0.0
    %793 = vmatpush1.msra.mxu0 0.0
    %794 = vmatprep.mubr.f32.mxu0 0.0
    %795 = vmatmul.mubr.f32.gmra.mrb[0].mxu0 %v728
    %v796 = vpop.f32.mrb[0].mxu0
    %v797 = vadd.f32 0.0, %v796
    %v798 = vpop.f32.mrb[0].mxu0
    %799 = vdwg.mxu0
    %v800 = vrcp.pop %v723
    %v801 = vmul.f32 %v723, %v800
    %v802 = vsub.f32 2.0, %v801
    %v803 = vmul.f32 %v800, %v802
    %v804 = vmul.f32 %v797, %v803
    %805 = vrot.lane.b32.xlu0 %v466, 112
    %v806 = vpop.permute.xlu0 %805
    %807 = vrot.lane.b32.xlu0 %v466, 80
    %v808 = vpop.permute.xlu0 %807
    %v809 = vsel %vm472, %v806, 0
    %v811 = vsel %vm472, %v808, 0
    %813 = vmatprep.subr.mxu0 0.0
    %814 = vmatpush1.xpose.msra.mxu0 %v811
    %815 = vmatprep.subr.mxu0 0.0
    %816 = vmatpush1.xpose.msra.mxu0 0.0
    %817 = vmatprep.subr.mxu0 0.0
    %818 = vmatpush1.xpose.msra.mxu0 0.0
    %819 = vmatprep.subr.mxu0 0.0
    %820 = vmatpush1.xpose.msra.mxu0 0.0
    %821 = vmatprep.subr.mxu0 0.0
    %822 = vmatpush1.xpose.msra.mxu0 0.0
    %823 = vmatprep.subr.mxu0 0.0
    %824 = vmatpush1.xpose.msra.mxu0 0.0
    %825 = vmatprep.subr.mxu0 0.0
    %826 = vmatpush1.xpose.msra.mxu0 0.0
    %827 = vmatprep.subr.mxu0 0.0
    %828 = vmatpush1.xpose.msra.mxu0 0.0
    %829 = vmatprep.subr.mxu0 0.0
    %830 = vmatpush1.xpose.msra.mxu0 0.0
    %831 = vmatprep.subr.mxu0 0.0
    %832 = vmatpush1.xpose.msra.mxu0 0.0
    %833 = vmatprep.subr.mxu0 0.0
    %834 = vmatpush1.xpose.msra.mxu0 0.0
    %835 = vmatprep.subr.mxu0 0.0
    %836 = vmatpush1.xpose.msra.mxu0 0.0
    %837 = vmatprep.subr.mxu0 0.0
    %838 = vmatpush1.xpose.msra.mxu0 0.0
    %839 = vmatprep.subr.mxu0 0.0
    %840 = vmatpush1.xpose.msra.mxu0 0.0
    %841 = vmatprep.subr.mxu0 0.0
    %842 = vmatpush1.xpose.msra.mxu0 0.0
    %843 = vmatprep.subr.mxu0 0.0
    %844 = vmatpush1.xpose.msra.mxu0 0.0
    %845 = vmatprep.subr.mxu0 0.0
    %846 = vmatpush1.xpose.msra.mxu0 0.0
    %847 = vmatprep.subr.mxu0 0.0
    %848 = vmatpush1.xpose.msra.mxu0 0.0
    %849 = vmatprep.subr.mxu0 0.0
    %850 = vmatpush1.xpose.msra.mxu0 0.0
    %851 = vmatprep.subr.mxu0 0.0
    %852 = vmatpush1.xpose.msra.mxu0 0.0
    %853 = vmatprep.subr.mxu0 0.0
    %854 = vmatpush1.xpose.msra.mxu0 0.0
    %855 = vmatprep.subr.mxu0 0.0
    %856 = vmatpush1.xpose.msra.mxu0 0.0
    %857 = vmatprep.subr.mxu0 0.0
    %858 = vmatpush1.xpose.msra.mxu0 0.0
    %859 = vmatprep.subr.mxu0 0.0
    %860 = vmatpush1.xpose.msra.mxu0 0.0
    %861 = vmatprep.subr.mxu0 0.0
    %862 = vmatpush1.xpose.msra.mxu0 0.0
    %863 = vmatprep.subr.mxu0 0.0
    %864 = vmatpush1.xpose.msra.mxu0 0.0
    %865 = vmatprep.subr.mxu0 0.0
    %866 = vmatpush1.xpose.msra.mxu0 0.0
    %867 = vmatprep.subr.mxu0 0.0
    %868 = vmatpush1.xpose.msra.mxu0 0.0
    %869 = vmatprep.subr.mxu0 0.0
    %870 = vmatpush1.xpose.msra.mxu0 0.0
    %871 = vmatprep.subr.mxu0 0.0
    %872 = vmatpush1.xpose.msra.mxu0 0.0
    %873 = vmatprep.subr.mxu0 0.0
    %874 = vmatpush1.xpose.msra.mxu0 0.0
    %875 = vmatprep.subr.mxu0 0.0
    %876 = vmatpush1.xpose.msra.mxu0 0.0
    %877 = vmatprep.mubr.f32.mxu0 0.0
    %878 = vmatmul.mubr.f32.gmra.mrb[0].mxu0 %v809
    %v879 = vpop.f32.mrb[0].mxu0
    %v880 = vadd.f32 0.0, %v879
    %v881 = vpop.f32.mrb[0].mxu0
    %882 = vdwg.mxu0
    %v883 = vsel %vm472, %v880, -inf
    %884 = vmax.xlane.f32.xlu0 %v883
    %v885 = vpop.xlane.xlu0 %884
    %v886 = vsub.f32 %v880, %v885
    %v887 = vmul.f32 %v886, 1.442695
    %v888 = vpow.pop %v887
    %v889 = vsel %vm472, %v888, 0.0
    %890 = vadd.xlane.f32.xlu0 %v889
    %v891 = vpop.xlane.xlu0 %890
    %892 = vrot.lane.b32.xlu0 %v466, 48
    %v893 = vpop.permute.xlu0 %892
    %v896 = vsel %vm472, %v888, 0
    %898 = vmatprep.subr.mxu0 0.0
    %899 = vmatpush1.msra.mxu0 %v893
    %900 = vmatprep.subr.mxu0 0.0
    %901 = vmatpush1.msra.mxu0 0.0
    %902 = vmatprep.subr.mxu0 0.0
    %903 = vmatpush1.msra.mxu0 0.0
    %904 = vmatprep.subr.mxu0 0.0
    %905 = vmatpush1.msra.mxu0 0.0
    %906 = vmatprep.subr.mxu0 0.0
    %907 = vmatpush1.msra.mxu0 0.0
    %908 = vmatprep.subr.mxu0 0.0
    %909 = vmatpush1.msra.mxu0 0.0
    %910 = vmatprep.subr.mxu0 0.0
    %911 = vmatpush1.msra.mxu0 0.0
    %912 = vmatprep.subr.mxu0 0.0
    %913 = vmatpush1.msra.mxu0 0.0
    %914 = vmatprep.subr.mxu0 0.0
    %915 = vmatpush1.msra.mxu0 0.0
    %916 = vmatprep.subr.mxu0 0.0
    %917 = vmatpush1.msra.mxu0 0.0
    %918 = vmatprep.subr.mxu0 0.0
    %919 = vmatpush1.msra.mxu0 0.0
    %920 = vmatprep.subr.mxu0 0.0
    %921 = vmatpush1.msra.mxu0 0.0
    %922 = vmatprep.subr.mxu0 0.0
    %923 = vmatpush1.msra.mxu0 0.0
    %924 = vmatprep.subr.mxu0 0.0
    %925 = vmatpush1.msra.mxu0 0.0
    %926 = vmatprep.subr.mxu0 0.0
    %927 = vmatpush1.msra.mxu0 0.0
    %928 = vmatprep.subr.mxu0 0.0
    %929 = vmatpush1.msra.mxu0 0.0
    %930 = vmatprep.subr.mxu0 0.0
    %931 = vmatpush1.msra.mxu0 0.0
    %932 = vmatprep.subr.mxu0 0.0
    %933 = vmatpush1.msra.mxu0 0.0
    %934 = vmatprep.subr.mxu0 0.0
    %935 = vmatpush1.msra.mxu0 0.0
    %936 = vmatprep.subr.mxu0 0.0
    %937 = vmatpush1.msra.mxu0 0.0
    %938 = vmatprep.subr.mxu0 0.0
    %939 = vmatpush1.msra.mxu0 0.0
    %940 = vmatprep.subr.mxu0 0.0
    %941 = vmatpush1.msra.mxu0 0.0
    %942 = vmatprep.subr.mxu0 0.0
    %943 = vmatpush1.msra.mxu0 0.0
    %944 = vmatprep.subr.mxu0 0.0
    %945 = vmatpush1.msra.mxu0 0.0
    %946 = vmatprep.subr.mxu0 0.0
    %947 = vmatpush1.msra.mxu0 0.0
    %948 = vmatprep.subr.mxu0 0.0
    %949 = vmatpush1.msra.mxu0 0.0
    %950 = vmatprep.subr.mxu0 0.0
    %951 = vmatpush1.msra.mxu0 0.0
    %952 = vmatprep.subr.mxu0 0.0
    %953 = vmatpush1.msra.mxu0 0.0
    %954 = vmatprep.subr.mxu0 0.0
    %955 = vmatpush1.msra.mxu0 0.0
    %956 = vmatprep.subr.mxu0 0.0
    %957 = vmatpush1.msra.mxu0 0.0
    %958 = vmatprep.subr.mxu0 0.0
    %959 = vmatpush1.msra.mxu0 0.0
    %960 = vmatprep.subr.mxu0 0.0
    %961 = vmatpush1.msra.mxu0 0.0
    %962 = vmatprep.mubr.f32.mxu0 0.0
    %963 = vmatmul.mubr.f32.gmra.mrb[0].mxu0 %v896
    %v964 = vpop.f32.mrb[0].mxu0
    %v965 = vadd.f32 0.0, %v964
    %v966 = vpop.f32.mrb[0].mxu0
    %967 = vdwg.mxu0
    %v968 = vrcp.pop %v891
    %v969 = vmul.f32 %v891, %v968
    %v970 = vsub.f32 2.0, %v969
    %v971 = vmul.f32 %v968, %v970
    %v972 = vmul.f32 %v965, %v971
    %973 = vrot.lane.b32.xlu0 %v466, 104
    %v974 = vpop.permute.xlu0 %973
    %975 = vrot.lane.b32.xlu0 %v466, 72
    %v976 = vpop.permute.xlu0 %975
    %v977 = vsel %vm472, %v974, 0
    %v979 = vsel %vm472, %v976, 0
    %981 = vmatprep.subr.mxu0 0.0
    %982 = vmatpush1.xpose.msra.mxu0 %v979
    %983 = vmatprep.subr.mxu0 0.0
    %984 = vmatpush1.xpose.msra.mxu0 0.0
    %985 = vmatprep.subr.mxu0 0.0
    %986 = vmatpush1.xpose.msra.mxu0 0.0
    %987 = vmatprep.subr.mxu0 0.0
    %988 = vmatpush1.xpose.msra.mxu0 0.0
    %989 = vmatprep.subr.mxu0 0.0
    %990 = vmatpush1.xpose.msra.mxu0 0.0
    %991 = vmatprep.subr.mxu0 0.0
    %992 = vmatpush1.xpose.msra.mxu0 0.0
    %993 = vmatprep.subr.mxu0 0.0
    %994 = vmatpush1.xpose.msra.mxu0 0.0
    %995 = vmatprep.subr.mxu0 0.0
    %996 = vmatpush1.xpose.msra.mxu0 0.0
    %997 = vmatprep.subr.mxu0 0.0
    %998 = vmatpush1.xpose.msra.mxu0 0.0
    %999 = vmatprep.subr.mxu0 0.0
    %1000 = vmatpush1.xpose.msra.mxu0 0.0
    %1001 = vmatprep.subr.mxu0 0.0
    %1002 = vmatpush1.xpose.msra.mxu0 0.0
    %1003 = vmatprep.subr.mxu0 0.0
    %1004 = vmatpush1.xpose.msra.mxu0 0.0
    %1005 = vmatprep.subr.mxu0 0.0
    %1006 = vmatpush1.xpose.msra.mxu0 0.0
    %1007 = vmatprep.subr.mxu0 0.0
    %1008 = vmatpush1.xpose.msra.mxu0 0.0
    %1009 = vmatprep.subr.mxu0 0.0
    %1010 = vmatpush1.xpose.msra.mxu0 0.0
    %1011 = vmatprep.subr.mxu0 0.0
    %1012 = vmatpush1.xpose.msra.mxu0 0.0
    %1013 = vmatprep.subr.mxu0 0.0
    %1014 = vmatpush1.xpose.msra.mxu0 0.0
    %1015 = vmatprep.subr.mxu0 0.0
    %1016 = vmatpush1.xpose.msra.mxu0 0.0
    %1017 = vmatprep.subr.mxu0 0.0
    %1018 = vmatpush1.xpose.msra.mxu0 0.0
    %1019 = vmatprep.subr.mxu0 0.0
    %1020 = vmatpush1.xpose.msra.mxu0 0.0
    %1021 = vmatprep.subr.mxu0 0.0
    %1022 = vmatpush1.xpose.msra.mxu0 0.0
    %1023 = vmatprep.subr.mxu0 0.0
    %1024 = vmatpush1.xpose.msra.mxu0 0.0
    %1025 = vmatprep.subr.mxu0 0.0
    %1026 = vmatpush1.xpose.msra.mxu0 0.0
    %1027 = vmatprep.subr.mxu0 0.0
    %1028 = vmatpush1.xpose.msra.mxu0 0.0
    %1029 = vmatprep.subr.mxu0 0.0
    %1030 = vmatpush1.xpose.msra.mxu0 0.0
    %1031 = vmatprep.subr.mxu0 0.0
    %1032 = vmatpush1.xpose.msra.mxu0 0.0
    %1033 = vmatprep.subr.mxu0 0.0
    %1034 = vmatpush1.xpose.msra.mxu0 0.0
    %1035 = vmatprep.subr.mxu0 0.0
    %1036 = vmatpush1.xpose.msra.mxu0 0.0
    %1037 = vmatprep.subr.mxu0 0.0
    %1038 = vmatpush1.xpose.msra.mxu0 0.0
    %1039 = vmatprep.subr.mxu0 0.0
    %1040 = vmatpush1.xpose.msra.mxu0 0.0
    %1041 = vmatprep.subr.mxu0 0.0
    %1042 = vmatpush1.xpose.msra.mxu0 0.0
    %1043 = vmatprep.subr.mxu0 0.0
    %1044 = vmatpush1.xpose.msra.mxu0 0.0
    %1045 = vmatprep.mubr.f32.mxu0 0.0
    %1046 = vmatmul.mubr.f32.gmra.mrb[0].mxu0 %v977
    %v1047 = vpop.f32.mrb[0].mxu0
    %v1048 = vadd.f32 0.0, %v1047
    %v1049 = vpop.f32.mrb[0].mxu0
    %1050 = vdwg.mxu0
    %v1051 = vsel %vm472, %v1048, -inf
    %1052 = vmax.xlane.f32.xlu0 %v1051
    %v1053 = vpop.xlane.xlu0 %1052
    %v1054 = vsub.f32 %v1048, %v1053
    %v1055 = vmul.f32 %v1054, 1.442695
    %v1056 = vpow.pop %v1055
    %v1057 = vsel %vm472, %v1056, 0.0
    %1058 = vadd.xlane.f32.xlu0 %v1057
    %v1059 = vpop.xlane.xlu0 %1058
    %1060 = vrot.lane.b32.xlu0 %v466, 40
    %v1061 = vpop.permute.xlu0 %1060
    %v1064 = vsel %vm472, %v1056, 0
    %1066 = vmatprep.subr.mxu0 0.0
    %1067 = vmatpush1.msra.mxu0 %v1061
    %1068 = vmatprep.subr.mxu0 0.0
    %1069 = vmatpush1.msra.mxu0 0.0
    %1070 = vmatprep.subr.mxu0 0.0
    %1071 = vmatpush1.msra.mxu0 0.0
    %1072 = vmatprep.subr.mxu0 0.0
    %1073 = vmatpush1.msra.mxu0 0.0
    %1074 = vmatprep.subr.mxu0 0.0
    %1075 = vmatpush1.msra.mxu0 0.0
    %1076 = vmatprep.subr.mxu0 0.0
    %1077 = vmatpush1.msra.mxu0 0.0
    %1078 = vmatprep.subr.mxu0 0.0
    %1079 = vmatpush1.msra.mxu0 0.0
    %1080 = vmatprep.subr.mxu0 0.0
    %1081 = vmatpush1.msra.mxu0 0.0
    %1082 = vmatprep.subr.mxu0 0.0
    %1083 = vmatpush1.msra.mxu0 0.0
    %1084 = vmatprep.subr.mxu0 0.0
    %1085 = vmatpush1.msra.mxu0 0.0
    %1086 = vmatprep.subr.mxu0 0.0
    %1087 = vmatpush1.msra.mxu0 0.0
    %1088 = vmatprep.subr.mxu0 0.0
    %1089 = vmatpush1.msra.mxu0 0.0
    %1090 = vmatprep.subr.mxu0 0.0
    %1091 = vmatpush1.msra.mxu0 0.0
    %1092 = vmatprep.subr.mxu0 0.0
    %1093 = vmatpush1.msra.mxu0 0.0
    %1094 = vmatprep.subr.mxu0 0.0
    %1095 = vmatpush1.msra.mxu0 0.0
    %1096 = vmatprep.subr.mxu0 0.0
    %1097 = vmatpush1.msra.mxu0 0.0
    %1098 = vmatprep.subr.mxu0 0.0
    %1099 = vmatpush1.msra.mxu0 0.0
    %1100 = vmatprep.subr.mxu0 0.0
    %1101 = vmatpush1.msra.mxu0 0.0
    %1102 = vmatprep.subr.mxu0 0.0
    %1103 = vmatpush1.msra.mxu0 0.0
    %1104 = vmatprep.subr.mxu0 0.0
    %1105 = vmatpush1.msra.mxu0 0.0
    %1106 = vmatprep.subr.mxu0 0.0
    %1107 = vmatpush1.msra.mxu0 0.0
    %1108 = vmatprep.subr.mxu0 0.0
    %1109 = vmatpush1.msra.mxu0 0.0
    %1110 = vmatprep.subr.mxu0 0.0
    %1111 = vmatpush1.msra.mxu0 0.0
    %1112 = vmatprep.subr.mxu0 0.0
    %1113 = vmatpush1.msra.mxu0 0.0
    %1114 = vmatprep.subr.mxu0 0.0
    %1115 = vmatpush1.msra.mxu0 0.0
    %1116 = vmatprep.subr.mxu0 0.0
    %1117 = vmatpush1.msra.mxu0 0.0
    %1118 = vmatprep.subr.mxu0 0.0
    %1119 = vmatpush1.msra.mxu0 0.0
    %1120 = vmatprep.subr.mxu0 0.0
    %1121 = vmatpush1.msra.mxu0 0.0
    %1122 = vmatprep.subr.mxu0 0.0
    %1123 = vmatpush1.msra.mxu0 0.0
    %1124 = vmatprep.subr.mxu0 0.0
    %1125 = vmatpush1.msra.mxu0 0.0
    %1126 = vmatprep.subr.mxu0 0.0
    %1127 = vmatpush1.msra.mxu0 0.0
    %1128 = vmatprep.subr.mxu0 0.0
    %1129 = vmatpush1.msra.mxu0 0.0
    %1130 = vmatprep.mubr.f32.mxu0 0.0
    %1131 = vmatmul.mubr.f32.gmra.mrb[0].mxu0 %v1064
    %v1132 = vpop.f32.mrb[0].mxu0
    %v1133 = vadd.f32 0.0, %v1132
    %v1134 = vpop.f32.mrb[0].mxu0
    %1135 = vdwg.mxu0
    %v1136 = vrcp.pop %v1059
    %v1137 = vmul.f32 %v1059, %v1136
    %v1138 = vsub.f32 2.0, %v1137
    %v1139 = vmul.f32 %v1136, %v1138
    %v1140 = vmul.f32 %v1133, %v1139
    %1142 = vrot.lane.b32.xlu0 %v804, 8
    %v1143 = vpop.permute.xlu0 %1142
    %1146 = vrot.lane.b32.xlu0 %v972, 16
    %v1147 = vpop.permute.xlu0 %1146
    %1150 = vrot.lane.b32.xlu0 %v1140, 24
    %v1151 = vpop.permute.xlu0 %1150
    %v1153 = vsel %vm472, %v636, %v1143
    %v1154 = vsel %vm186, %v1153, %v1147
    %vm1155 = vcmask 195584
    %v1156 = vsel %vm1155, %v1154, %v1151
    %v1158 = vlaneseq
    %v1159 = vshrl.u32 %v1158, 7
    %v1160 = vsub.s32 0, %v1159
    %v1161 = vrot.slane %v137, %v1160
    %vm1163 = vcmask 261120
    %v1165 = vsel %vm1163, %v1156, 0
    %1167 = vmatprep.subr.mxu0 0.0
    %1168 = vmatpush1.msra.mxu0 %v133
    %1169 = vmatprep.subr.mxu0 0.0
    %1170 = vmatpush1.msra.mxu0 %v134
    %1171 = vmatprep.subr.mxu0 0.0
    %1172 = vmatpush1.msra.mxu0 %v135
    %1173 = vmatprep.subr.mxu0 0.0
    %1174 = vmatpush1.msra.mxu0 %v136
    %1175 = vmatprep.subr.mxu0 0.0
    %1176 = vmatpush1.msra.mxu0 0.0
    %1177 = vmatprep.subr.mxu0 0.0
    %1178 = vmatpush1.msra.mxu0 0.0
    %1179 = vmatprep.subr.mxu0 0.0
    %1180 = vmatpush1.msra.mxu0 0.0
    %1181 = vmatprep.subr.mxu0 0.0
    %1182 = vmatpush1.msra.mxu0 0.0
    %1183 = vmatprep.subr.mxu0 0.0
    %1184 = vmatpush1.msra.mxu0 0.0
    %1185 = vmatprep.subr.mxu0 0.0
    %1186 = vmatpush1.msra.mxu0 0.0
    %1187 = vmatprep.subr.mxu0 0.0
    %1188 = vmatpush1.msra.mxu0 0.0
    %1189 = vmatprep.subr.mxu0 0.0
    %1190 = vmatpush1.msra.mxu0 0.0
    %1191 = vmatprep.subr.mxu0 0.0
    %1192 = vmatpush1.msra.mxu0 0.0
    %1193 = vmatprep.subr.mxu0 0.0
    %1194 = vmatpush1.msra.mxu0 0.0
    %1195 = vmatprep.subr.mxu0 0.0
    %1196 = vmatpush1.msra.mxu0 0.0
    %1197 = vmatprep.subr.mxu0 0.0
    %1198 = vmatpush1.msra.mxu0 0.0
    %1199 = vmatprep.subr.mxu0 0.0
    %1200 = vmatpush1.msra.mxu0 0.0
    %1201 = vmatprep.subr.mxu0 0.0
    %1202 = vmatpush1.msra.mxu0 0.0
    %1203 = vmatprep.subr.mxu0 0.0
    %1204 = vmatpush1.msra.mxu0 0.0
    %1205 = vmatprep.subr.mxu0 0.0
    %1206 = vmatpush1.msra.mxu0 0.0
    %1207 = vmatprep.subr.mxu0 0.0
    %1208 = vmatpush1.msra.mxu0 0.0
    %1209 = vmatprep.subr.mxu0 0.0
    %1210 = vmatpush1.msra.mxu0 0.0
    %1211 = vmatprep.subr.mxu0 0.0
    %1212 = vmatpush1.msra.mxu0 0.0
    %1213 = vmatprep.subr.mxu0 0.0
    %1214 = vmatpush1.msra.mxu0 0.0
    %1215 = vmatprep.subr.mxu0 0.0
    %1216 = vmatpush1.msra.mxu0 0.0
    %1217 = vmatprep.subr.mxu0 0.0
    %1218 = vmatpush1.msra.mxu0 0.0
    %1219 = vmatprep.subr.mxu0 0.0
    %1220 = vmatpush1.msra.mxu0 0.0
    %1221 = vmatprep.subr.mxu0 0.0
    %1222 = vmatpush1.msra.mxu0 0.0
    %1223 = vmatprep.subr.mxu0 0.0
    %1224 = vmatpush1.msra.mxu0 0.0
    %1225 = vmatprep.subr.mxu0 0.0
    %1226 = vmatpush1.msra.mxu0 0.0
    %1227 = vmatprep.subr.mxu0 0.0
    %1228 = vmatpush1.msra.mxu0 0.0
    %1229 = vmatprep.subr.mxu0 0.0
    %1230 = vmatpush1.msra.mxu0 0.0
    %1231 = vmatprep.mubr.f32.mxu0 0.0
    %1232 = vmatmul.mubr.f32.gmra.mrb[0].mxu0 %v1165
    %v1233 = vpop.f32.mrb[0].mxu0
    %v1234 = vadd.f32 %v1161, %v1233
    %v1235 = vpop.f32.mrb[0].mxu0
    %1236 = vdwg.mxu0
    %v1237 = vadd.f32 %v396, %v1234
    %v1238 = vsel %vm1163, %v1237, 0.0
    %1239 = vadd.xlane.f32.xlu0 %v1238
    %v1240 = vpop.xlane.xlu0 %1239
    %v1241 = vrcp.pop 32.0
    %v1242 = vmul.f32 %v1240, %v1241
    %v1243 = vsub.f32 %v1237, %v1242
    %v1244 = vmul.f32 %v1243, %v1243
    %v1245 = vsel %vm1163, %v1244, 0.0
    %1246 = vadd.xlane.f32.xlu0 %v1245
    %v1247 = vpop.xlane.xlu0 %1246
    %v1248 = vmul.f32 %v1247, %v1241
    %v1249 = vadd.f32 %v1248, 1e-05
    %v1250 = vrsqrt.pop %v1249
    %v1251 = vmul.f32 %v1243, %v1250
    %v1253 = vlaneseq
    %v1254 = vshrl.u32 %v1253, 7
    %v1255 = vsub.s32 0, %v1254
    %v1256 = vrot.slane %v138, %v1255
    %v1258 = vmul.f32 %v1251, %v1256
    %v1260 = vlaneseq
    %v1261 = vshrl.u32 %v1260, 7
    %v1262 = vsub.s32 0, %v1261
    %v1263 = vrot.slane %v139, %v1262
    %v1265 = vadd.f32 %v1258, %v1263
    %v1267 = vlaneseq
    %v1268 = vshrl.u32 %v1267, 7
    %v1269 = vsub.s32 0, %v1268
    %v1270 = vrot.slane %v144, %v1269
    %v1273 = vsel %vm1163, %v1265, 0
    %1275 = vmatprep.subr.mxu0 0.0
    %1276 = vmatpush1.msra.mxu0 %v140
    %1277 = vmatprep.subr.mxu0 0.0
    %1278 = vmatpush1.msra.mxu0 %v141
    %1279 = vmatprep.subr.mxu0 0.0
    %1280 = vmatpush1.msra.mxu0 %v142
    %1281 = vmatprep.subr.mxu0 0.0
    %1282 = vmatpush1.msra.mxu0 %v143
    %1283 = vmatprep.subr.mxu0 0.0
    %1284 = vmatpush1.msra.mxu0 0.0
    %1285 = vmatprep.subr.mxu0 0.0
    %1286 = vmatpush1.msra.mxu0 0.0
    %1287 = vmatprep.subr.mxu0 0.0
    %1288 = vmatpush1.msra.mxu0 0.0
    %1289 = vmatprep.subr.mxu0 0.0
    %1290 = vmatpush1.msra.mxu0 0.0
    %1291 = vmatprep.subr.mxu0 0.0
    %1292 = vmatpush1.msra.mxu0 0.0
    %1293 = vmatprep.subr.mxu0 0.0
    %1294 = vmatpush1.msra.mxu0 0.0
    %1295 = vmatprep.subr.mxu0 0.0
    %1296 = vmatpush1.msra.mxu0 0.0
    %1297 = vmatprep.subr.mxu0 0.0
    %1298 = vmatpush1.msra.mxu0 0.0
    %1299 = vmatprep.subr.mxu0 0.0
    %1300 = vmatpush1.msra.mxu0 0.0
    %1301 = vmatprep.subr.mxu0 0.0
    %1302 = vmatpush1.msra.mxu0 0.0
    %1303 = vmatprep.subr.mxu0 0.0
    %1304 = vmatpush1.msra.mxu0 0.0
    %1305 = vmatprep.subr.mxu0 0.0
    %1306 = vmatpush1.msra.mxu0 0.0
    %1307 = vmatprep.subr.mxu0 0.0
    %1308 = vmatpush1.msra.mxu0 0.0
    %1309 = vmatprep.subr.mxu0 0.0
    %1310 = vmatpush1.msra.mxu0 0.0
    %1311 = vmatprep.subr.mxu0 0.0
    %1312 = vmatpush1.msra.mxu0 0.0
    %1313 = vmatprep.subr.mxu0 0.0
    %1314 = vmatpush1.msra.mxu0 0.0
    %1315 = vmatprep.subr.mxu0 0.0
    %1316 = vmatpush1.msra.mxu0 0.0
    %1317 = vmatprep.subr.mxu0 0.0
    %1318 = vmatpush1.msra.mxu0 0.0
    %1319 = vmatprep.subr.mxu0 0.0
    %1320 = vmatpush1.msra.mxu0 0.0
    %1321 = vmatprep.subr.mxu0 0.0
    %1322 = vmatpush1.msra.mxu0 0.0
    %1323 = vmatprep.subr.mxu0 0.0
    %1324 = vmatpush1.msra.mxu0 0.0
    %1325 = vmatprep.subr.mxu0 0.0
    %1326 = vmatpush1.msra.mxu0 0.0
    %1327 = vmatprep.subr.mxu0 0.0
    %1328 = vmatpush1.msra.mxu0 0.0
    %1329 = vmatprep.subr.mxu0 0.0
    %1330 = vmatpush1.msra.mxu0 0.0
    %1331 = vmatprep.subr.mxu0 0.0
    %1332 = vmatpush1.msra.mxu0 0.0
    %1333 = vmatprep.subr.mxu0 0.0
    %1334 = vmatpush1.msra.mxu0 0.0
    %1335 = vmatprep.subr.mxu0 0.0
    %1336 = vmatpush1.msra.mxu0 0.0
    %1337 = vmatprep.subr.mxu0 0.0
    %1338 = vmatpush1.msra.mxu0 0.0
    %1339 = vmatprep.mubr.f32.mxu0 0.0
    %1340 = vmatmul.mubr.f32.gmra.mrb[0].mxu0 %v1273
    %v1341 = vpop.f32.mrb[0].mxu0
    %v1342 = vadd.f32 %v1270, %v1341
    %v1343 = vpop.f32.mrb[0].mxu0
    %1344 = vdwg.mxu0
    %v1345 = vmul.f32 %v1342, 0.5
    %v1346 = vmul.f32 %v1342, 0.70710677
    %v1347 = vand.u32 2147483647, %v1346
    %v1348 = vmul.f32 %v1347, 0.3275911
    %v1349 = vadd.f32 %v1348, 1.0
    %v1350 = vrcp.pop %v1349
    %v1351 = vmul.f32 1.0, %v1350
    %v1352 = vmul.f32 %v1351, 1.0614054
    %v1353 = vadd.f32 %v1352, -1.4531521
    %v1354 = vmul.f32 %v1353, %v1351
    %v1355 = vadd.f32 %v1354, 1.4214138
    %v1356 = vmul.f32 %v1355, %v1351
    %v1357 = vadd.f32 %v1356, -0.28449672
    %v1358 = vmul.f32 %v1357, %v1351
    %v1359 = vadd.f32 %v1358, 0.2548296
    %v1360 = vmul.f32 %v1359, %v1351
    %v1361 = vsub.f32 0.0, %v1347
    %v1362 = vmul.f32 %v1361, %v1347
    %v1363 = vmul.f32 %v1362, 1.442695
    %v1364 = vpow.pop %v1363
    %v1365 = vmul.f32 %v1360, %v1364
    %v1366 = vsub.f32 1.0, %v1365
    %vm1367 = vcmp.lt.f32.partialorder %v1346, 0.0
    %v1368 = vsub.f32 0.0, %v1366
    %v1369 = vsel %vm1367, %v1368, %v1366
    %v1370 = vadd.f32 %v1369, 1.0
    %v1371 = vmul.f32 %v1345, %v1370
    %v1373 = vlaneseq
    %v1374 = vshrl.u32 %v1373, 7
    %v1375 = vsub.s32 0, %v1374
    %v1376 = vrot.slane %v147, %v1375
    %v1379 = vsel %vm186, %v1371, 0
    %1381 = vmatprep.subr.mxu0 0.0
    %1382 = vmatpush1.msra.mxu0 %v145
    %1383 = vmatprep.subr.mxu0 0.0
    %1384 = vmatpush1.msra.mxu0 %v146
    %1385 = vmatprep.subr.mxu0 0.0
    %1386 = vmatpush1.msra.mxu0 0.0
    %1387 = vmatprep.subr.mxu0 0.0
    %1388 = vmatpush1.msra.mxu0 0.0
    %1389 = vmatprep.subr.mxu0 0.0
    %1390 = vmatpush1.msra.mxu0 0.0
    %1391 = vmatprep.subr.mxu0 0.0
    %1392 = vmatpush1.msra.mxu0 0.0
    %1393 = vmatprep.subr.mxu0 0.0
    %1394 = vmatpush1.msra.mxu0 0.0
    %1395 = vmatprep.subr.mxu0 0.0
    %1396 = vmatpush1.msra.mxu0 0.0
    %1397 = vmatprep.subr.mxu0 0.0
    %1398 = vmatpush1.msra.mxu0 0.0
    %1399 = vmatprep.subr.mxu0 0.0
    %1400 = vmatpush1.msra.mxu0 0.0
    %1401 = vmatprep.subr.mxu0 0.0
    %1402 = vmatpush1.msra.mxu0 0.0
    %1403 = vmatprep.subr.mxu0 0.0
    %1404 = vmatpush1.msra.mxu0 0.0
    %1405 = vmatprep.subr.mxu0 0.0
    %1406 = vmatpush1.msra.mxu0 0.0
    %1407 = vmatprep.subr.mxu0 0.0
    %1408 = vmatpush1.msra.mxu0 0.0
    %1409 = vmatprep.subr.mxu0 0.0
    %1410 = vmatpush1.msra.mxu0 0.0
    %1411 = vmatprep.subr.mxu0 0.0
    %1412 = vmatpush1.msra.mxu0 0.0
    %1413 = vmatprep.subr.mxu0 0.0
    %1414 = vmatpush1.msra.mxu0 0.0
    %1415 = vmatprep.subr.mxu0 0.0
    %1416 = vmatpush1.msra.mxu0 0.0
    %1417 = vmatprep.subr.mxu0 0.0
    %1418 = vmatpush1.msra.mxu0 0.0
    %1419 = vmatprep.subr.mxu0 0.0
    %1420 = vmatpush1.msra.mxu0 0.0
    %1421 = vmatprep.subr.mxu0 0.0
    %1422 = vmatpush1.msra.mxu0 0.0
    %1423 = vmatprep.subr.mxu0 0.0
    %1424 = vmatpush1.msra.mxu0 0.0
    %1425 = vmatprep.subr.mxu0 0.0
    %1426 = vmatpush1.msra.mxu0 0.0
    %1427 = vmatprep.subr.mxu0 0.0
    %1428 = vmatpush1.msra.mxu0 0.0
    %1429 = vmatprep.subr.mxu0 0.0
    %1430 = vmatpush1.msra.mxu0 0.0
    %1431 = vmatprep.subr.mxu0 0.0
    %1432 = vmatpush1.msra.mxu0 0.0
    %1433 = vmatprep.subr.mxu0 0.0
    %1434 = vmatpush1.msra.mxu0 0.0
    %1435 = vmatprep.subr.mxu0 0.0
    %1436 = vmatpush1.msra.mxu0 0.0
    %1437 = vmatprep.subr.mxu0 0.0
    %1438 = vmatpush1.msra.mxu0 0.0
    %1439 = vmatprep.subr.mxu0 0.0
    %1440 = vmatpush1.msra.mxu0 0.0
    %1441 = vmatprep.subr.mxu0 0.0
    %1442 = vmatpush1.msra.mxu0 0.0
    %1443 = vmatprep.subr.mxu0 0.0
    %1444 = vmatpush1.msra.mxu0 0.0
    %1445 = vmatprep.mubr.f32.mxu0 0.0
    %1446 = vmatmul.mubr.f32.gmra.mrb[0].mxu0 %v1379
    %v1447 = vpop.f32.mrb[0].mxu0
    %v1448 = vadd.f32 %v1376, %v1447
    %v1449 = vpop.f32.mrb[0].mxu0
    %1450 = vdwg.mxu0
    %v1451 = vadd.f32 %v1265, %v1448
    %v1453 = vcombine.high %v1451, %v1451
    %v1455 = vunpack.c.l.s4 1966171168
    %v1456 = vunpack.c.0.s8 %v1455
    %v1457 = vlaneseq
    %v1458 = vshrl.u32 %v1457, 7
    %v1459 = vsub.s32 %v1456, %v1458
    %v1460 = vrot.slane %v1451, %v1459
    %v1462 = vunpack.c.l.s4 1966171168
    %v1463 = vunpack.c.0.s8 %v1462
    %v1464 = vlaneseq
    %v1465 = vshrl.u32 %v1464, 7
    %v1466 = vsub.s32 %v1463, %v1465
    %v1467 = vrot.slane %v1453, %v1466
    %v1468 = vcombine.high %v1460, %v1460
    %v1469 = vcombine.high %v1467, %v1467
    %v1471 = vunpack.c.l.s4 1966171168
    %v1472 = vunpack.c.0.s8 %v1471
    %v1473 = vlaneseq
    %v1474 = vshrl.u32 %v1473, 7
    %v1475 = vsub.s32 %v1472, %v1474
    %v1476 = vrot.slane %v1460, %v1475
    %v1478 = vunpack.c.l.s4 1966171168
    %v1479 = vunpack.c.0.s8 %v1478
    %v1480 = vlaneseq
    %v1481 = vshrl.u32 %v1480, 7
    %v1482 = vsub.s32 %v1479, %v1481
    %v1483 = vrot.slane %v1467, %v1482
    %v1485 = vunpack.c.l.s4 1966171168
    %v1486 = vunpack.c.0.s8 %v1485
    %v1487 = vlaneseq
    %v1488 = vshrl.u32 %v1487, 7
    %v1489 = vsub.s32 %v1486, %v1488
    %v1490 = vrot.slane %v1468, %v1489
    %v1492 = vunpack.c.l.s4 1966171168
    %v1493 = vunpack.c.0.s8 %v1492
    %v1494 = vlaneseq
    %v1495 = vshrl.u32 %v1494, 7
    %v1496 = vsub.s32 %v1493, %v1495
    %v1497 = vrot.slane %v1469, %v1496
    %v1498 = vcombine.high %v1476, %v1476
    %v1499 = vcombine.high %v1483, %v1483
    %v1500 = vcombine.high %v1490, %v1490
    %v1501 = vcombine.high %v1497, %v1497
    %vm1510 = vcmask 253952
    %1511 = vst.msk [vmem:[#allocation13] sm:$0x1] %vm1510, %v1476
    %1512 = vst.msk [vmem:[#allocation13 + $0x2] sm:$0x1] %vm1510, %v1490
    %1513 = vst.msk [vmem:[#allocation13 + $0x4] sm:$0x1] %vm1510, %v1498
    %1514 = vst.msk [vmem:[#allocation13 + $0x6] sm:$0x1] %vm1510, %v1500
    %1515 = vst.msk [vmem:[#allocation13 + $0x8] sm:$0x1] %vm1510, %v1483
    %1516 = vst.msk [vmem:[#allocation13 + $0xa] sm:$0x1] %vm1510, %v1497
    %1517 = vst.msk [vmem:[#allocation13 + $0xc] sm:$0x1] %vm1510, %v1499
    %1518 = vst.msk [vmem:[#allocation13 + $0xe] sm:$0x1] %vm1510, %v1501
    %v1519 = vld [vmem:[%s0 + $0x1] sm:$0x1]
    %v1520 = vld [vmem:[%s0 + $0x3] sm:$0x1]
    %v1521 = vld [vmem:[%s0 + $0x5] sm:$0x1]
    %v1522 = vld [vmem:[%s0 + $0x7] sm:$0x1]
    %v1523 = vld [vmem:[%s0 + $0x9] sm:$0x1]
    %v1524 = vld [vmem:[%s0 + $0xb] sm:$0x1]
    %v1525 = vld [vmem:[%s0 + $0xd] sm:$0x1]
    %v1526 = vld [vmem:[%s0 + $0xf] sm:$0x1]
    %v1535 = vrot.slane %v1520, 7
    %v1536 = vsel %vm165, %v1535, %v1519
    %v1537 = vrot.slane %v1521, 6
    %v1538 = vsel %vm168, %v1537, %v1536
    %v1539 = vrot.slane %v1522, 5
    %v1540 = vsel %vm171, %v1539, %v1538
    %v1541 = vrot.slane %v1523, 4
    %v1542 = vsel %vm174, %v1541, %v1540
    %v1543 = vrot.slane %v1524, 3
    %v1544 = vsel %vm177, %v1543, %v1542
    %v1545 = vrot.slane %v1525, 2
    %v1546 = vsel %vm180, %v1545, %v1544
    %v1547 = vrot.slane %v1526, 1
    %v1548 = vsel %vm183, %v1547, %v1546
    %v1550 = vsel %vm186, %v1548, 0.0
    %1551 = vadd.xlane.f32.xlu0 %v1550
    %v1552 = vpop.xlane.xlu0 %1551
    %v1553 = vmul.f32 %v1552, %v190
    %v1555 = vrot.slane %v1553, 1
    %v1556 = vrot.slane %v1553, 2
    %v1557 = vrot.slane %v1553, 3
    %v1558 = vrot.slane %v1553, 4
    %v1559 = vrot.slane %v1553, 5
    %v1560 = vrot.slane %v1553, 6
    %v1561 = vrot.slane %v1553, 7
    %v1570 = vsub.f32 %v1519, %v1553
    %v1571 = vsub.f32 %v1520, %v1555
    %v1572 = vsub.f32 %v1521, %v1556
    %v1573 = vsub.f32 %v1522, %v1557
    %v1574 = vsub.f32 %v1523, %v1558
    %v1575 = vsub.f32 %v1524, %v1559
    %v1576 = vsub.f32 %v1525, %v1560
    %v1577 = vsub.f32 %v1526, %v1561
    %v1578 = vmul.f32 %v1570, %v1570
    %v1579 = vmul.f32 %v1571, %v1571
    %v1580 = vmul.f32 %v1572, %v1572
    %v1581 = vmul.f32 %v1573, %v1573
    %v1582 = vmul.f32 %v1574, %v1574
    %v1583 = vmul.f32 %v1575, %v1575
    %v1584 = vmul.f32 %v1576, %v1576
    %v1585 = vmul.f32 %v1577, %v1577
    %v1594 = vrot.slane %v1579, 7
    %v1595 = vsel %vm165, %v1594, %v1578
    %v1596 = vrot.slane %v1580, 6
    %v1597 = vsel %vm168, %v1596, %v1595
    %v1598 = vrot.slane %v1581, 5
    %v1599 = vsel %vm171, %v1598, %v1597
    %v1600 = vrot.slane %v1582, 4
    %v1601 = vsel %vm174, %v1600, %v1599
    %v1602 = vrot.slane %v1583, 3
    %v1603 = vsel %vm177, %v1602, %v1601
    %v1604 = vrot.slane %v1584, 2
    %v1605 = vsel %vm180, %v1604, %v1603
    %v1606 = vrot.slane %v1585, 1
    %v1607 = vsel %vm183, %v1606, %v1605
    %v1609 = vsel %vm186, %v1607, 0.0
    %1610 = vadd.xlane.f32.xlu0 %v1609
    %v1611 = vpop.xlane.xlu0 %1610
    %v1612 = vmul.f32 %v1611, %v190
    %v1613 = vadd.f32 %v1612, 1e-05
    %v1614 = vrsqrt.pop %v1613
    %v1616 = vrot.slane %v1614, 1
    %v1617 = vrot.slane %v1614, 2
    %v1618 = vrot.slane %v1614, 3
    %v1619 = vrot.slane %v1614, 4
    %v1620 = vrot.slane %v1614, 5
    %v1621 = vrot.slane %v1614, 6
    %v1622 = vrot.slane %v1614, 7
    %v1631 = vmul.f32 %v1570, %v1614
    %v1632 = vmul.f32 %v1571, %v1616
    %v1633 = vmul.f32 %v1572, %v1617
    %v1634 = vmul.f32 %v1573, %v1618
    %v1635 = vmul.f32 %v1574, %v1619
    %v1636 = vmul.f32 %v1575, %v1620
    %v1637 = vmul.f32 %v1576, %v1621
    %v1638 = vmul.f32 %v1577, %v1622
    %v1639 = vmul.f32 %v1631, %v281
    %v1640 = vmul.f32 %v1632, %v281
    %v1641 = vmul.f32 %v1633, %v281
    %v1642 = vmul.f32 %v1634, %v281
    %v1643 = vmul.f32 %v1635, %v281
    %v1644 = vmul.f32 %v1636, %v281
    %v1645 = vmul.f32 %v1637, %v281
    %v1646 = vmul.f32 %v1638, %v281
    %v1647 = vadd.f32 %v1639, %v295
    %v1648 = vadd.f32 %v1640, %v295
    %v1649 = vadd.f32 %v1641, %v295
    %v1650 = vadd.f32 %v1642, %v295
    %v1651 = vadd.f32 %v1643, %v295
    %v1652 = vadd.f32 %v1644, %v295
    %v1653 = vadd.f32 %v1645, %v295
    %v1654 = vadd.f32 %v1646, %v295
    %v1663 = vrot.slane %v1648, 7
    %v1664 = vsel %vm165, %v1663, %v1647
    %v1665 = vrot.slane %v1649, 6
    %v1666 = vsel %vm168, %v1665, %v1664
    %v1667 = vrot.slane %v1650, 5
    %v1668 = vsel %vm171, %v1667, %v1666
    %v1669 = vrot.slane %v1651, 4
    %v1670 = vsel %vm174, %v1669, %v1668
    %v1671 = vrot.slane %v1652, 3
    %v1672 = vsel %vm177, %v1671, %v1670
    %v1673 = vrot.slane %v1653, 2
    %v1674 = vsel %vm180, %v1673, %v1672
    %v1675 = vrot.slane %v1654, 1
    %v1676 = vsel %vm183, %v1675, %v1674
    %v1677 = vsel %vm186, %v1676, 0
    %1679 = vmatprep.subr.mxu0 0.0
    %1680 = vmatpush1.msra.mxu0 %v127
    %1681 = vmatprep.subr.mxu0 0.0
    %1682 = vmatpush1.msra.mxu0 %v128
    %1683 = vmatprep.subr.mxu0 0.0
    %1684 = vmatpush1.msra.mxu0 0.0
    %1685 = vmatprep.subr.mxu0 0.0
    %1686 = vmatpush1.msra.mxu0 0.0
    %1687 = vmatprep.subr.mxu0 0.0
    %1688 = vmatpush1.msra.mxu0 0.0
    %1689 = vmatprep.subr.mxu0 0.0
    %1690 = vmatpush1.msra.mxu0 0.0
    %1691 = vmatprep.subr.mxu0 0.0
    %1692 = vmatpush1.msra.mxu0 0.0
    %1693 = vmatprep.subr.mxu0 0.0
    %1694 = vmatpush1.msra.mxu0 0.0
    %1695 = vmatprep.subr.mxu0 0.0
    %1696 = vmatpush1.msra.mxu0 0.0
    %1697 = vmatprep.subr.mxu0 0.0
    %1698 = vmatpush1.msra.mxu0 0.0
    %1699 = vmatprep.subr.mxu0 0.0
    %1700 = vmatpush1.msra.mxu0 0.0
    %1701 = vmatprep.subr.mxu0 0.0
    %1702 = vmatpush1.msra.mxu0 0.0
    %1703 = vmatprep.subr.mxu0 0.0
    %1704 = vmatpush1.msra.mxu0 0.0
    %1705 = vmatprep.subr.mxu0 0.0
    %1706 = vmatpush1.msra.mxu0 0.0
    %1707 = vmatprep.subr.mxu0 0.0
    %1708 = vmatpush1.msra.mxu0 0.0
    %1709 = vmatprep.subr.mxu0 0.0
    %1710 = vmatpush1.msra.mxu0 0.0
    %1711 = vmatprep.subr.mxu0 0.0
    %1712 = vmatpush1.msra.mxu0 0.0
    %1713 = vmatprep.subr.mxu0 0.0
    %1714 = vmatpush1.msra.mxu0 0.0
    %1715 = vmatprep.subr.mxu0 0.0
    %1716 = vmatpush1.msra.mxu0 0.0
    %1717 = vmatprep.subr.mxu0 0.0
    %1718 = vmatpush1.msra.mxu0 0.0
    %1719 = vmatprep.subr.mxu0 0.0
    %1720 = vmatpush1.msra.mxu0 0.0
    %1721 = vmatprep.subr.mxu0 0.0
    %1722 = vmatpush1.msra.mxu0 0.0
    %1723 = vmatprep.subr.mxu0 0.0
    %1724 = vmatpush1.msra.mxu0 0.0
    %1725 = vmatprep.subr.mxu0 0.0
    %1726 = vmatpush1.msra.mxu0 0.0
    %1727 = vmatprep.subr.mxu0 0.0
    %1728 = vmatpush1.msra.mxu0 0.0
    %1729 = vmatprep.subr.mxu0 0.0
    %1730 = vmatpush1.msra.mxu0 0.0
    %1731 = vmatprep.subr.mxu0 0.0
    %1732 = vmatpush1.msra.mxu0 0.0
    %1733 = vmatprep.subr.mxu0 0.0
    %1734 = vmatpush1.msra.mxu0 0.0
    %1735 = vmatprep.subr.mxu0 0.0
    %1736 = vmatpush1.msra.mxu0 0.0
    %1737 = vmatprep.subr.mxu0 0.0
    %1738 = vmatpush1.msra.mxu0 0.0
    %1739 = vmatprep.subr.mxu0 0.0
    %1740 = vmatpush1.msra.mxu0 0.0
    %1741 = vmatprep.subr.mxu0 0.0
    %1742 = vmatpush1.msra.mxu0 0.0
    %1743 = vmatprep.mubr.f32.mxu0 0.0
    %1744 = vmatmul.mubr.f32.gmra.mrb[0].mxu0 %v1677
    %v1745 = vpop.f32.mrb[0].mxu0
    %v1746 = vadd.f32 %v129, %v1745
    %v1747 = vpop.f32.mrb[0].mxu0
    %1748 = vdwg.mxu0
    %1749 = vmatprep.subr.mxu0 0.0
    %1750 = vmatpush1.msra.mxu0 %v130
    %1751 = vmatprep.subr.mxu0 0.0
    %1752 = vmatpush1.msra.mxu0 %v131
    %1753 = vmatprep.subr.mxu0 0.0
    %1754 = vmatpush1.msra.mxu0 0.0
    %1755 = vmatprep.subr.mxu0 0.0
    %1756 = vmatpush1.msra.mxu0 0.0
    %1757 = vmatprep.subr.mxu0 0.0
    %1758 = vmatpush1.msra.mxu0 0.0
    %1759 = vmatprep.subr.mxu0 0.0
    %1760 = vmatpush1.msra.mxu0 0.0
    %1761 = vmatprep.subr.mxu0 0.0
    %1762 = vmatpush1.msra.mxu0 0.0
    %1763 = vmatprep.subr.mxu0 0.0
    %1764 = vmatpush1.msra.mxu0 0.0
    %1765 = vmatprep.subr.mxu0 0.0
    %1766 = vmatpush1.msra.mxu0 0.0
    %1767 = vmatprep.subr.mxu0 0.0
    %1768 = vmatpush1.msra.mxu0 0.0
    %1769 = vmatprep.subr.mxu0 0.0
    %1770 = vmatpush1.msra.mxu0 0.0
    %1771 = vmatprep.subr.mxu0 0.0
    %1772 = vmatpush1.msra.mxu0 0.0
    %1773 = vmatprep.subr.mxu0 0.0
    %1774 = vmatpush1.msra.mxu0 0.0
    %1775 = vmatprep.subr.mxu0 0.0
    %1776 = vmatpush1.msra.mxu0 0.0
    %1777 = vmatprep.subr.mxu0 0.0
    %1778 = vmatpush1.msra.mxu0 0.0
    %1779 = vmatprep.subr.mxu0 0.0
    %1780 = vmatpush1.msra.mxu0 0.0
    %1781 = vmatprep.subr.mxu0 0.0
    %1782 = vmatpush1.msra.mxu0 0.0
    %1783 = vmatprep.subr.mxu0 0.0
    %1784 = vmatpush1.msra.mxu0 0.0
    %1785 = vmatprep.subr.mxu0 0.0
    %1786 = vmatpush1.msra.mxu0 0.0
    %1787 = vmatprep.subr.mxu0 0.0
    %1788 = vmatpush1.msra.mxu0 0.0
    %1789 = vmatprep.subr.mxu0 0.0
    %1790 = vmatpush1.msra.mxu0 0.0
    %1791 = vmatprep.subr.mxu0 0.0
    %1792 = vmatpush1.msra.mxu0 0.0
    %1793 = vmatprep.subr.mxu0 0.0
    %1794 = vmatpush1.msra.mxu0 0.0
    %1795 = vmatprep.subr.mxu0 0.0
    %1796 = vmatpush1.msra.mxu0 0.0
    %1797 = vmatprep.subr.mxu0 0.0
    %1798 = vmatpush1.msra.mxu0 0.0
    %1799 = vmatprep.subr.mxu0 0.0
    %1800 = vmatpush1.msra.mxu0 0.0
    %1801 = vmatprep.subr.mxu0 0.0
    %1802 = vmatpush1.msra.mxu0 0.0
    %1803 = vmatprep.subr.mxu0 0.0
    %1804 = vmatpush1.msra.mxu0 0.0
    %1805 = vmatprep.subr.mxu0 0.0
    %1806 = vmatpush1.msra.mxu0 0.0
    %1807 = vmatprep.subr.mxu0 0.0
    %1808 = vmatpush1.msra.mxu0 0.0
    %1809 = vmatprep.subr.mxu0 0.0
    %1810 = vmatpush1.msra.mxu0 0.0
    %1811 = vmatprep.subr.mxu0 0.0
    %1812 = vmatpush1.msra.mxu0 0.0
    %1813 = vmatprep.mubr.f32.mxu0 0.0
    %1814 = vmatmul.mubr.f32.gmra.mrb[0].mxu0 %v1677
    %v1815 = vpop.f32.mrb[0].mxu0
    %v1816 = vadd.f32 %v132, %v1815
    %v1817 = vpop.f32.mrb[0].mxu0
    %1818 = vdwg.mxu0
    %1820 = vrot.lane.b32.xlu0 %v1816, 96
    %v1821 = vpop.permute.xlu0 %1820
    %v1822 = vsel %vm472, %v1816, 0
    %v1824 = vsel %vm472, %v1821, 0
    %1826 = vmatprep.subr.mxu0 0.0
    %1827 = vmatpush1.xpose.msra.mxu0 %v1824
    %1828 = vmatprep.subr.mxu0 0.0
    %1829 = vmatpush1.xpose.msra.mxu0 0.0
    %1830 = vmatprep.subr.mxu0 0.0
    %1831 = vmatpush1.xpose.msra.mxu0 0.0
    %1832 = vmatprep.subr.mxu0 0.0
    %1833 = vmatpush1.xpose.msra.mxu0 0.0
    %1834 = vmatprep.subr.mxu0 0.0
    %1835 = vmatpush1.xpose.msra.mxu0 0.0
    %1836 = vmatprep.subr.mxu0 0.0
    %1837 = vmatpush1.xpose.msra.mxu0 0.0
    %1838 = vmatprep.subr.mxu0 0.0
    %1839 = vmatpush1.xpose.msra.mxu0 0.0
    %1840 = vmatprep.subr.mxu0 0.0
    %1841 = vmatpush1.xpose.msra.mxu0 0.0
    %1842 = vmatprep.subr.mxu0 0.0
    %1843 = vmatpush1.xpose.msra.mxu0 0.0
    %1844 = vmatprep.subr.mxu0 0.0
    %1845 = vmatpush1.xpose.msra.mxu0 0.0
    %1846 = vmatprep.subr.mxu0 0.0
    %1847 = vmatpush1.xpose.msra.mxu0 0.0
    %1848 = vmatprep.subr.mxu0 0.0
    %1849 = vmatpush1.xpose.msra.mxu0 0.0
    %1850 = vmatprep.subr.mxu0 0.0
    %1851 = vmatpush1.xpose.msra.mxu0 0.0
    %1852 = vmatprep.subr.mxu0 0.0
    %1853 = vmatpush1.xpose.msra.mxu0 0.0
    %1854 = vmatprep.subr.mxu0 0.0
    %1855 = vmatpush1.xpose.msra.mxu0 0.0
    %1856 = vmatprep.subr.mxu0 0.0
    %1857 = vmatpush1.xpose.msra.mxu0 0.0
    %1858 = vmatprep.subr.mxu0 0.0
    %1859 = vmatpush1.xpose.msra.mxu0 0.0
    %1860 = vmatprep.subr.mxu0 0.0
    %1861 = vmatpush1.xpose.msra.mxu0 0.0
    %1862 = vmatprep.subr.mxu0 0.0
    %1863 = vmatpush1.xpose.msra.mxu0 0.0
    %1864 = vmatprep.subr.mxu0 0.0
    %1865 = vmatpush1.xpose.msra.mxu0 0.0
    %1866 = vmatprep.subr.mxu0 0.0
    %1867 = vmatpush1.xpose.msra.mxu0 0.0
    %1868 = vmatprep.subr.mxu0 0.0
    %1869 = vmatpush1.xpose.msra.mxu0 0.0
    %1870 = vmatprep.subr.mxu0 0.0
    %1871 = vmatpush1.xpose.msra.mxu0 0.0
    %1872 = vmatprep.subr.mxu0 0.0
    %1873 = vmatpush1.xpose.msra.mxu0 0.0
    %1874 = vmatprep.subr.mxu0 0.0
    %1875 = vmatpush1.xpose.msra.mxu0 0.0
    %1876 = vmatprep.subr.mxu0 0.0
    %1877 = vmatpush1.xpose.msra.mxu0 0.0
    %1878 = vmatprep.subr.mxu0 0.0
    %1879 = vmatpush1.xpose.msra.mxu0 0.0
    %1880 = vmatprep.subr.mxu0 0.0
    %1881 = vmatpush1.xpose.msra.mxu0 0.0
    %1882 = vmatprep.subr.mxu0 0.0
    %1883 = vmatpush1.xpose.msra.mxu0 0.0
    %1884 = vmatprep.subr.mxu0 0.0
    %1885 = vmatpush1.xpose.msra.mxu0 0.0
    %1886 = vmatprep.subr.mxu0 0.0
    %1887 = vmatpush1.xpose.msra.mxu0 0.0
    %1888 = vmatprep.subr.mxu0 0.0
    %1889 = vmatpush1.xpose.msra.mxu0 0.0
    %1890 = vmatprep.mubr.f32.mxu0 0.0
    %1891 = vmatmul.mubr.f32.gmra.mrb[0].mxu0 %v1822
    %v1892 = vpop.f32.mrb[0].mxu0
    %v1893 = vadd.f32 0.0, %v1892
    %v1894 = vpop.f32.mrb[0].mxu0
    %1895 = vdwg.mxu0
    %v1896 = vsel %vm472, %v1893, -inf
    %1897 = vmax.xlane.f32.xlu0 %v1896
    %v1898 = vpop.xlane.xlu0 %1897
    %v1899 = vsub.f32 %v1893, %v1898
    %v1900 = vmul.f32 %v1899, 1.442695
    %v1901 = vpow.pop %v1900
    %v1902 = vsel %vm472, %v1901, 0.0
    %1903 = vadd.xlane.f32.xlu0 %v1902
    %v1904 = vpop.xlane.xlu0 %1903
    %1905 = vrot.lane.b32.xlu0 %v1816, 64
    %v1906 = vpop.permute.xlu0 %1905
    %v1909 = vsel %vm472, %v1901, 0
    %1911 = vmatprep.subr.mxu0 0.0
    %1912 = vmatpush1.msra.mxu0 %v1906
    %1913 = vmatprep.subr.mxu0 0.0
    %1914 = vmatpush1.msra.mxu0 0.0
    %1915 = vmatprep.subr.mxu0 0.0
    %1916 = vmatpush1.msra.mxu0 0.0
    %1917 = vmatprep.subr.mxu0 0.0
    %1918 = vmatpush1.msra.mxu0 0.0
    %1919 = vmatprep.subr.mxu0 0.0
    %1920 = vmatpush1.msra.mxu0 0.0
    %1921 = vmatprep.subr.mxu0 0.0
    %1922 = vmatpush1.msra.mxu0 0.0
    %1923 = vmatprep.subr.mxu0 0.0
    %1924 = vmatpush1.msra.mxu0 0.0
    %1925 = vmatprep.subr.mxu0 0.0
    %1926 = vmatpush1.msra.mxu0 0.0
    %1927 = vmatprep.subr.mxu0 0.0
    %1928 = vmatpush1.msra.mxu0 0.0
    %1929 = vmatprep.subr.mxu0 0.0
    %1930 = vmatpush1.msra.mxu0 0.0
    %1931 = vmatprep.subr.mxu0 0.0
    %1932 = vmatpush1.msra.mxu0 0.0
    %1933 = vmatprep.subr.mxu0 0.0
    %1934 = vmatpush1.msra.mxu0 0.0
    %1935 = vmatprep.subr.mxu0 0.0
    %1936 = vmatpush1.msra.mxu0 0.0
    %1937 = vmatprep.subr.mxu0 0.0
    %1938 = vmatpush1.msra.mxu0 0.0
    %1939 = vmatprep.subr.mxu0 0.0
    %1940 = vmatpush1.msra.mxu0 0.0
    %1941 = vmatprep.subr.mxu0 0.0
    %1942 = vmatpush1.msra.mxu0 0.0
    %1943 = vmatprep.subr.mxu0 0.0
    %1944 = vmatpush1.msra.mxu0 0.0
    %1945 = vmatprep.subr.mxu0 0.0
    %1946 = vmatpush1.msra.mxu0 0.0
    %1947 = vmatprep.subr.mxu0 0.0
    %1948 = vmatpush1.msra.mxu0 0.0
    %1949 = vmatprep.subr.mxu0 0.0
    %1950 = vmatpush1.msra.mxu0 0.0
    %1951 = vmatprep.subr.mxu0 0.0
    %1952 = vmatpush1.msra.mxu0 0.0
    %1953 = vmatprep.subr.mxu0 0.0
    %1954 = vmatpush1.msra.mxu0 0.0
    %1955 = vmatprep.subr.mxu0 0.0
    %1956 = vmatpush1.msra.mxu0 0.0
    %1957 = vmatprep.subr.mxu0 0.0
    %1958 = vmatpush1.msra.mxu0 0.0
    %1959 = vmatprep.subr.mxu0 0.0
    %1960 = vmatpush1.msra.mxu0 0.0
    %1961 = vmatprep.subr.mxu0 0.0
    %1962 = vmatpush1.msra.mxu0 0.0
    %1963 = vmatprep.subr.mxu0 0.0
    %1964 = vmatpush1.msra.mxu0 0.0
    %1965 = vmatprep.subr.mxu0 0.0
    %1966 = vmatpush1.msra.mxu0 0.0
    %1967 = vmatprep.subr.mxu0 0.0
    %1968 = vmatpush1.msra.mxu0 0.0
    %1969 = vmatprep.subr.mxu0 0.0
    %1970 = vmatpush1.msra.mxu0 0.0
    %1971 = vmatprep.subr.mxu0 0.0
    %1972 = vmatpush1.msra.mxu0 0.0
    %1973 = vmatprep.subr.mxu0 0.0
    %1974 = vmatpush1.msra.mxu0 0.0
    %1975 = vmatprep.mubr.f32.mxu0 0.0
    %1976 = vmatmul.mubr.f32.gmra.mrb[0].mxu0 %v1909
    %v1977 = vpop.f32.mrb[0].mxu0
    %v1978 = vadd.f32 0.0, %v1977
    %v1979 = vpop.f32.mrb[0].mxu0
    %1980 = vdwg.mxu0
    %v1981 = vrcp.pop %v1904
    %v1982 = vmul.f32 %v1904, %v1981
    %v1983 = vsub.f32 2.0, %v1982
    %v1984 = vmul.f32 %v1981, %v1983
    %v1985 = vmul.f32 %v1978, %v1984
    %1986 = vrot.lane.b32.xlu0 %v1816, 120
    %v1987 = vpop.permute.xlu0 %1986
    %1988 = vrot.lane.b32.xlu0 %v1816, 88
    %v1989 = vpop.permute.xlu0 %1988
    %v1990 = vsel %vm472, %v1987, 0
    %v1992 = vsel %vm472, %v1989, 0
    %1994 = vmatprep.subr.mxu0 0.0
    %1995 = vmatpush1.xpose.msra.mxu0 %v1992
    %1996 = vmatprep.subr.mxu0 0.0
    %1997 = vmatpush1.xpose.msra.mxu0 0.0
    %1998 = vmatprep.subr.mxu0 0.0
    %1999 = vmatpush1.xpose.msra.mxu0 0.0
    %2000 = vmatprep.subr.mxu0 0.0
    %2001 = vmatpush1.xpose.msra.mxu0 0.0
    %2002 = vmatprep.subr.mxu0 0.0
    %2003 = vmatpush1.xpose.msra.mxu0 0.0
    %2004 = vmatprep.subr.mxu0 0.0
    %2005 = vmatpush1.xpose.msra.mxu0 0.0
    %2006 = vmatprep.subr.mxu0 0.0
    %2007 = vmatpush1.xpose.msra.mxu0 0.0
    %2008 = vmatprep.subr.mxu0 0.0
    %2009 = vmatpush1.xpose.msra.mxu0 0.0
    %2010 = vmatprep.subr.mxu0 0.0
    %2011 = vmatpush1.xpose.msra.mxu0 0.0
    %2012 = vmatprep.subr.mxu0 0.0
    %2013 = vmatpush1.xpose.msra.mxu0 0.0
    %2014 = vmatprep.subr.mxu0 0.0
    %2015 = vmatpush1.xpose.msra.mxu0 0.0
    %2016 = vmatprep.subr.mxu0 0.0
    %2017 = vmatpush1.xpose.msra.mxu0 0.0
    %2018 = vmatprep.subr.mxu0 0.0
    %2019 = vmatpush1.xpose.msra.mxu0 0.0
    %2020 = vmatprep.subr.mxu0 0.0
    %2021 = vmatpush1.xpose.msra.mxu0 0.0
    %2022 = vmatprep.subr.mxu0 0.0
    %2023 = vmatpush1.xpose.msra.mxu0 0.0
    %2024 = vmatprep.subr.mxu0 0.0
    %2025 = vmatpush1.xpose.msra.mxu0 0.0
    %2026 = vmatprep.subr.mxu0 0.0
    %2027 = vmatpush1.xpose.msra.mxu0 0.0
    %2028 = vmatprep.subr.mxu0 0.0
    %2029 = vmatpush1.xpose.msra.mxu0 0.0
    %2030 = vmatprep.subr.mxu0 0.0
    %2031 = vmatpush1.xpose.msra.mxu0 0.0
    %2032 = vmatprep.subr.mxu0 0.0
    %2033 = vmatpush1.xpose.msra.mxu0 0.0
    %2034 = vmatprep.subr.mxu0 0.0
    %2035 = vmatpush1.xpose.msra.mxu0 0.0
    %2036 = vmatprep.subr.mxu0 0.0
    %2037 = vmatpush1.xpose.msra.mxu0 0.0
    %2038 = vmatprep.subr.mxu0 0.0
    %2039 = vmatpush1.xpose.msra.mxu0 0.0
    %2040 = vmatprep.subr.mxu0 0.0
    %2041 = vmatpush1.xpose.msra.mxu0 0.0
    %2042 = vmatprep.subr.mxu0 0.0
    %2043 = vmatpush1.xpose.msra.mxu0 0.0
    %2044 = vmatprep.subr.mxu0 0.0
    %2045 = vmatpush1.xpose.msra.mxu0 0.0
    %2046 = vmatprep.subr.mxu0 0.0
    %2047 = vmatpush1.xpose.msra.mxu0 0.0
    %2048 = vmatprep.subr.mxu0 0.0
    %2049 = vmatpush1.xpose.msra.mxu0 0.0
    %2050 = vmatprep.subr.mxu0 0.0
    %2051 = vmatpush1.xpose.msra.mxu0 0.0
    %2052 = vmatprep.subr.mxu0 0.0
    %2053 = vmatpush1.xpose.msra.mxu0 0.0
    %2054 = vmatprep.subr.mxu0 0.0
    %2055 = vmatpush1.xpose.msra.mxu0 0.0
    %2056 = vmatprep.subr.mxu0 0.0
    %2057 = vmatpush1.xpose.msra.mxu0 0.0
    %2058 = vmatprep.mubr.f32.mxu0 0.0
    %2059 = vmatmul.mubr.f32.gmra.mrb[0].mxu0 %v1990
    %v2060 = vpop.f32.mrb[0].mxu0
    %v2061 = vadd.f32 0.0, %v2060
    %v2062 = vpop.f32.mrb[0].mxu0
    %2063 = vdwg.mxu0
    %v2064 = vsel %vm472, %v2061, -inf
    %2065 = vmax.xlane.f32.xlu0 %v2064
    %v2066 = vpop.xlane.xlu0 %2065
    %v2067 = vsub.f32 %v2061, %v2066
    %v2068 = vmul.f32 %v2067, 1.442695
    %v2069 = vpow.pop %v2068
    %v2070 = vsel %vm472, %v2069, 0.0
    %2071 = vadd.xlane.f32.xlu0 %v2070
    %v2072 = vpop.xlane.xlu0 %2071
    %2073 = vrot.lane.b32.xlu0 %v1816, 56
    %v2074 = vpop.permute.xlu0 %2073
    %v2077 = vsel %vm472, %v2069, 0
    %2079 = vmatprep.subr.mxu0 0.0
    %2080 = vmatpush1.msra.mxu0 %v2074
    %2081 = vmatprep.subr.mxu0 0.0
    %2082 = vmatpush1.msra.mxu0 0.0
    %2083 = vmatprep.subr.mxu0 0.0
    %2084 = vmatpush1.msra.mxu0 0.0
    %2085 = vmatprep.subr.mxu0 0.0
    %2086 = vmatpush1.msra.mxu0 0.0
    %2087 = vmatprep.subr.mxu0 0.0
    %2088 = vmatpush1.msra.mxu0 0.0
    %2089 = vmatprep.subr.mxu0 0.0
    %2090 = vmatpush1.msra.mxu0 0.0
    %2091 = vmatprep.subr.mxu0 0.0
    %2092 = vmatpush1.msra.mxu0 0.0
    %2093 = vmatprep.subr.mxu0 0.0
    %2094 = vmatpush1.msra.mxu0 0.0
    %2095 = vmatprep.subr.mxu0 0.0
    %2096 = vmatpush1.msra.mxu0 0.0
    %2097 = vmatprep.subr.mxu0 0.0
    %2098 = vmatpush1.msra.mxu0 0.0
    %2099 = vmatprep.subr.mxu0 0.0
    %2100 = vmatpush1.msra.mxu0 0.0
    %2101 = vmatprep.subr.mxu0 0.0
    %2102 = vmatpush1.msra.mxu0 0.0
    %2103 = vmatprep.subr.mxu0 0.0
    %2104 = vmatpush1.msra.mxu0 0.0
    %2105 = vmatprep.subr.mxu0 0.0
    %2106 = vmatpush1.msra.mxu0 0.0
    %2107 = vmatprep.subr.mxu0 0.0
    %2108 = vmatpush1.msra.mxu0 0.0
    %2109 = vmatprep.subr.mxu0 0.0
    %2110 = vmatpush1.msra.mxu0 0.0
    %2111 = vmatprep.subr.mxu0 0.0
    %2112 = vmatpush1.msra.mxu0 0.0
    %2113 = vmatprep.subr.mxu0 0.0
    %2114 = vmatpush1.msra.mxu0 0.0
    %2115 = vmatprep.subr.mxu0 0.0
    %2116 = vmatpush1.msra.mxu0 0.0
    %2117 = vmatprep.subr.mxu0 0.0
    %2118 = vmatpush1.msra.mxu0 0.0
    %2119 = vmatprep.subr.mxu0 0.0
    %2120 = vmatpush1.msra.mxu0 0.0
    %2121 = vmatprep.subr.mxu0 0.0
    %2122 = vmatpush1.msra.mxu0 0.0
    %2123 = vmatprep.subr.mxu0 0.0
    %2124 = vmatpush1.msra.mxu0 0.0
    %2125 = vmatprep.subr.mxu0 0.0
    %2126 = vmatpush1.msra.mxu0 0.0
    %2127 = vmatprep.subr.mxu0 0.0
    %2128 = vmatpush1.msra.mxu0 0.0
    %2129 = vmatprep.subr.mxu0 0.0
    %2130 = vmatpush1.msra.mxu0 0.0
    %2131 = vmatprep.subr.mxu0 0.0
    %2132 = vmatpush1.msra.mxu0 0.0
    %2133 = vmatprep.subr.mxu0 0.0
    %2134 = vmatpush1.msra.mxu0 0.0
    %2135 = vmatprep.subr.mxu0 0.0
    %2136 = vmatpush1.msra.mxu0 0.0
    %2137 = vmatprep.subr.mxu0 0.0
    %2138 = vmatpush1.msra.mxu0 0.0
    %2139 = vmatprep.subr.mxu0 0.0
    %2140 = vmatpush1.msra.mxu0 0.0
    %2141 = vmatprep.subr.mxu0 0.0
    %2142 = vmatpush1.msra.mxu0 0.0
    %2143 = vmatprep.mubr.f32.mxu0 0.0
    %2144 = vmatmul.mubr.f32.gmra.mrb[0].mxu0 %v2077
    %v2145 = vpop.f32.mrb[0].mxu0
    %v2146 = vadd.f32 0.0, %v2145
    %v2147 = vpop.f32.mrb[0].mxu0
    %2148 = vdwg.mxu0
    %v2149 = vrcp.pop %v2072
    %v2150 = vmul.f32 %v2072, %v2149
    %v2151 = vsub.f32 2.0, %v2150
    %v2152 = vmul.f32 %v2149, %v2151
    %v2153 = vmul.f32 %v2146, %v2152
    %2154 = vrot.lane.b32.xlu0 %v1816, 112
    %v2155 = vpop.permute.xlu0 %2154
    %2156 = vrot.lane.b32.xlu0 %v1816, 80
    %v2157 = vpop.permute.xlu0 %2156
    %v2158 = vsel %vm472, %v2155, 0
    %v2160 = vsel %vm472, %v2157, 0
    %2162 = vmatprep.subr.mxu0 0.0
    %2163 = vmatpush1.xpose.msra.mxu0 %v2160
    %2164 = vmatprep.subr.mxu0 0.0
    %2165 = vmatpush1.xpose.msra.mxu0 0.0
    %2166 = vmatprep.subr.mxu0 0.0
    %2167 = vmatpush1.xpose.msra.mxu0 0.0
    %2168 = vmatprep.subr.mxu0 0.0
    %2169 = vmatpush1.xpose.msra.mxu0 0.0
    %2170 = vmatprep.subr.mxu0 0.0
    %2171 = vmatpush1.xpose.msra.mxu0 0.0
    %2172 = vmatprep.subr.mxu0 0.0
    %2173 = vmatpush1.xpose.msra.mxu0 0.0
    %2174 = vmatprep.subr.mxu0 0.0
    %2175 = vmatpush1.xpose.msra.mxu0 0.0
    %2176 = vmatprep.subr.mxu0 0.0
    %2177 = vmatpush1.xpose.msra.mxu0 0.0
    %2178 = vmatprep.subr.mxu0 0.0
    %2179 = vmatpush1.xpose.msra.mxu0 0.0
    %2180 = vmatprep.subr.mxu0 0.0
    %2181 = vmatpush1.xpose.msra.mxu0 0.0
    %2182 = vmatprep.subr.mxu0 0.0
    %2183 = vmatpush1.xpose.msra.mxu0 0.0
    %2184 = vmatprep.subr.mxu0 0.0
    %2185 = vmatpush1.xpose.msra.mxu0 0.0
    %2186 = vmatprep.subr.mxu0 0.0
    %2187 = vmatpush1.xpose.msra.mxu0 0.0
    %2188 = vmatprep.subr.mxu0 0.0
    %2189 = vmatpush1.xpose.msra.mxu0 0.0
    %2190 = vmatprep.subr.mxu0 0.0
    %2191 = vmatpush1.xpose.msra.mxu0 0.0
    %2192 = vmatprep.subr.mxu0 0.0
    %2193 = vmatpush1.xpose.msra.mxu0 0.0
    %2194 = vmatprep.subr.mxu0 0.0
    %2195 = vmatpush1.xpose.msra.mxu0 0.0
    %2196 = vmatprep.subr.mxu0 0.0
    %2197 = vmatpush1.xpose.msra.mxu0 0.0
    %2198 = vmatprep.subr.mxu0 0.0
    %2199 = vmatpush1.xpose.msra.mxu0 0.0
    %2200 = vmatprep.subr.mxu0 0.0
    %2201 = vmatpush1.xpose.msra.mxu0 0.0
    %2202 = vmatprep.subr.mxu0 0.0
    %2203 = vmatpush1.xpose.msra.mxu0 0.0
    %2204 = vmatprep.subr.mxu0 0.0
    %2205 = vmatpush1.xpose.msra.mxu0 0.0
    %2206 = vmatprep.subr.mxu0 0.0
    %2207 = vmatpush1.xpose.msra.mxu0 0.0
    %2208 = vmatprep.subr.mxu0 0.0
    %2209 = vmatpush1.xpose.msra.mxu0 0.0
    %2210 = vmatprep.subr.mxu0 0.0
    %2211 = vmatpush1.xpose.msra.mxu0 0.0
    %2212 = vmatprep.subr.mxu0 0.0
    %2213 = vmatpush1.xpose.msra.mxu0 0.0
    %2214 = vmatprep.subr.mxu0 0.0
    %2215 = vmatpush1.xpose.msra.mxu0 0.0
    %2216 = vmatprep.subr.mxu0 0.0
    %2217 = vmatpush1.xpose.msra.mxu0 0.0
    %2218 = vmatprep.subr.mxu0 0.0
    %2219 = vmatpush1.xpose.msra.mxu0 0.0
    %2220 = vmatprep.subr.mxu0 0.0
    %2221 = vmatpush1.xpose.msra.mxu0 0.0
    %2222 = vmatprep.subr.mxu0 0.0
    %2223 = vmatpush1.xpose.msra.mxu0 0.0
    %2224 = vmatprep.subr.mxu0 0.0
    %2225 = vmatpush1.xpose.msra.mxu0 0.0
    %2226 = vmatprep.mubr.f32.mxu0 0.0
    %2227 = vmatmul.mubr.f32.gmra.mrb[0].mxu0 %v2158
    %v2228 = vpop.f32.mrb[0].mxu0
    %v2229 = vadd.f32 0.0, %v2228
    %v2230 = vpop.f32.mrb[0].mxu0
    %2231 = vdwg.mxu0
    %v2232 = vsel %vm472, %v2229, -inf
    %2233 = vmax.xlane.f32.xlu0 %v2232
    %v2234 = vpop.xlane.xlu0 %2233
    %v2235 = vsub.f32 %v2229, %v2234
    %v2236 = vmul.f32 %v2235, 1.442695
    %v2237 = vpow.pop %v2236
    %v2238 = vsel %vm472, %v2237, 0.0
    %2239 = vadd.xlane.f32.xlu0 %v2238
    %v2240 = vpop.xlane.xlu0 %2239
    %2241 = vrot.lane.b32.xlu0 %v1816, 48
    %v2242 = vpop.permute.xlu0 %2241
    %v2245 = vsel %vm472, %v2237, 0
    %2247 = vmatprep.subr.mxu0 0.0
    %2248 = vmatpush1.msra.mxu0 %v2242
    %2249 = vmatprep.subr.mxu0 0.0
    %2250 = vmatpush1.msra.mxu0 0.0
    %2251 = vmatprep.subr.mxu0 0.0
    %2252 = vmatpush1.msra.mxu0 0.0
    %2253 = vmatprep.subr.mxu0 0.0
    %2254 = vmatpush1.msra.mxu0 0.0
    %2255 = vmatprep.subr.mxu0 0.0
    %2256 = vmatpush1.msra.mxu0 0.0
    %2257 = vmatprep.subr.mxu0 0.0
    %2258 = vmatpush1.msra.mxu0 0.0
    %2259 = vmatprep.subr.mxu0 0.0
    %2260 = vmatpush1.msra.mxu0 0.0
    %2261 = vmatprep.subr.mxu0 0.0
    %2262 = vmatpush1.msra.mxu0 0.0
    %2263 = vmatprep.subr.mxu0 0.0
    %2264 = vmatpush1.msra.mxu0 0.0
    %2265 = vmatprep.subr.mxu0 0.0
    %2266 = vmatpush1.msra.mxu0 0.0
    %2267 = vmatprep.subr.mxu0 0.0
    %2268 = vmatpush1.msra.mxu0 0.0
    %2269 = vmatprep.subr.mxu0 0.0
    %2270 = vmatpush1.msra.mxu0 0.0
    %2271 = vmatprep.subr.mxu0 0.0
    %2272 = vmatpush1.msra.mxu0 0.0
    %2273 = vmatprep.subr.mxu0 0.0
    %2274 = vmatpush1.msra.mxu0 0.0
    %2275 = vmatprep.subr.mxu0 0.0
    %2276 = vmatpush1.msra.mxu0 0.0
    %2277 = vmatprep.subr.mxu0 0.0
    %2278 = vmatpush1.msra.mxu0 0.0
    %2279 = vmatprep.subr.mxu0 0.0
    %2280 = vmatpush1.msra.mxu0 0.0
    %2281 = vmatprep.subr.mxu0 0.0
    %2282 = vmatpush1.msra.mxu0 0.0
    %2283 = vmatprep.subr.mxu0 0.0
    %2284 = vmatpush1.msra.mxu0 0.0
    %2285 = vmatprep.subr.mxu0 0.0
    %2286 = vmatpush1.msra.mxu0 0.0
    %2287 = vmatprep.subr.mxu0 0.0
    %2288 = vmatpush1.msra.mxu0 0.0
    %2289 = vmatprep.subr.mxu0 0.0
    %2290 = vmatpush1.msra.mxu0 0.0
    %2291 = vmatprep.subr.mxu0 0.0
    %2292 = vmatpush1.msra.mxu0 0.0
    %2293 = vmatprep.subr.mxu0 0.0
    %2294 = vmatpush1.msra.mxu0 0.0
    %2295 = vmatprep.subr.mxu0 0.0
    %2296 = vmatpush1.msra.mxu0 0.0
    %2297 = vmatprep.subr.mxu0 0.0
    %2298 = vmatpush1.msra.mxu0 0.0
    %2299 = vmatprep.subr.mxu0 0.0
    %2300 = vmatpush1.msra.mxu0 0.0
    %2301 = vmatprep.subr.mxu0 0.0
    %2302 = vmatpush1.msra.mxu0 0.0
    %2303 = vmatprep.subr.mxu0 0.0
    %2304 = vmatpush1.msra.mxu0 0.0
    %2305 = vmatprep.subr.mxu0 0.0
    %2306 = vmatpush1.msra.mxu0 0.0
    %2307 = vmatprep.subr.mxu0 0.0
    %2308 = vmatpush1.msra.mxu0 0.0
    %2309 = vmatprep.subr.mxu0 0.0
    %2310 = vmatpush1.msra.mxu0 0.0
    %2311 = vmatprep.mubr.f32.mxu0 0.0
    %2312 = vmatmul.mubr.f32.gmra.mrb[0].mxu0 %v2245
    %v2313 = vpop.f32.mrb[0].mxu0
    %v2314 = vadd.f32 0.0, %v2313
    %v2315 = vpop.f32.mrb[0].mxu0
    %2316 = vdwg.mxu0
    %v2317 = vrcp.pop %v2240
    %v2318 = vmul.f32 %v2240, %v2317
    %v2319 = vsub.f32 2.0, %v2318
    %v2320 = vmul.f32 %v2317, %v2319
    %v2321 = vmul.f32 %v2314, %v2320
    %2322 = vrot.lane.b32.xlu0 %v1816, 104
    %v2323 = vpop.permute.xlu0 %2322
    %2324 = vrot.lane.b32.xlu0 %v1816, 72
    %v2325 = vpop.permute.xlu0 %2324
    %v2326 = vsel %vm472, %v2323, 0
    %v2328 = vsel %vm472, %v2325, 0
    %2330 = vmatprep.subr.mxu0 0.0
    %2331 = vmatpush1.xpose.msra.mxu0 %v2328
    %2332 = vmatprep.subr.mxu0 0.0
    %2333 = vmatpush1.xpose.msra.mxu0 0.0
    %2334 = vmatprep.subr.mxu0 0.0
    %2335 = vmatpush1.xpose.msra.mxu0 0.0
    %2336 = vmatprep.subr.mxu0 0.0
    %2337 = vmatpush1.xpose.msra.mxu0 0.0
    %2338 = vmatprep.subr.mxu0 0.0
    %2339 = vmatpush1.xpose.msra.mxu0 0.0
    %2340 = vmatprep.subr.mxu0 0.0
    %2341 = vmatpush1.xpose.msra.mxu0 0.0
    %2342 = vmatprep.subr.mxu0 0.0
    %2343 = vmatpush1.xpose.msra.mxu0 0.0
    %2344 = vmatprep.subr.mxu0 0.0
    %2345 = vmatpush1.xpose.msra.mxu0 0.0
    %2346 = vmatprep.subr.mxu0 0.0
    %2347 = vmatpush1.xpose.msra.mxu0 0.0
    %2348 = vmatprep.subr.mxu0 0.0
    %2349 = vmatpush1.xpose.msra.mxu0 0.0
    %2350 = vmatprep.subr.mxu0 0.0
    %2351 = vmatpush1.xpose.msra.mxu0 0.0
    %2352 = vmatprep.subr.mxu0 0.0
    %2353 = vmatpush1.xpose.msra.mxu0 0.0
    %2354 = vmatprep.subr.mxu0 0.0
    %2355 = vmatpush1.xpose.msra.mxu0 0.0
    %2356 = vmatprep.subr.mxu0 0.0
    %2357 = vmatpush1.xpose.msra.mxu0 0.0
    %2358 = vmatprep.subr.mxu0 0.0
    %2359 = vmatpush1.xpose.msra.mxu0 0.0
    %2360 = vmatprep.subr.mxu0 0.0
    %2361 = vmatpush1.xpose.msra.mxu0 0.0
    %2362 = vmatprep.subr.mxu0 0.0
    %2363 = vmatpush1.xpose.msra.mxu0 0.0
    %2364 = vmatprep.subr.mxu0 0.0
    %2365 = vmatpush1.xpose.msra.mxu0 0.0
    %2366 = vmatprep.subr.mxu0 0.0
    %2367 = vmatpush1.xpose.msra.mxu0 0.0
    %2368 = vmatprep.subr.mxu0 0.0
    %2369 = vmatpush1.xpose.msra.mxu0 0.0
    %2370 = vmatprep.subr.mxu0 0.0
    %2371 = vmatpush1.xpose.msra.mxu0 0.0
    %2372 = vmatprep.subr.mxu0 0.0
    %2373 = vmatpush1.xpose.msra.mxu0 0.0
    %2374 = vmatprep.subr.mxu0 0.0
    %2375 = vmatpush1.xpose.msra.mxu0 0.0
    %2376 = vmatprep.subr.mxu0 0.0
    %2377 = vmatpush1.xpose.msra.mxu0 0.0
    %2378 = vmatprep.subr.mxu0 0.0
    %2379 = vmatpush1.xpose.msra.mxu0 0.0
    %2380 = vmatprep.subr.mxu0 0.0
    %2381 = vmatpush1.xpose.msra.mxu0 0.0
    %2382 = vmatprep.subr.mxu0 0.0
    %2383 = vmatpush1.xpose.msra.mxu0 0.0
    %2384 = vmatprep.subr.mxu0 0.0
    %2385 = vmatpush1.xpose.msra.mxu0 0.0
    %2386 = vmatprep.subr.mxu0 0.0
    %2387 = vmatpush1.xpose.msra.mxu0 0.0
    %2388 = vmatprep.subr.mxu0 0.0
    %2389 = vmatpush1.xpose.msra.mxu0 0.0
    %2390 = vmatprep.subr.mxu0 0.0
    %2391 = vmatpush1.xpose.msra.mxu0 0.0
    %2392 = vmatprep.subr.mxu0 0.0
    %2393 = vmatpush1.xpose.msra.mxu0 0.0
    %2394 = vmatprep.mubr.f32.mxu0 0.0
    %2395 = vmatmul.mubr.f32.gmra.mrb[0].mxu0 %v2326
    %v2396 = vpop.f32.mrb[0].mxu0
    %v2397 = vadd.f32 0.0, %v2396
    %v2398 = vpop.f32.mrb[0].mxu0
    %2399 = vdwg.mxu0
    %v2400 = vsel %vm472, %v2397, -inf
    %2401 = vmax.xlane.f32.xlu0 %v2400
    %v2402 = vpop.xlane.xlu0 %2401
    %v2403 = vsub.f32 %v2397, %v2402
    %v2404 = vmul.f32 %v2403, 1.442695
    %v2405 = vpow.pop %v2404
    %v2406 = vsel %vm472, %v2405, 0.0
    %2407 = vadd.xlane.f32.xlu0 %v2406
    %v2408 = vpop.xlane.xlu0 %2407
    %2409 = vrot.lane.b32.xlu0 %v1816, 40
    %v2410 = vpop.permute.xlu0 %2409
    %v2413 = vsel %vm472, %v2405, 0
    %2415 = vmatprep.subr.mxu0 0.0
    %2416 = vmatpush1.msra.mxu0 %v2410
    %2417 = vmatprep.subr.mxu0 0.0
    %2418 = vmatpush1.msra.mxu0 0.0
    %2419 = vmatprep.subr.mxu0 0.0
    %2420 = vmatpush1.msra.mxu0 0.0
    %2421 = vmatprep.subr.mxu0 0.0
    %2422 = vmatpush1.msra.mxu0 0.0
    %2423 = vmatprep.subr.mxu0 0.0
    %2424 = vmatpush1.msra.mxu0 0.0
    %2425 = vmatprep.subr.mxu0 0.0
    %2426 = vmatpush1.msra.mxu0 0.0
    %2427 = vmatprep.subr.mxu0 0.0
    %2428 = vmatpush1.msra.mxu0 0.0
    %2429 = vmatprep.subr.mxu0 0.0
    %2430 = vmatpush1.msra.mxu0 0.0
    %2431 = vmatprep.subr.mxu0 0.0
    %2432 = vmatpush1.msra.mxu0 0.0
    %2433 = vmatprep.subr.mxu0 0.0
    %2434 = vmatpush1.msra.mxu0 0.0
    %2435 = vmatprep.subr.mxu0 0.0
    %2436 = vmatpush1.msra.mxu0 0.0
    %2437 = vmatprep.subr.mxu0 0.0
    %2438 = vmatpush1.msra.mxu0 0.0
    %2439 = vmatprep.subr.mxu0 0.0
    %2440 = vmatpush1.msra.mxu0 0.0
    %2441 = vmatprep.subr.mxu0 0.0
    %2442 = vmatpush1.msra.mxu0 0.0
    %2443 = vmatprep.subr.mxu0 0.0
    %2444 = vmatpush1.msra.mxu0 0.0
    %2445 = vmatprep.subr.mxu0 0.0
    %2446 = vmatpush1.msra.mxu0 0.0
    %2447 = vmatprep.subr.mxu0 0.0
    %2448 = vmatpush1.msra.mxu0 0.0
    %2449 = vmatprep.subr.mxu0 0.0
    %2450 = vmatpush1.msra.mxu0 0.0
    %2451 = vmatprep.subr.mxu0 0.0
    %2452 = vmatpush1.msra.mxu0 0.0
    %2453 = vmatprep.subr.mxu0 0.0
    %2454 = vmatpush1.msra.mxu0 0.0
    %2455 = vmatprep.subr.mxu0 0.0
    %2456 = vmatpush1.msra.mxu0 0.0
    %2457 = vmatprep.subr.mxu0 0.0
    %2458 = vmatpush1.msra.mxu0 0.0
    %2459 = vmatprep.subr.mxu0 0.0
    %2460 = vmatpush1.msra.mxu0 0.0
    %2461 = vmatprep.subr.mxu0 0.0
    %2462 = vmatpush1.msra.mxu0 0.0
    %2463 = vmatprep.subr.mxu0 0.0
    %2464 = vmatpush1.msra.mxu0 0.0
    %2465 = vmatprep.subr.mxu0 0.0
    %2466 = vmatpush1.msra.mxu0 0.0
    %2467 = vmatprep.subr.mxu0 0.0
    %2468 = vmatpush1.msra.mxu0 0.0
    %2469 = vmatprep.subr.mxu0 0.0
    %2470 = vmatpush1.msra.mxu0 0.0
    %2471 = vmatprep.subr.mxu0 0.0
    %2472 = vmatpush1.msra.mxu0 0.0
    %2473 = vmatprep.subr.mxu0 0.0
    %2474 = vmatpush1.msra.mxu0 0.0
    %2475 = vmatprep.subr.mxu0 0.0
    %2476 = vmatpush1.msra.mxu0 0.0
    %2477 = vmatprep.subr.mxu0 0.0
    %2478 = vmatpush1.msra.mxu0 0.0
    %2479 = vmatprep.mubr.f32.mxu0 0.0
    %2480 = vmatmul.mubr.f32.gmra.mrb[0].mxu0 %v2413
    %v2481 = vpop.f32.mrb[0].mxu0
    %v2482 = vadd.f32 0.0, %v2481
    %v2483 = vpop.f32.mrb[0].mxu0
    %2484 = vdwg.mxu0
    %v2485 = vrcp.pop %v2408
    %v2486 = vmul.f32 %v2408, %v2485
    %v2487 = vsub.f32 2.0, %v2486
    %v2488 = vmul.f32 %v2485, %v2487
    %v2489 = vmul.f32 %v2482, %v2488
    %2491 = vrot.lane.b32.xlu0 %v2153, 8
    %v2492 = vpop.permute.xlu0 %2491
    %2495 = vrot.lane.b32.xlu0 %v2321, 16
    %v2496 = vpop.permute.xlu0 %2495
    %2499 = vrot.lane.b32.xlu0 %v2489, 24
    %v2500 = vpop.permute.xlu0 %2499
    %v2502 = vsel %vm472, %v1985, %v2492
    %v2503 = vsel %vm186, %v2502, %v2496
    %v2504 = vsel %vm1155, %v2503, %v2500
    %v2506 = vsel %vm1163, %v2504, 0
    %2508 = vmatprep.subr.mxu0 0.0
    %2509 = vmatpush1.msra.mxu0 %v133
    %2510 = vmatprep.subr.mxu0 0.0
    %2511 = vmatpush1.msra.mxu0 %v134
    %2512 = vmatprep.subr.mxu0 0.0
    %2513 = vmatpush1.msra.mxu0 %v135
    %2514 = vmatprep.subr.mxu0 0.0
    %2515 = vmatpush1.msra.mxu0 %v136
    %2516 = vmatprep.subr.mxu0 0.0
    %2517 = vmatpush1.msra.mxu0 0.0
    %2518 = vmatprep.subr.mxu0 0.0
    %2519 = vmatpush1.msra.mxu0 0.0
    %2520 = vmatprep.subr.mxu0 0.0
    %2521 = vmatpush1.msra.mxu0 0.0
    %2522 = vmatprep.subr.mxu0 0.0
    %2523 = vmatpush1.msra.mxu0 0.0
    %2524 = vmatprep.subr.mxu0 0.0
    %2525 = vmatpush1.msra.mxu0 0.0
    %2526 = vmatprep.subr.mxu0 0.0
    %2527 = vmatpush1.msra.mxu0 0.0
    %2528 = vmatprep.subr.mxu0 0.0
    %2529 = vmatpush1.msra.mxu0 0.0
    %2530 = vmatprep.subr.mxu0 0.0
    %2531 = vmatpush1.msra.mxu0 0.0
    %2532 = vmatprep.subr.mxu0 0.0
    %2533 = vmatpush1.msra.mxu0 0.0
    %2534 = vmatprep.subr.mxu0 0.0
    %2535 = vmatpush1.msra.mxu0 0.0
    %2536 = vmatprep.subr.mxu0 0.0
    %2537 = vmatpush1.msra.mxu0 0.0
    %2538 = vmatprep.subr.mxu0 0.0
    %2539 = vmatpush1.msra.mxu0 0.0
    %2540 = vmatprep.subr.mxu0 0.0
    %2541 = vmatpush1.msra.mxu0 0.0
    %2542 = vmatprep.subr.mxu0 0.0
    %2543 = vmatpush1.msra.mxu0 0.0
    %2544 = vmatprep.subr.mxu0 0.0
    %2545 = vmatpush1.msra.mxu0 0.0
    %2546 = vmatprep.subr.mxu0 0.0
    %2547 = vmatpush1.msra.mxu0 0.0
    %2548 = vmatprep.subr.mxu0 0.0
    %2549 = vmatpush1.msra.mxu0 0.0
    %2550 = vmatprep.subr.mxu0 0.0
    %2551 = vmatpush1.msra.mxu0 0.0
    %2552 = vmatprep.subr.mxu0 0.0
    %2553 = vmatpush1.msra.mxu0 0.0
    %2554 = vmatprep.subr.mxu0 0.0
    %2555 = vmatpush1.msra.mxu0 0.0
    %2556 = vmatprep.subr.mxu0 0.0
    %2557 = vmatpush1.msra.mxu0 0.0
    %2558 = vmatprep.subr.mxu0 0.0
    %2559 = vmatpush1.msra.mxu0 0.0
    %2560 = vmatprep.subr.mxu0 0.0
    %2561 = vmatpush1.msra.mxu0 0.0
    %2562 = vmatprep.subr.mxu0 0.0
    %2563 = vmatpush1.msra.mxu0 0.0
    %2564 = vmatprep.subr.mxu0 0.0
    %2565 = vmatpush1.msra.mxu0 0.0
    %2566 = vmatprep.subr.mxu0 0.0
    %2567 = vmatpush1.msra.mxu0 0.0
    %2568 = vmatprep.subr.mxu0 0.0
    %2569 = vmatpush1.msra.mxu0 0.0
    %2570 = vmatprep.subr.mxu0 0.0
    %2571 = vmatpush1.msra.mxu0 0.0
    %2572 = vmatprep.mubr.f32.mxu0 0.0
    %2573 = vmatmul.mubr.f32.gmra.mrb[0].mxu0 %v2506
    %v2574 = vpop.f32.mrb[0].mxu0
    %v2575 = vadd.f32 %v1161, %v2574
    %v2576 = vpop.f32.mrb[0].mxu0
    %2577 = vdwg.mxu0
    %v2578 = vadd.f32 %v1746, %v2575
    %v2579 = vsel %vm1163, %v2578, 0.0
    %2580 = vadd.xlane.f32.xlu0 %v2579
    %v2581 = vpop.xlane.xlu0 %2580
    %v2582 = vmul.f32 %v2581, %v1241
    %v2583 = vsub.f32 %v2578, %v2582
    %v2584 = vmul.f32 %v2583, %v2583
    %v2585 = vsel %vm1163, %v2584, 0.0
    %2586 = vadd.xlane.f32.xlu0 %v2585
    %v2587 = vpop.xlane.xlu0 %2586
    %v2588 = vmul.f32 %v2587, %v1241
    %v2589 = vadd.f32 %v2588, 1e-05
    %v2590 = vrsqrt.pop %v2589
    %v2591 = vmul.f32 %v2583, %v2590
    %v2592 = vmul.f32 %v2591, %v1256
    %v2593 = vadd.f32 %v2592, %v1263
    %v2595 = vsel %vm1163, %v2593, 0
    %2597 = vmatprep.subr.mxu0 0.0
    %2598 = vmatpush1.msra.mxu0 %v140
    %2599 = vmatprep.subr.mxu0 0.0
    %2600 = vmatpush1.msra.mxu0 %v141
    %2601 = vmatprep.subr.mxu0 0.0
    %2602 = vmatpush1.msra.mxu0 %v142
    %2603 = vmatprep.subr.mxu0 0.0
    %2604 = vmatpush1.msra.mxu0 %v143
    %2605 = vmatprep.subr.mxu0 0.0
    %2606 = vmatpush1.msra.mxu0 0.0
    %2607 = vmatprep.subr.mxu0 0.0
    %2608 = vmatpush1.msra.mxu0 0.0
    %2609 = vmatprep.subr.mxu0 0.0
    %2610 = vmatpush1.msra.mxu0 0.0
    %2611 = vmatprep.subr.mxu0 0.0
    %2612 = vmatpush1.msra.mxu0 0.0
    %2613 = vmatprep.subr.mxu0 0.0
    %2614 = vmatpush1.msra.mxu0 0.0
    %2615 = vmatprep.subr.mxu0 0.0
    %2616 = vmatpush1.msra.mxu0 0.0
    %2617 = vmatprep.subr.mxu0 0.0
    %2618 = vmatpush1.msra.mxu0 0.0
    %2619 = vmatprep.subr.mxu0 0.0
    %2620 = vmatpush1.msra.mxu0 0.0
    %2621 = vmatprep.subr.mxu0 0.0
    %2622 = vmatpush1.msra.mxu0 0.0
    %2623 = vmatprep.subr.mxu0 0.0
    %2624 = vmatpush1.msra.mxu0 0.0
    %2625 = vmatprep.subr.mxu0 0.0
    %2626 = vmatpush1.msra.mxu0 0.0
    %2627 = vmatprep.subr.mxu0 0.0
    %2628 = vmatpush1.msra.mxu0 0.0
    %2629 = vmatprep.subr.mxu0 0.0
    %2630 = vmatpush1.msra.mxu0 0.0
    %2631 = vmatprep.subr.mxu0 0.0
    %2632 = vmatpush1.msra.mxu0 0.0
    %2633 = vmatprep.subr.mxu0 0.0
    %2634 = vmatpush1.msra.mxu0 0.0
    %2635 = vmatprep.subr.mxu0 0.0
    %2636 = vmatpush1.msra.mxu0 0.0
    %2637 = vmatprep.subr.mxu0 0.0
    %2638 = vmatpush1.msra.mxu0 0.0
    %2639 = vmatprep.subr.mxu0 0.0
    %2640 = vmatpush1.msra.mxu0 0.0
    %2641 = vmatprep.subr.mxu0 0.0
    %2642 = vmatpush1.msra.mxu0 0.0
    %2643 = vmatprep.subr.mxu0 0.0
    %2644 = vmatpush1.msra.mxu0 0.0
    %2645 = vmatprep.subr.mxu0 0.0
    %2646 = vmatpush1.msra.mxu0 0.0
    %2647 = vmatprep.subr.mxu0 0.0
    %2648 = vmatpush1.msra.mxu0 0.0
    %2649 = vmatprep.subr.mxu0 0.0
    %2650 = vmatpush1.msra.mxu0 0.0
    %2651 = vmatprep.subr.mxu0 0.0
    %2652 = vmatpush1.msra.mxu0 0.0
    %2653 = vmatprep.subr.mxu0 0.0
    %2654 = vmatpush1.msra.mxu0 0.0
    %2655 = vmatprep.subr.mxu0 0.0
    %2656 = vmatpush1.msra.mxu0 0.0
    %2657 = vmatprep.subr.mxu0 0.0
    %2658 = vmatpush1.msra.mxu0 0.0
    %2659 = vmatprep.subr.mxu0 0.0
    %2660 = vmatpush1.msra.mxu0 0.0
    %2661 = vmatprep.mubr.f32.mxu0 0.0
    %2662 = vmatmul.mubr.f32.gmra.mrb[0].mxu0 %v2595
    %v2663 = vpop.f32.mrb[0].mxu0
    %v2664 = vadd.f32 %v1270, %v2663
    %v2665 = vpop.f32.mrb[0].mxu0
    %2666 = vdwg.mxu0
    %v2667 = vmul.f32 %v2664, 0.5
    %v2668 = vmul.f32 %v2664, 0.70710677
    %v2669 = vand.u32 2147483647, %v2668
    %v2670 = vmul.f32 %v2669, 0.3275911
    %v2671 = vadd.f32 %v2670, 1.0
    %v2672 = vrcp.pop %v2671
    %v2673 = vmul.f32 1.0, %v2672
    %v2674 = vmul.f32 %v2673, 1.0614054
    %v2675 = vadd.f32 %v2674, -1.4531521
    %v2676 = vmul.f32 %v2675, %v2673
    %v2677 = vadd.f32 %v2676, 1.4214138
    %v2678 = vmul.f32 %v2677, %v2673
    %v2679 = vadd.f32 %v2678, -0.28449672
    %v2680 = vmul.f32 %v2679, %v2673
    %v2681 = vadd.f32 %v2680, 0.2548296
    %v2682 = vmul.f32 %v2681, %v2673
    %v2683 = vsub.f32 0.0, %v2669
    %v2684 = vmul.f32 %v2683, %v2669
    %v2685 = vmul.f32 %v2684, 1.442695
    %v2686 = vpow.pop %v2685
    %v2687 = vmul.f32 %v2682, %v2686
    %v2688 = vsub.f32 1.0, %v2687
    %vm2689 = vcmp.lt.f32.partialorder %v2668, 0.0
    %v2690 = vsub.f32 0.0, %v2688
    %v2691 = vsel %vm2689, %v2690, %v2688
    %v2692 = vadd.f32 %v2691, 1.0
    %v2693 = vmul.f32 %v2667, %v2692
    %v2695 = vsel %vm186, %v2693, 0
    %2697 = vmatprep.subr.mxu0 0.0
    %2698 = vmatpush1.msra.mxu0 %v145
    %2699 = vmatprep.subr.mxu0 0.0
    %2700 = vmatpush1.msra.mxu0 %v146
    %2701 = vmatprep.subr.mxu0 0.0
    %2702 = vmatpush1.msra.mxu0 0.0
    %2703 = vmatprep.subr.mxu0 0.0
    %2704 = vmatpush1.msra.mxu0 0.0
    %2705 = vmatprep.subr.mxu0 0.0
    %2706 = vmatpush1.msra.mxu0 0.0
    %2707 = vmatprep.subr.mxu0 0.0
    %2708 = vmatpush1.msra.mxu0 0.0
    %2709 = vmatprep.subr.mxu0 0.0
    %2710 = vmatpush1.msra.mxu0 0.0
    %2711 = vmatprep.subr.mxu0 0.0
    %2712 = vmatpush1.msra.mxu0 0.0
    %2713 = vmatprep.subr.mxu0 0.0
    %2714 = vmatpush1.msra.mxu0 0.0
    %2715 = vmatprep.subr.mxu0 0.0
    %2716 = vmatpush1.msra.mxu0 0.0
    %2717 = vmatprep.subr.mxu0 0.0
    %2718 = vmatpush1.msra.mxu0 0.0
    %2719 = vmatprep.subr.mxu0 0.0
    %2720 = vmatpush1.msra.mxu0 0.0
    %2721 = vmatprep.subr.mxu0 0.0
    %2722 = vmatpush1.msra.mxu0 0.0
    %2723 = vmatprep.subr.mxu0 0.0
    %2724 = vmatpush1.msra.mxu0 0.0
    %2725 = vmatprep.subr.mxu0 0.0
    %2726 = vmatpush1.msra.mxu0 0.0
    %2727 = vmatprep.subr.mxu0 0.0
    %2728 = vmatpush1.msra.mxu0 0.0
    %2729 = vmatprep.subr.mxu0 0.0
    %2730 = vmatpush1.msra.mxu0 0.0
    %2731 = vmatprep.subr.mxu0 0.0
    %2732 = vmatpush1.msra.mxu0 0.0
    %2733 = vmatprep.subr.mxu0 0.0
    %2734 = vmatpush1.msra.mxu0 0.0
    %2735 = vmatprep.subr.mxu0 0.0
    %2736 = vmatpush1.msra.mxu0 0.0
    %2737 = vmatprep.subr.mxu0 0.0
    %2738 = vmatpush1.msra.mxu0 0.0
    %2739 = vmatprep.subr.mxu0 0.0
    %2740 = vmatpush1.msra.mxu0 0.0
    %2741 = vmatprep.subr.mxu0 0.0
    %2742 = vmatpush1.msra.mxu0 0.0
    %2743 = vmatprep.subr.mxu0 0.0
    %2744 = vmatpush1.msra.mxu0 0.0
    %2745 = vmatprep.subr.mxu0 0.0
    %2746 = vmatpush1.msra.mxu0 0.0
    %2747 = vmatprep.subr.mxu0 0.0
    %2748 = vmatpush1.msra.mxu0 0.0
    %2749 = vmatprep.subr.mxu0 0.0
    %2750 = vmatpush1.msra.mxu0 0.0
    %2751 = vmatprep.subr.mxu0 0.0
    %2752 = vmatpush1.msra.mxu0 0.0
    %2753 = vmatprep.subr.mxu0 0.0
    %2754 = vmatpush1.msra.mxu0 0.0
    %2755 = vmatprep.subr.mxu0 0.0
    %2756 = vmatpush1.msra.mxu0 0.0
    %2757 = vmatprep.subr.mxu0 0.0
    %2758 = vmatpush1.msra.mxu0 0.0
    %2759 = vmatprep.subr.mxu0 0.0
    %2760 = vmatpush1.msra.mxu0 0.0
    %2761 = vmatprep.mubr.f32.mxu0 0.0
    %2762 = vmatmul.mubr.f32.gmra.mrb[0].mxu0 %v2695
    %v2763 = vpop.f32.mrb[0].mxu0
    %v2764 = vadd.f32 %v1376, %v2763
    %v2765 = vpop.f32.mrb[0].mxu0
    %2766 = vdwg.mxu0
    %v2767 = vadd.f32 %v2593, %v2764
    %v2769 = vcombine.high %v2767, %v2767
    %v2771 = vunpack.c.l.s4 1966171168
    %v2772 = vunpack.c.0.s8 %v2771
    %v2773 = vlaneseq
    %v2774 = vshrl.u32 %v2773, 7
    %v2775 = vsub.s32 %v2772, %v2774
    %v2776 = vrot.slane %v2767, %v2775
    %v2778 = vunpack.c.l.s4 1966171168
    %v2779 = vunpack.c.0.s8 %v2778
    %v2780 = vlaneseq
    %v2781 = vshrl.u32 %v2780, 7
    %v2782 = vsub.s32 %v2779, %v2781
    %v2783 = vrot.slane %v2769, %v2782
    %v2784 = vcombine.high %v2776, %v2776
    %v2785 = vcombine.high %v2783, %v2783
    %v2787 = vunpack.c.l.s4 1966171168
    %v2788 = vunpack.c.0.s8 %v2787
    %v2789 = vlaneseq
    %v2790 = vshrl.u32 %v2789, 7
    %v2791 = vsub.s32 %v2788, %v2790
    %v2792 = vrot.slane %v2776, %v2791
    %v2794 = vunpack.c.l.s4 1966171168
    %v2795 = vunpack.c.0.s8 %v2794
    %v2796 = vlaneseq
    %v2797 = vshrl.u32 %v2796, 7
    %v2798 = vsub.s32 %v2795, %v2797
    %v2799 = vrot.slane %v2783, %v2798
    %v2801 = vunpack.c.l.s4 1966171168
    %v2802 = vunpack.c.0.s8 %v2801
    %v2803 = vlaneseq
    %v2804 = vshrl.u32 %v2803, 7
    %v2805 = vsub.s32 %v2802, %v2804
    %v2806 = vrot.slane %v2784, %v2805
    %v2808 = vunpack.c.l.s4 1966171168
    %v2809 = vunpack.c.0.s8 %v2808
    %v2810 = vlaneseq
    %v2811 = vshrl.u32 %v2810, 7
    %v2812 = vsub.s32 %v2809, %v2811
    %v2813 = vrot.slane %v2785, %v2812
    %v2814 = vcombine.high %v2792, %v2792
    %v2815 = vcombine.high %v2799, %v2799
    %v2816 = vcombine.high %v2806, %v2806
    %v2817 = vcombine.high %v2813, %v2813
    %2826 = vst.msk [vmem:[#allocation13 + $0x1] sm:$0x1] %vm1510, %v2792
    %2827 = vst.msk [vmem:[#allocation13 + $0x3] sm:$0x1] %vm1510, %v2806
    %2828 = vst.msk [vmem:[#allocation13 + $0x5] sm:$0x1] %vm1510, %v2814
    %2829 = vst.msk [vmem:[#allocation13 + $0x7] sm:$0x1] %vm1510, %v2816
    %2830 = vst.msk [vmem:[#allocation13 + $0x9] sm:$0x1] %vm1510, %v2799
    %2831 = vst.msk [vmem:[#allocation13 + $0xb] sm:$0x1] %vm1510, %v2813
    %2832 = vst.msk [vmem:[#allocation13 + $0xd] sm:$0x1] %vm1510, %v2815
    %2833 = vst.msk [vmem:[#allocation13 + $0xf] sm:$0x1] %vm1510, %v2817
    // Predicated region
    $region86: #{tpu_custom_call.1} parent=1 // pred_check
      _
    $region87: #{tpu_custom_call.1} parent=1 // pred_check_branch
      %2835 = sbr.rel (0) target = $region89
    $region88: #{tpu_custom_call.1} parent=1 // pred_region
      %s2837 = ssub.s32 256, 256
      %2838 = vsyncadd [#allocation4], %s2837
      %s2839 = sshll.u32 [#allocation13], 4
      %s2840 = int_to_ptr.vmem [resolvable:$true] %s2839
      %2845 = dma.vmem_to_hbm [thread:$0]  %s2840, 256, %s15, [#allocation4], 32, 32, 2
    $region89: #{tpu_custom_call.1} parent=1 // pred_fallthru
      _
    // Predicated region
    $region90: #{tpu_custom_call.1} parent=1 // pred_check
      _
    $region91: #{tpu_custom_call.1} parent=1 // pred_check_branch
      %2847 = sbr.rel (0) target = $region93
    $region92: #{tpu_custom_call.1} parent=1 // pred_region
      %2848 = dma.done [#allocation4], 256
    $region93: #{tpu_custom_call.1} parent=1 // pred_fallthru
      _
    %2849 = vsyncpa [#allocation3], 1
    %2850 = vsyncpa [#allocation6], 1
    %2851 = vsyncpa [#allocation9], 1
    %2852 = vsyncpa [#allocation12], 1
    %2853 = vsyncpa [#allocation4], 1

</llo_original>
